<compile_context>
chip_gen: v5e
topology: v5e:2x2
jax: 0.10.0
libtpu: 0.0.40
codegen_flags: <defaults>
</compile_context>

<pallas_src>
import functools

import jax
import jax.numpy as jnp
from jax.experimental import pallas as pl
from jax.experimental.pallas import tpu as pltpu

_HIGHEST = jax.lax.Precision.HIGHEST


# ---------------------------------------------------------------------------
# Pallas kernels
# ---------------------------------------------------------------------------

def _fused_kernel(g_ref, x_ref, o_ref):
    """Whole batch resident in VMEM: E -> softmax -> gamma*(A@X) + X in one pass."""
    x = x_ref[0]                                            # (C, S) native dtype
    # Channel Gram matrix, f32 MXU accumulation.
    e = jax.lax.dot_general(
        x, x, (((1,), (1,)), ((), ())),
        preferred_element_type=jnp.float32, precision=_HIGHEST)   # (C, C)
    e_new = jnp.max(e, axis=-1, keepdims=True) - e          # rowmax - E
    m = jnp.max(e_new, axis=-1, keepdims=True)              # softmax stabilizer
    p = jnp.exp(e_new - m)
    a = (p / jnp.sum(p, axis=-1, keepdims=True)).astype(x.dtype)  # (C, C)
    y = jnp.dot(a, x, preferred_element_type=jnp.float32, precision=_HIGHEST)
    o_ref[0] = (g_ref[0] * y + x.astype(jnp.float32)).astype(o_ref.dtype)


def _energy_softmax_kernel(x_ref, a_ref):
    """Two-pass path, pass 1: accumulate E = X @ X^T directly in the (C, C)
    output block (resident across the s axis); finalize softmax(rowmax - E)."""
    s = pl.program_id(1)

    @pl.when(s == 0)
    def _init():
        a_ref[...] = jnp.zeros_like(a_ref)

    xt = x_ref[0]                                           # (C, tS) native dtype
    a_ref[0] += jax.lax.dot_general(
        xt, xt, (((1,), (1,)), ((), ())),
        preferred_element_type=jnp.float32, precision=_HIGHEST)

    @pl.when(s == pl.num_programs(1) - 1)
    def _finalize():
        e = a_ref[0]                                        # (C, C) f32
        e_new = jnp.max(e, axis=-1, keepdims=True) - e
        m = jnp.max(e_new, axis=-1, keepdims=True)
        p = jnp.exp(e_new - m)
        a_ref[0] = p / jnp.sum(p, axis=-1, keepdims=True)


def _apply_attention_kernel(g_ref, a_ref, x_ref, o_ref):
    """Two-pass path, pass 2: out_tile = gamma * (A @ X_tile) + X_tile."""
    xt = x_ref[0]                                           # (C, tS) native dtype
    at = a_ref[0].astype(xt.dtype)                          # (C, C)
    y = jnp.dot(at, xt, preferred_element_type=jnp.float32, precision=_HIGHEST)
    o_ref[0] = (g_ref[0] * y + xt.astype(jnp.float32)).astype(o_ref.dtype)


# ---------------------------------------------------------------------------
# Wrapper helpers
# ---------------------------------------------------------------------------

def _vmem_budget_bytes():
    """Generation-aware usable VMEM budget (v5e/v6e: 128 MiB, v7x: 64 MiB)."""
    cap = 64 * 1024 * 1024                                  # conservative fallback
    try:
        info = pltpu.get_tpu_info()
        cap = int(getattr(info, "vmem_capacity_bytes", cap))
    except Exception:
        pass
    return int(cap * 0.65)                                  # headroom for compiler scratch


def _pick_spatial_tile(s_pad, c, itemsize, budget):
    """Largest lane-aligned (x128) divisor of s_pad such that ~4 double-buffered
    (C, tS) blocks plus epilogue temporaries fit well inside the VMEM budget."""
    max_ts = max(128, (budget // 2) // (4 * c * max(itemsize, 1)))
    t = min(max_ts, s_pad)
    t = (t // 128) * 128
    while t > 128 and s_pad % t != 0:
        t -= 128
    return max(t, 128)


# ---------------------------------------------------------------------------
# Wrapper
# ---------------------------------------------------------------------------

def channel_attention_3d(x, gamma, *, force_two_pass=False):
    """x: (B, C, H, W, D) as in the PyTorch module; gamma: learned scalar."""
    B, C, H, W, D = x.shape
    S = H * W * D
    dtype = x.dtype
    x2 = x.reshape(B, C, S)

    # Lane-align the spatial axis. Zero columns are mathematically inert:
    # they add 0 to the Gram matrix and produce 0 in gamma*(A@X)+X.
    S_pad = ((S + 127) // 128) * 128
    if S_pad != S:
        x2 = jnp.pad(x2, ((0, 0), (0, 0), (0, S_pad - S)))

    budget = _vmem_budget_bytes()
    g = jnp.asarray(gamma, jnp.float32).reshape(1)

    # Fused path needs: 2x in + 2x out buffers (native dtype) + f32 temporaries.
    per_batch_f32 = C * S_pad * 4
    fused_ok = (not force_two_pass) and (6 * per_batch_f32 <= budget)

    if fused_ok:
        out = pl.pallas_call(
            _fused_kernel,
            out_shape=jax.ShapeDtypeStruct((B, C, S_pad), dtype),
            grid=(B,),
            in_specs=[
                pl.BlockSpec(memory_space=pltpu.MemorySpace.SMEM),       # gamma
                pl.BlockSpec((1, C, S_pad), lambda b: (b, 0, 0)),        # X (whole batch)
            ],
            out_specs=pl.BlockSpec((1, C, S_pad), lambda b: (b, 0, 0)),
            compiler_params=pltpu.CompilerParams(
                dimension_semantics=("parallel",),
                vmem_limit_bytes=budget),
        )(g, x2)
    else:
        itemsize = jnp.dtype(dtype).itemsize
        tS = _pick_spatial_tile(S_pad, C, itemsize, budget)
        n_s = S_pad // tS

        # Pass 1: A = softmax(rowmax(E) - E), E = X X^T accumulated over s tiles.
        attn = pl.pallas_call(
            _energy_softmax_kernel,
            out_shape=jax.ShapeDtypeStruct((B, C, C), jnp.float32),
            grid=(B, n_s),
            in_specs=[pl.BlockSpec((1, C, tS), lambda b, s: (b, 0, s))],
            out_specs=pl.BlockSpec((1, C, C), lambda b, s: (b, 0, 0)),
            compiler_params=pltpu.CompilerParams(
                dimension_semantics=("parallel", "arbitrary"),
                vmem_limit_bytes=budget),
        )(x2)

        # Pass 2: out = gamma * (A @ X) + X, output aliased onto X's HBM buffer.
        out = pl.pallas_call(
            _apply_attention_kernel,
            out_shape=jax.ShapeDtypeStruct((B, C, S_pad), dtype),
            grid=(B, n_s),
            in_specs=[
                pl.BlockSpec(memory_space=pltpu.MemorySpace.SMEM),       # gamma
                pl.BlockSpec((1, C, C), lambda b, s: (b, 0, 0)),         # A
                pl.BlockSpec((1, C, tS), lambda b, s: (b, 0, s)),        # X tile
            ],
            out_specs=pl.BlockSpec((1, C, tS), lambda b, s: (b, 0, s)),
            input_output_aliases={2: 0},
            compiler_params=pltpu.CompilerParams(
                dimension_semantics=("parallel", "parallel"),
                vmem_limit_bytes=budget),
        )(g, attn, x2)

    if S_pad != S:
        out = out[:, :, :S]
    return out.reshape(B, C, H, W, D)


# ---------------------------------------------------------------------------
# Pure-JAX reference (mirrors the PyTorch forward exactly)
# ---------------------------------------------------------------------------

def channel_attention_3d_ref(x, gamma):
    B, C, H, W, D = x.shape
    xf = x.reshape(B, C, -1).astype(jnp.float32)
    energy = jnp.einsum("bcs,bds->bcd", xf, xf, precision=_HIGHEST)
    energy_new = jnp.max(energy, axis=-1, keepdims=True) - energy
    attention = jax.nn.softmax(energy_new, axis=-1)
    out = jnp.einsum("bcd,bds->bcs", attention, xf, precision=_HIGHEST)
    out = gamma * out + xf
    return out.reshape(B, C, H, W, D).astype(x.dtype)


# ---------------------------------------------------------------------------
# Main
# ---------------------------------------------------------------------------

if __name__ == "__main__":
    key = jax.random.PRNGKey(0)
    k1, k2 = jax.random.split(key)
    gamma = jnp.float32(0.5)        # nn.Parameter (torch inits to 0; nonzero to exercise path)

    # Case 1: lane-aligned S -> fused single-pass kernel (1 read + 1 write of X).
    B, C, H, W, D = 2, 8, 16, 16, 8                 # S = 2048
    x1 = 0.25 * jax.random.normal(k1, (B, C, H, W, D), jnp.float32)
    fwd = jax.jit(channel_attention_3d)
    out1 = fwd(x1, gamma)
    jax.block_until_ready(out1)
    ref1 = channel_attention_3d_ref(x1, gamma)
    assert out1.shape == x1.shape, out1.shape
    assert bool(jnp.all(jnp.isfinite(out1)))
    err1 = float(jnp.max(jnp.abs(out1 - ref1)))
    assert err1 < 1e-3, f"fused-path max abs error vs reference: {err1}"

    # Case 2: irregular S (630 -> padded to 640) through the two-pass fallback.
    B2, C2, H2, W2, D2 = 2, 6, 9, 10, 7             # S = 630
    x2 = 0.25 * jax.random.normal(k2, (B2, C2, H2, W2, D2), jnp.float32)
    fwd2 = jax.jit(functools.partial(channel_attention_3d, force_two_pass=True))
    out2 = fwd2(x2, gamma)
    jax.block_until_ready(out2)
    ref2 = channel_attention_3d_ref(x2, gamma)
    assert out2.shape == x2.shape, out2.shape
    assert bool(jnp.all(jnp.isfinite(out2)))
    err2 = float(jnp.max(jnp.abs(out2 - ref2)))
    assert err2 < 1e-3, f"two-pass-path max abs error vs reference: {err2}"

    print("KERNEL_OK")
</pallas_src>

<mosaic_0001>
module attributes {stable_mosaic.version = 11 : i64} {
  func.func @_fused_kernel(%arg0: i32, %arg1: memref<1xf32, #tpu.memory_space<smem>>, %arg2: memref<1x8x2048xf32, #tpu.memory_space<vmem>>, %arg3: memref<1x8x2048xf32, #tpu.memory_space<vmem>>) attributes {dimension_semantics = [#tpu.dimension_semantics<parallel>], iteration_bounds = array<i64: 2>, scalar_prefetch = 0 : i64, scratch_operands = 0 : i64, tpu.core_type = #tpu.core_type<tc>, window_params = [{transform_indices = @transform_0, window_bounds = array<i64: 1>}, {transform_indices = @transform_1, window_bounds = array<i64: 1, 8, 2048>}, {transform_indices = @transform_2, window_bounds = array<i64: 1, 8, 2048>}]} {
    %c0 = arith.constant 0 : index
    %c0_0 = arith.constant 0 : index
    %c0_1 = arith.constant 0 : index
    %0 = vector.load %arg2[%c0, %c0_0, %c0_1] : memref<1x8x2048xf32, #tpu.memory_space<vmem>>, vector<1x8x2048xf32>
    %1 = vector.shape_cast %0 : vector<1x8x2048xf32> to vector<8x2048xf32>
    %cst = arith.constant dense<0.000000e+00> : vector<8x8xf32>
    %2 = tpu.matmul %1, %1, %cst {dimension_numbers = #tpu.dot_dimension_numbers<[1], [1], [0], [0], [0, 0, 1, 0], [], []>, precision = #tpu.contract_precision<fp32>} : vector<8x2048xf32>, vector<8x2048xf32>, vector<8x8xf32> -> vector<8x8xf32>
    %cst_2 = arith.constant dense<0xFF800000> : vector<8xf32>
    %3 = vector.multi_reduction <maximumf>, %2, %cst_2 [1] : vector<8x8xf32> to vector<8xf32>
    %4 = vector.shape_cast %3 : vector<8xf32> to vector<8x1xf32>
    %5 = vector.broadcast %4 : vector<8x1xf32> to vector<8x8xf32>
    %6 = arith.subf %5, %2 : vector<8x8xf32>
    %cst_3 = arith.constant dense<0xFF800000> : vector<8xf32>
    %7 = vector.multi_reduction <maximumf>, %6, %cst_3 [1] : vector<8x8xf32> to vector<8xf32>
    %8 = vector.shape_cast %7 : vector<8xf32> to vector<8x1xf32>
    %9 = vector.broadcast %8 : vector<8x1xf32> to vector<8x8xf32>
    %10 = arith.subf %6, %9 : vector<8x8xf32>
    %11 = math.exp %10 : vector<8x8xf32>
    %cst_4 = arith.constant dense<0.000000e+00> : vector<8xf32>
    %12 = vector.multi_reduction <add>, %11, %cst_4 [1] : vector<8x8xf32> to vector<8xf32>
    %13 = vector.shape_cast %12 : vector<8xf32> to vector<8x1xf32>
    %14 = vector.broadcast %13 : vector<8x1xf32> to vector<8x8xf32>
    %15 = arith.divf %11, %14 : vector<8x8xf32>
    %cst_5 = arith.constant dense<0.000000e+00> : vector<8x2048xf32>
    %16 = tpu.matmul %15, %1, %cst_5 {dimension_numbers = #tpu.dot_dimension_numbers<[1], [0], [0], [1], [0, 0, 1, 1], [], []>, precision = #tpu.contract_precision<fp32>} : vector<8x8xf32>, vector<8x2048xf32>, vector<8x2048xf32> -> vector<8x2048xf32>
    %c0_6 = arith.constant 0 : index
    %17 = memref.load %arg1[%c0_6] : memref<1xf32, #tpu.memory_space<smem>>
    %18 = vector.broadcast %17 : f32 to vector<8x2048xf32>
    %19 = arith.mulf %18, %16 : vector<8x2048xf32>
    %20 = arith.addf %19, %1 : vector<8x2048xf32>
    %c0_7 = arith.constant 0 : index
    %c0_8 = arith.constant 0 : index
    %c0_9 = arith.constant 0 : index
    %21 = vector.load %arg3[%c0_7, %c0_8, %c0_9] : memref<1x8x2048xf32, #tpu.memory_space<vmem>>, vector<1x8x2048xf32>
    %22 = vector.shape_cast %21 : vector<1x8x2048xf32> to vector<8x2048xf32>
    %23 = vector.shape_cast %20 : vector<8x2048xf32> to vector<1x8x2048xf32>
    tpu.vector_store %arg3[%c0_7, %c0_8, %c0_9], %23 {strides = array<i32>} : memref<1x8x2048xf32, #tpu.memory_space<vmem>>, vector<1x8x2048xf32>,
    return
  }
  func.func @transform_0(%arg0: i32) -> i32 {
    %c0_i32 = arith.constant 0 : i32
    %c0_i32_0 = arith.constant 0 : i32
    return %c0_i32 : i32
  }
  func.func @transform_1(%arg0: i32) -> (i32, i32, i32) {
    %c0_i32 = arith.constant 0 : i32
    %c0_i32_0 = arith.constant 0 : i32
    %c0_i32_1 = arith.constant 0 : i32
    return %arg0, %c0_i32, %c0_i32_0 : i32, i32, i32
  }
  func.func @transform_2(%arg0: i32) -> (i32, i32, i32) {
    %c0_i32 = arith.constant 0 : i32
    %c0_i32_0 = arith.constant 0 : i32
    %c0_i32_1 = arith.constant 0 : i32
    return %arg0, %c0_i32, %c0_i32_0 : i32, i32, i32
  }
}

</mosaic_0001>

<llo_original>
// kernel: channel_attention_3d.1
$region0: #{channel_attention_3d.1}
  #allocation0 [shape = 'u32[]', space=smem, size = 0x4, offset = 0x4, fixed_abs, tag = 'smem constant byte address 0x4 - core index']
  #allocation1 [shape = 'u32[72,128]{1,0:T(1,128)}', space=vmem, size = 0x9000, scoped, tag = 'internal scratch']
  #allocation2 [shape = 'f32[1]{0:T(128)S(6)}', space=smem, size = 0x200, scoped, tag = 'scoped memory for channel_attention_3d.1']
  %s0 = inlined_call_operand.<no memory space> [shape: f32[1], index: 0, kind: input, shape index: {}]
  %s1 = inlined_call_operand.vmem [shape: f32[2,8,2048], index: 1, kind: input, shape index: {}]
  %s2 = inlined_call_operand.vmem [shape: f32[2,8,2048], index: 2, kind: output, shape index: {}]
  %s3 = sld [smem:[#allocation0]]
  $region41: #{channel_attention_3d.1} parent=0
    _
  %s5 = ssub.s32 1, %s3
  %s6 = scalar_select 0, %s5, %s3
  %7 = sst [smem:[#allocation2]] %s0
  loop: start=0, step=1, limit=4
  $region2: #{channel_attention_3d.1} parent=0 // loop_pre_header
    _
  $region3: #{channel_attention_3d.1} parent=0 // loop_header
    %s9 = sphi 0, %s13
    %p10 = scmp.ge.s32.totalorder %s9, 4
    %s17 = sphi 0, %s17
    %s19 = sphi 0, %s17
    %s20 = sphi 0, %s19
    %s34 = sphi 0, %s20
    %s40 = sphi 0, %s42
    %s43 = sphi 0, %s40
    %s44 = sphi 0, %s43
    %s60 = sphi 0, %s44
    %s66 = sphi 0, %s68
    %s69 = sphi 0, %s66
    %s70 = sphi 0, %s69
    %s86 = sphi 0, %s70
  $region4: #{channel_attention_3d.1} parent=0 // loop_header_branch
    %12 = sbr.rel (%p10) target = $region8
  $region5: #{channel_attention_3d.1} parent=0 // loop_body
    %s14 = ssub.s32 %s9, 1
    %s15 = ssub.s32 %s9, 2
    %s16 = sadd.s32 %s9, 1
    %s18 = sadd.s32 %s17, 1
    %p21 = scmp.eq.s32.totalorder %s9, 1
    %p22 = scmp.ne.s32.totalorder %s17, %s19
    %p23 = scmp.eq.s32.totalorder %s9, 0
    %p24 = por %p22, %p23
    %p25 = scmp.ne.s32.totalorder %s17, %s19
    %p26 = scmp.eq.s32.totalorder %s14, 1
    %p27 = por %p25, %p26
    %p28 = scmp.ne.s32.totalorder %s19, %s20
    %p29 = scmp.eq.s32.totalorder %s14, 0
    %p30 = por %p28, %p29
    %p31 = scmp.ne.s32.totalorder %s19, %s20
    %p32 = scmp.eq.s32.totalorder %s15, 1
    %p33 = por %p31, %p32
    %p35 = scmp.ne.s32.totalorder %s20, %s34
    %p36 = scmp.eq.s32.totalorder %s15, 0
    %p37 = por %p35, %p36
    %s38 = ssub.s32 %s9, %s16
    %p39 = scmp.eq.s32.totalorder %s38, 0
    %s41 = sadd.s32 %s40, 1
    %s42 = scalar_select %p39, %s40, %s41
    %p45 = pneg %p39
    %p46 = scmp.eq.s32.totalorder %s9, 1
    %p47 = por %p45, %p46
    %p48 = scmp.ne.s32.totalorder %s40, %s43
    %p49 = scmp.eq.s32.totalorder %s9, 0
    %p50 = por %p48, %p49
    %p51 = scmp.ne.s32.totalorder %s40, %s43
    %p52 = scmp.eq.s32.totalorder %s14, 1
    %p53 = por %p51, %p52
    %p54 = scmp.ne.s32.totalorder %s43, %s44
    %p55 = scmp.eq.s32.totalorder %s14, 0
    %p56 = por %p54, %p55
    %p57 = scmp.ne.s32.totalorder %s43, %s44
    %p58 = scmp.eq.s32.totalorder %s15, 1
    %p59 = por %p57, %p58
    %p61 = scmp.ne.s32.totalorder %s44, %s60
    %p62 = scmp.eq.s32.totalorder %s15, 0
    %p63 = por %p61, %p62
    %s64 = ssub.s32 %s9, %s16
    %p65 = scmp.eq.s32.totalorder %s64, 0
    %s67 = sadd.s32 %s66, 1
    %s68 = scalar_select %p65, %s66, %s67
    %p71 = pneg %p65
    %p72 = scmp.eq.s32.totalorder %s9, 1
    %p73 = por %p71, %p72
    %p74 = scmp.ne.s32.totalorder %s66, %s69
    %p75 = scmp.eq.s32.totalorder %s9, 0
    %p76 = por %p74, %p75
    %p77 = scmp.ne.s32.totalorder %s66, %s69
    %p78 = scmp.eq.s32.totalorder %s14, 1
    %p79 = por %p77, %p78
    %p80 = scmp.ne.s32.totalorder %s69, %s70
    %p81 = scmp.eq.s32.totalorder %s14, 0
    %p82 = por %p80, %p81
    %p83 = scmp.ne.s32.totalorder %s69, %s70
    %p84 = scmp.eq.s32.totalorder %s15, 1
    %p85 = por %p83, %p84
    %p87 = scmp.ne.s32.totalorder %s70, %s86
    %p88 = scmp.eq.s32.totalorder %s15, 0
    %p89 = por %p87, %p88
    %p90 = scmp.le.s32.totalorder 1, %s9
    %p91 = scmp.lt.s32.totalorder %s9, 3
    %p92 = pnand %p90, %p91
    %p93 = pneg %p92
    // Predicated region
    $region9: #{channel_attention_3d.1} parent=5 // pred_check
      _
    $region10: #{channel_attention_3d.1} parent=5 // pred_check_branch
      %95 = sbr.rel (%p92) target = $region12
    $region11: #{channel_attention_3d.1} parent=5 // pred_region
      %s96 = ssub.s32 %s9, 1
      // Predicated region
      $region13: #{channel_attention_3d.1} parent=11 // pred_check
        %p97 = pneg %p30
      $region14: #{channel_attention_3d.1} parent=11 // pred_check_branch
        %99 = sbr.rel (%p97) target = $region16
      $region15: #{channel_attention_3d.1} parent=11 // pred_region
        _
      $region16: #{channel_attention_3d.1} parent=11 // pred_fallthru
        _
    $region12: #{channel_attention_3d.1} parent=5 // pred_fallthru
      _
    %p100 = scmp.lt.s32.totalorder %s9, 2
    // Predicated region
    $region17: #{channel_attention_3d.1} parent=5 // pred_check
      %p101 = pneg %p100
    $region18: #{channel_attention_3d.1} parent=5 // pred_check_branch
      %103 = sbr.rel (%p101) target = $region20
    $region19: #{channel_attention_3d.1} parent=5 // pred_region
      // Predicated region
      $region21: #{channel_attention_3d.1} parent=19 // pred_check
        %p104 = pneg %p50
      $region22: #{channel_attention_3d.1} parent=19 // pred_check_branch
        %106 = sbr.rel (%p104) target = $region24
      $region23: #{channel_attention_3d.1} parent=19 // pred_region
        %p107 = scmp.lt.s32.totalorder %s9, 1
        %s108 = scalar_select %p107, %s9, 1
        %s109 = smul.addr %s108, 16
        %s110 = smul.addr %s109, 8
        %s111 = scalar_lea.vmem %s1, %s110
      $region24: #{channel_attention_3d.1} parent=19 // pred_fallthru
        _
    $region20: #{channel_attention_3d.1} parent=5 // pred_fallthru
      _
    %p112 = scmp.le.s32.totalorder 1, %s9
    %p113 = scmp.lt.s32.totalorder %s9, 3
    %p114 = pnand %p112, %p113
    %p115 = pneg %p114
    // Predicated region
    $region25: #{channel_attention_3d.1} parent=5 // pred_check
      _
    $region26: #{channel_attention_3d.1} parent=5 // pred_check_branch
      %117 = sbr.rel (%p114) target = $region28
    $region27: #{channel_attention_3d.1} parent=5 // pred_region
      %s118 = ssub.s32 %s9, 1
      %p119 = pneg %p30
      %p120 = pneg %p27
      %p121 = scmp.lt.s32.totalorder %s14, 1
      %s122 = scalar_select %p121, %s14, 1
      %s123 = smul.addr %s122, 16
      %s124 = smul.addr %s123, 8
      %s125 = scalar_lea.vmem %s1, %s124
      %p126 = pneg %p56
      %p127 = pneg %p53
      %p128 = pneg %p82
      %p129 = pneg %p79
      %p130 = scmp.lt.s32.totalorder %s14, 1
      %s131 = scalar_select %p130, %s14, 1
      %s132 = smul.addr %s131, 16
      %s133 = smul.addr %s132, 8
      %s134 = scalar_lea.vmem %s2, %s133
      %p135 = scmp.lt.s32.totalorder %s14, 1
      %s136 = scalar_select %p135, %s14, 1
      %s137 = smul.addr %s136, 16
      %s138 = smul.addr %s137, 8
      %s139 = scalar_lea.vmem %s1, %s138
      %p140 = scmp.lt.s32.totalorder %s14, 1
      %s141 = scalar_select %p140, %s14, 1
      %s142 = smul.addr %s141, 16
      %s143 = smul.addr %s142, 8
      %s144 = scalar_lea.vmem %s2, %s143
      %v145 = vld [vmem:[%s139] sm:$0xff]
      %v146 = vld [vmem:[%s139 + $0x8] sm:$0xff]
      %v147 = vld [vmem:[%s139 + $0x10] sm:$0xff]
      %v148 = vld [vmem:[%s139 + $0x18] sm:$0xff]
      %v149 = vld [vmem:[%s139 + $0x20] sm:$0xff]
      %v150 = vld [vmem:[%s139 + $0x28] sm:$0xff]
      %v151 = vld [vmem:[%s139 + $0x30] sm:$0xff]
      %v152 = vld [vmem:[%s139 + $0x38] sm:$0xff]
      %v153 = vld [vmem:[%s139 + $0x40] sm:$0xff]
      %v154 = vld [vmem:[%s139 + $0x48] sm:$0xff]
      %v155 = vld [vmem:[%s139 + $0x50] sm:$0xff]
      %v156 = vld [vmem:[%s139 + $0x58] sm:$0xff]
      %v157 = vld [vmem:[%s139 + $0x60] sm:$0xff]
      %v158 = vld [vmem:[%s139 + $0x68] sm:$0xff]
      %v159 = vld [vmem:[%s139 + $0x70] sm:$0xff]
      %v160 = vld [vmem:[%s139 + $0x78] sm:$0xff]
      %161 = vmatpush.xpose.msra.mxu0 0.0
      %162 = vmatpush.xpose.msra.mxu0 0.0
      %163 = vmatpush.xpose.msra.mxu0 0.0
      %164 = vmatpush.xpose.msra.mxu0 0.0
      %165 = vmatpush.xpose.msra.mxu0 0.0
      %166 = vmatpush.xpose.msra.mxu0 0.0
      %167 = vmatpush.xpose.msra.mxu0 0.0
      %168 = vmatpush.xpose.msra.mxu0 0.0
      %169 = vmatpush.xpose.msra.mxu0 0.0
      %170 = vmatpush.xpose.msra.mxu0 0.0
      %171 = vmatpush.xpose.msra.mxu0 0.0
      %172 = vmatpush.xpose.msra.mxu0 0.0
      %173 = vmatpush.xpose.msra.mxu0 0.0
      %174 = vmatpush.xpose.msra.mxu0 0.0
      %175 = vmatpush.xpose.msra.mxu0 0.0
      %v176 = vand.u32 %v145, 4294901760
      %177 = vmatpush.xpose.msra.mxu0 %v176
      %v178 = vand.u32 %v145, 4294901760
      %v179 = vsub.f32 %v145, %v178
      %v180 = vand.u32 %v179, 4294901760
      %v181 = vsub.f32 %v179, %v180
      %v182 = vand.u32 %v181, 4294901760
      %183 = vmatmul.f32.gmra.mxu0 %v182
      %v184 = vpop.f32.mrf.mxu0
      %v185 = vadd.f32 0.0, %v184
      %186 = vdwg.mxu0
      %187 = vmatpush.xpose.msra.mxu0 0.0
      %188 = vmatpush.xpose.msra.mxu0 0.0
      %189 = vmatpush.xpose.msra.mxu0 0.0
      %190 = vmatpush.xpose.msra.mxu0 0.0
      %191 = vmatpush.xpose.msra.mxu0 0.0
      %192 = vmatpush.xpose.msra.mxu0 0.0
      %193 = vmatpush.xpose.msra.mxu0 0.0
      %194 = vmatpush.xpose.msra.mxu0 0.0
      %195 = vmatpush.xpose.msra.mxu0 0.0
      %196 = vmatpush.xpose.msra.mxu0 0.0
      %197 = vmatpush.xpose.msra.mxu0 0.0
      %198 = vmatpush.xpose.msra.mxu0 0.0
      %199 = vmatpush.xpose.msra.mxu0 0.0
      %200 = vmatpush.xpose.msra.mxu0 0.0
      %201 = vmatpush.xpose.msra.mxu0 0.0
      %v202 = vand.u32 %v145, 4294901760
      %v203 = vsub.f32 %v145, %v202
      %v204 = vand.u32 %v203, 4294901760
      %v205 = vsub.f32 %v203, %v204
      %v206 = vand.u32 %v205, 4294901760
      %207 = vmatpush.xpose.msra.mxu0 %v206
      %v208 = vand.u32 %v145, 4294901760
      %209 = vmatmul.f32.gmra.mxu0 %v208
      %v210 = vpop.f32.mrf.mxu0
      %v211 = vadd.f32 %v185, %v210
      %212 = vdwg.mxu0
      %213 = vmatpush.xpose.msra.mxu0 0.0
      %214 = vmatpush.xpose.msra.mxu0 0.0
      %215 = vmatpush.xpose.msra.mxu0 0.0
      %216 = vmatpush.xpose.msra.mxu0 0.0
      %217 = vmatpush.xpose.msra.mxu0 0.0
      %218 = vmatpush.xpose.msra.mxu0 0.0
      %219 = vmatpush.xpose.msra.mxu0 0.0
      %220 = vmatpush.xpose.msra.mxu0 0.0
      %221 = vmatpush.xpose.msra.mxu0 0.0
      %222 = vmatpush.xpose.msra.mxu0 0.0
      %223 = vmatpush.xpose.msra.mxu0 0.0
      %224 = vmatpush.xpose.msra.mxu0 0.0
      %225 = vmatpush.xpose.msra.mxu0 0.0
      %226 = vmatpush.xpose.msra.mxu0 0.0
      %227 = vmatpush.xpose.msra.mxu0 0.0
      %v228 = vand.u32 %v145, 4294901760
      %v229 = vsub.f32 %v145, %v228
      %230 = vmatpush.xpose.msra.mxu0 %v229
      %v231 = vand.u32 %v145, 4294901760
      %v232 = vsub.f32 %v145, %v231
      %233 = vmatmul.f32.gmra.mxu0 %v232
      %v234 = vpop.f32.mrf.mxu0
      %v235 = vadd.f32 %v211, %v234
      %236 = vdwg.mxu0
      %237 = vmatpush.xpose.msra.mxu0 0.0
      %238 = vmatpush.xpose.msra.mxu0 0.0
      %239 = vmatpush.xpose.msra.mxu0 0.0
      %240 = vmatpush.xpose.msra.mxu0 0.0
      %241 = vmatpush.xpose.msra.mxu0 0.0
      %242 = vmatpush.xpose.msra.mxu0 0.0
      %243 = vmatpush.xpose.msra.mxu0 0.0
      %244 = vmatpush.xpose.msra.mxu0 0.0
      %245 = vmatpush.xpose.msra.mxu0 0.0
      %246 = vmatpush.xpose.msra.mxu0 0.0
      %247 = vmatpush.xpose.msra.mxu0 0.0
      %248 = vmatpush.xpose.msra.mxu0 0.0
      %249 = vmatpush.xpose.msra.mxu0 0.0
      %250 = vmatpush.xpose.msra.mxu0 0.0
      %251 = vmatpush.xpose.msra.mxu0 0.0
      %v252 = vand.u32 %v145, 4294901760
      %253 = vmatpush.xpose.msra.mxu0 %v252
      %v254 = vand.u32 %v145, 4294901760
      %v255 = vsub.f32 %v145, %v254
      %v256 = vand.u32 %v255, 4294901760
      %257 = vmatmul.f32.gmra.mxu0 %v256
      %v258 = vpop.f32.mrf.mxu0
      %v259 = vadd.f32 %v235, %v258
      %260 = vdwg.mxu0
      %261 = vmatpush.xpose.msra.mxu0 0.0
      %262 = vmatpush.xpose.msra.mxu0 0.0
      %263 = vmatpush.xpose.msra.mxu0 0.0
      %264 = vmatpush.xpose.msra.mxu0 0.0
      %265 = vmatpush.xpose.msra.mxu0 0.0
      %266 = vmatpush.xpose.msra.mxu0 0.0
      %267 = vmatpush.xpose.msra.mxu0 0.0
      %268 = vmatpush.xpose.msra.mxu0 0.0
      %269 = vmatpush.xpose.msra.mxu0 0.0
      %270 = vmatpush.xpose.msra.mxu0 0.0
      %271 = vmatpush.xpose.msra.mxu0 0.0
      %272 = vmatpush.xpose.msra.mxu0 0.0
      %273 = vmatpush.xpose.msra.mxu0 0.0
      %274 = vmatpush.xpose.msra.mxu0 0.0
      %275 = vmatpush.xpose.msra.mxu0 0.0
      %v276 = vand.u32 %v145, 4294901760
      %v277 = vsub.f32 %v145, %v276
      %v278 = vand.u32 %v277, 4294901760
      %279 = vmatpush.xpose.msra.mxu0 %v278
      %v280 = vand.u32 %v145, 4294901760
      %281 = vmatmul.f32.gmra.mxu0 %v280
      %v282 = vpop.f32.mrf.mxu0
      %v283 = vadd.f32 %v259, %v282
      %284 = vdwg.mxu0
      %285 = vmatpush.xpose.msra.mxu0 0.0
      %286 = vmatpush.xpose.msra.mxu0 0.0
      %287 = vmatpush.xpose.msra.mxu0 0.0
      %288 = vmatpush.xpose.msra.mxu0 0.0
      %289 = vmatpush.xpose.msra.mxu0 0.0
      %290 = vmatpush.xpose.msra.mxu0 0.0
      %291 = vmatpush.xpose.msra.mxu0 0.0
      %292 = vmatpush.xpose.msra.mxu0 0.0
      %293 = vmatpush.xpose.msra.mxu0 0.0
      %294 = vmatpush.xpose.msra.mxu0 0.0
      %295 = vmatpush.xpose.msra.mxu0 0.0
      %296 = vmatpush.xpose.msra.mxu0 0.0
      %297 = vmatpush.xpose.msra.mxu0 0.0
      %298 = vmatpush.xpose.msra.mxu0 0.0
      %299 = vmatpush.xpose.msra.mxu0 0.0
      %v300 = vand.u32 %v145, 4294901760
      %301 = vmatpush.xpose.msra.mxu0 %v300
      %v302 = vand.u32 %v145, 4294901760
      %303 = vmatmul.f32.gmra.mxu0 %v302
      %v304 = vpop.f32.mrf.mxu0
      %v305 = vadd.f32 %v283, %v304
      %306 = vdwg.mxu0
      %307 = vmatpush.xpose.msra.mxu0 0.0
      %308 = vmatpush.xpose.msra.mxu0 0.0
      %309 = vmatpush.xpose.msra.mxu0 0.0
      %310 = vmatpush.xpose.msra.mxu0 0.0
      %311 = vmatpush.xpose.msra.mxu0 0.0
      %312 = vmatpush.xpose.msra.mxu0 0.0
      %313 = vmatpush.xpose.msra.mxu0 0.0
      %314 = vmatpush.xpose.msra.mxu0 0.0
      %315 = vmatpush.xpose.msra.mxu0 0.0
      %316 = vmatpush.xpose.msra.mxu0 0.0
      %317 = vmatpush.xpose.msra.mxu0 0.0
      %318 = vmatpush.xpose.msra.mxu0 0.0
      %319 = vmatpush.xpose.msra.mxu0 0.0
      %320 = vmatpush.xpose.msra.mxu0 0.0
      %321 = vmatpush.xpose.msra.mxu0 0.0
      %v322 = vand.u32 %v146, 4294901760
      %323 = vmatpush.xpose.msra.mxu0 %v322
      %v324 = vand.u32 %v146, 4294901760
      %v325 = vsub.f32 %v146, %v324
      %v326 = vand.u32 %v325, 4294901760
      %v327 = vsub.f32 %v325, %v326
      %v328 = vand.u32 %v327, 4294901760
      %329 = vmatmul.f32.gmra.mxu0 %v328
      %v330 = vpop.f32.mrf.mxu0
      %v331 = vadd.f32 %v305, %v330
      %332 = vdwg.mxu0
      %333 = vmatpush.xpose.msra.mxu0 0.0
      %334 = vmatpush.xpose.msra.mxu0 0.0
      %335 = vmatpush.xpose.msra.mxu0 0.0
      %336 = vmatpush.xpose.msra.mxu0 0.0
      %337 = vmatpush.xpose.msra.mxu0 0.0
      %338 = vmatpush.xpose.msra.mxu0 0.0
      %339 = vmatpush.xpose.msra.mxu0 0.0
      %340 = vmatpush.xpose.msra.mxu0 0.0
      %341 = vmatpush.xpose.msra.mxu0 0.0
      %342 = vmatpush.xpose.msra.mxu0 0.0
      %343 = vmatpush.xpose.msra.mxu0 0.0
      %344 = vmatpush.xpose.msra.mxu0 0.0
      %345 = vmatpush.xpose.msra.mxu0 0.0
      %346 = vmatpush.xpose.msra.mxu0 0.0
      %347 = vmatpush.xpose.msra.mxu0 0.0
      %v348 = vand.u32 %v146, 4294901760
      %v349 = vsub.f32 %v146, %v348
      %v350 = vand.u32 %v349, 4294901760
      %v351 = vsub.f32 %v349, %v350
      %v352 = vand.u32 %v351, 4294901760
      %353 = vmatpush.xpose.msra.mxu0 %v352
      %v354 = vand.u32 %v146, 4294901760
      %355 = vmatmul.f32.gmra.mxu0 %v354
      %v356 = vpop.f32.mrf.mxu0
      %v357 = vadd.f32 %v331, %v356
      %358 = vdwg.mxu0
      %359 = vmatpush.xpose.msra.mxu0 0.0
      %360 = vmatpush.xpose.msra.mxu0 0.0
      %361 = vmatpush.xpose.msra.mxu0 0.0
      %362 = vmatpush.xpose.msra.mxu0 0.0
      %363 = vmatpush.xpose.msra.mxu0 0.0
      %364 = vmatpush.xpose.msra.mxu0 0.0
      %365 = vmatpush.xpose.msra.mxu0 0.0
      %366 = vmatpush.xpose.msra.mxu0 0.0
      %367 = vmatpush.xpose.msra.mxu0 0.0
      %368 = vmatpush.xpose.msra.mxu0 0.0
      %369 = vmatpush.xpose.msra.mxu0 0.0
      %370 = vmatpush.xpose.msra.mxu0 0.0
      %371 = vmatpush.xpose.msra.mxu0 0.0
      %372 = vmatpush.xpose.msra.mxu0 0.0
      %373 = vmatpush.xpose.msra.mxu0 0.0
      %v374 = vand.u32 %v146, 4294901760
      %v375 = vsub.f32 %v146, %v374
      %376 = vmatpush.xpose.msra.mxu0 %v375
      %v377 = vand.u32 %v146, 4294901760
      %v378 = vsub.f32 %v146, %v377
      %379 = vmatmul.f32.gmra.mxu0 %v378
      %v380 = vpop.f32.mrf.mxu0
      %v381 = vadd.f32 %v357, %v380
      %382 = vdwg.mxu0
      %383 = vmatpush.xpose.msra.mxu0 0.0
      %384 = vmatpush.xpose.msra.mxu0 0.0
      %385 = vmatpush.xpose.msra.mxu0 0.0
      %386 = vmatpush.xpose.msra.mxu0 0.0
      %387 = vmatpush.xpose.msra.mxu0 0.0
      %388 = vmatpush.xpose.msra.mxu0 0.0
      %389 = vmatpush.xpose.msra.mxu0 0.0
      %390 = vmatpush.xpose.msra.mxu0 0.0
      %391 = vmatpush.xpose.msra.mxu0 0.0
      %392 = vmatpush.xpose.msra.mxu0 0.0
      %393 = vmatpush.xpose.msra.mxu0 0.0
      %394 = vmatpush.xpose.msra.mxu0 0.0
      %395 = vmatpush.xpose.msra.mxu0 0.0
      %396 = vmatpush.xpose.msra.mxu0 0.0
      %397 = vmatpush.xpose.msra.mxu0 0.0
      %v398 = vand.u32 %v146, 4294901760
      %399 = vmatpush.xpose.msra.mxu0 %v398
      %v400 = vand.u32 %v146, 4294901760
      %v401 = vsub.f32 %v146, %v400
      %v402 = vand.u32 %v401, 4294901760
      %403 = vmatmul.f32.gmra.mxu0 %v402
      %v404 = vpop.f32.mrf.mxu0
      %v405 = vadd.f32 %v381, %v404
      %406 = vdwg.mxu0
      %407 = vmatpush.xpose.msra.mxu0 0.0
      %408 = vmatpush.xpose.msra.mxu0 0.0
      %409 = vmatpush.xpose.msra.mxu0 0.0
      %410 = vmatpush.xpose.msra.mxu0 0.0
      %411 = vmatpush.xpose.msra.mxu0 0.0
      %412 = vmatpush.xpose.msra.mxu0 0.0
      %413 = vmatpush.xpose.msra.mxu0 0.0
      %414 = vmatpush.xpose.msra.mxu0 0.0
      %415 = vmatpush.xpose.msra.mxu0 0.0
      %416 = vmatpush.xpose.msra.mxu0 0.0
      %417 = vmatpush.xpose.msra.mxu0 0.0
      %418 = vmatpush.xpose.msra.mxu0 0.0
      %419 = vmatpush.xpose.msra.mxu0 0.0
      %420 = vmatpush.xpose.msra.mxu0 0.0
      %421 = vmatpush.xpose.msra.mxu0 0.0
      %v422 = vand.u32 %v146, 4294901760
      %v423 = vsub.f32 %v146, %v422
      %v424 = vand.u32 %v423, 4294901760
      %425 = vmatpush.xpose.msra.mxu0 %v424
      %v426 = vand.u32 %v146, 4294901760
      %427 = vmatmul.f32.gmra.mxu0 %v426
      %v428 = vpop.f32.mrf.mxu0
      %v429 = vadd.f32 %v405, %v428
      %430 = vdwg.mxu0
      %431 = vmatpush.xpose.msra.mxu0 0.0
      %432 = vmatpush.xpose.msra.mxu0 0.0
      %433 = vmatpush.xpose.msra.mxu0 0.0
      %434 = vmatpush.xpose.msra.mxu0 0.0
      %435 = vmatpush.xpose.msra.mxu0 0.0
      %436 = vmatpush.xpose.msra.mxu0 0.0
      %437 = vmatpush.xpose.msra.mxu0 0.0
      %438 = vmatpush.xpose.msra.mxu0 0.0
      %439 = vmatpush.xpose.msra.mxu0 0.0
      %440 = vmatpush.xpose.msra.mxu0 0.0
      %441 = vmatpush.xpose.msra.mxu0 0.0
      %442 = vmatpush.xpose.msra.mxu0 0.0
      %443 = vmatpush.xpose.msra.mxu0 0.0
      %444 = vmatpush.xpose.msra.mxu0 0.0
      %445 = vmatpush.xpose.msra.mxu0 0.0
      %v446 = vand.u32 %v146, 4294901760
      %447 = vmatpush.xpose.msra.mxu0 %v446
      %v448 = vand.u32 %v146, 4294901760
      %449 = vmatmul.f32.gmra.mxu0 %v448
      %v450 = vpop.f32.mrf.mxu0
      %v451 = vadd.f32 %v429, %v450
      %452 = vdwg.mxu0
      %453 = vmatpush.xpose.msra.mxu0 0.0
      %454 = vmatpush.xpose.msra.mxu0 0.0
      %455 = vmatpush.xpose.msra.mxu0 0.0
      %456 = vmatpush.xpose.msra.mxu0 0.0
      %457 = vmatpush.xpose.msra.mxu0 0.0
      %458 = vmatpush.xpose.msra.mxu0 0.0
      %459 = vmatpush.xpose.msra.mxu0 0.0
      %460 = vmatpush.xpose.msra.mxu0 0.0
      %461 = vmatpush.xpose.msra.mxu0 0.0
      %462 = vmatpush.xpose.msra.mxu0 0.0
      %463 = vmatpush.xpose.msra.mxu0 0.0
      %464 = vmatpush.xpose.msra.mxu0 0.0
      %465 = vmatpush.xpose.msra.mxu0 0.0
      %466 = vmatpush.xpose.msra.mxu0 0.0
      %467 = vmatpush.xpose.msra.mxu0 0.0
      %v468 = vand.u32 %v147, 4294901760
      %469 = vmatpush.xpose.msra.mxu0 %v468
      %v470 = vand.u32 %v147, 4294901760
      %v471 = vsub.f32 %v147, %v470
      %v472 = vand.u32 %v471, 4294901760
      %v473 = vsub.f32 %v471, %v472
      %v474 = vand.u32 %v473, 4294901760
      %475 = vmatmul.f32.gmra.mxu0 %v474
      %v476 = vpop.f32.mrf.mxu0
      %v477 = vadd.f32 %v451, %v476
      %478 = vdwg.mxu0
      %479 = vmatpush.xpose.msra.mxu0 0.0
      %480 = vmatpush.xpose.msra.mxu0 0.0
      %481 = vmatpush.xpose.msra.mxu0 0.0
      %482 = vmatpush.xpose.msra.mxu0 0.0
      %483 = vmatpush.xpose.msra.mxu0 0.0
      %484 = vmatpush.xpose.msra.mxu0 0.0
      %485 = vmatpush.xpose.msra.mxu0 0.0
      %486 = vmatpush.xpose.msra.mxu0 0.0
      %487 = vmatpush.xpose.msra.mxu0 0.0
      %488 = vmatpush.xpose.msra.mxu0 0.0
      %489 = vmatpush.xpose.msra.mxu0 0.0
      %490 = vmatpush.xpose.msra.mxu0 0.0
      %491 = vmatpush.xpose.msra.mxu0 0.0
      %492 = vmatpush.xpose.msra.mxu0 0.0
      %493 = vmatpush.xpose.msra.mxu0 0.0
      %v494 = vand.u32 %v147, 4294901760
      %v495 = vsub.f32 %v147, %v494
      %v496 = vand.u32 %v495, 4294901760
      %v497 = vsub.f32 %v495, %v496
      %v498 = vand.u32 %v497, 4294901760
      %499 = vmatpush.xpose.msra.mxu0 %v498
      %v500 = vand.u32 %v147, 4294901760
      %501 = vmatmul.f32.gmra.mxu0 %v500
      %v502 = vpop.f32.mrf.mxu0
      %v503 = vadd.f32 %v477, %v502
      %504 = vdwg.mxu0
      %505 = vmatpush.xpose.msra.mxu0 0.0
      %506 = vmatpush.xpose.msra.mxu0 0.0
      %507 = vmatpush.xpose.msra.mxu0 0.0
      %508 = vmatpush.xpose.msra.mxu0 0.0
      %509 = vmatpush.xpose.msra.mxu0 0.0
      %510 = vmatpush.xpose.msra.mxu0 0.0
      %511 = vmatpush.xpose.msra.mxu0 0.0
      %512 = vmatpush.xpose.msra.mxu0 0.0
      %513 = vmatpush.xpose.msra.mxu0 0.0
      %514 = vmatpush.xpose.msra.mxu0 0.0
      %515 = vmatpush.xpose.msra.mxu0 0.0
      %516 = vmatpush.xpose.msra.mxu0 0.0
      %517 = vmatpush.xpose.msra.mxu0 0.0
      %518 = vmatpush.xpose.msra.mxu0 0.0
      %519 = vmatpush.xpose.msra.mxu0 0.0
      %v520 = vand.u32 %v147, 4294901760
      %v521 = vsub.f32 %v147, %v520
      %522 = vmatpush.xpose.msra.mxu0 %v521
      %v523 = vand.u32 %v147, 4294901760
      %v524 = vsub.f32 %v147, %v523
      %525 = vmatmul.f32.gmra.mxu0 %v524
      %v526 = vpop.f32.mrf.mxu0
      %v527 = vadd.f32 %v503, %v526
      %528 = vdwg.mxu0
      %529 = vmatpush.xpose.msra.mxu0 0.0
      %530 = vmatpush.xpose.msra.mxu0 0.0
      %531 = vmatpush.xpose.msra.mxu0 0.0
      %532 = vmatpush.xpose.msra.mxu0 0.0
      %533 = vmatpush.xpose.msra.mxu0 0.0
      %534 = vmatpush.xpose.msra.mxu0 0.0
      %535 = vmatpush.xpose.msra.mxu0 0.0
      %536 = vmatpush.xpose.msra.mxu0 0.0
      %537 = vmatpush.xpose.msra.mxu0 0.0
      %538 = vmatpush.xpose.msra.mxu0 0.0
      %539 = vmatpush.xpose.msra.mxu0 0.0
      %540 = vmatpush.xpose.msra.mxu0 0.0
      %541 = vmatpush.xpose.msra.mxu0 0.0
      %542 = vmatpush.xpose.msra.mxu0 0.0
      %543 = vmatpush.xpose.msra.mxu0 0.0
      %v544 = vand.u32 %v147, 4294901760
      %545 = vmatpush.xpose.msra.mxu0 %v544
      %v546 = vand.u32 %v147, 4294901760
      %v547 = vsub.f32 %v147, %v546
      %v548 = vand.u32 %v547, 4294901760
      %549 = vmatmul.f32.gmra.mxu0 %v548
      %v550 = vpop.f32.mrf.mxu0
      %v551 = vadd.f32 %v527, %v550
      %552 = vdwg.mxu0
      %553 = vmatpush.xpose.msra.mxu0 0.0
      %554 = vmatpush.xpose.msra.mxu0 0.0
      %555 = vmatpush.xpose.msra.mxu0 0.0
      %556 = vmatpush.xpose.msra.mxu0 0.0
      %557 = vmatpush.xpose.msra.mxu0 0.0
      %558 = vmatpush.xpose.msra.mxu0 0.0
      %559 = vmatpush.xpose.msra.mxu0 0.0
      %560 = vmatpush.xpose.msra.mxu0 0.0
      %561 = vmatpush.xpose.msra.mxu0 0.0
      %562 = vmatpush.xpose.msra.mxu0 0.0
      %563 = vmatpush.xpose.msra.mxu0 0.0
      %564 = vmatpush.xpose.msra.mxu0 0.0
      %565 = vmatpush.xpose.msra.mxu0 0.0
      %566 = vmatpush.xpose.msra.mxu0 0.0
      %567 = vmatpush.xpose.msra.mxu0 0.0
      %v568 = vand.u32 %v147, 4294901760
      %v569 = vsub.f32 %v147, %v568
      %v570 = vand.u32 %v569, 4294901760
      %571 = vmatpush.xpose.msra.mxu0 %v570
      %v572 = vand.u32 %v147, 4294901760
      %573 = vmatmul.f32.gmra.mxu0 %v572
      %v574 = vpop.f32.mrf.mxu0
      %v575 = vadd.f32 %v551, %v574
      %576 = vdwg.mxu0
      %577 = vmatpush.xpose.msra.mxu0 0.0
      %578 = vmatpush.xpose.msra.mxu0 0.0
      %579 = vmatpush.xpose.msra.mxu0 0.0
      %580 = vmatpush.xpose.msra.mxu0 0.0
      %581 = vmatpush.xpose.msra.mxu0 0.0
      %582 = vmatpush.xpose.msra.mxu0 0.0
      %583 = vmatpush.xpose.msra.mxu0 0.0
      %584 = vmatpush.xpose.msra.mxu0 0.0
      %585 = vmatpush.xpose.msra.mxu0 0.0
      %586 = vmatpush.xpose.msra.mxu0 0.0
      %587 = vmatpush.xpose.msra.mxu0 0.0
      %588 = vmatpush.xpose.msra.mxu0 0.0
      %589 = vmatpush.xpose.msra.mxu0 0.0
      %590 = vmatpush.xpose.msra.mxu0 0.0
      %591 = vmatpush.xpose.msra.mxu0 0.0
      %v592 = vand.u32 %v147, 4294901760
      %593 = vmatpush.xpose.msra.mxu0 %v592
      %v594 = vand.u32 %v147, 4294901760
      %595 = vmatmul.f32.gmra.mxu0 %v594
      %v596 = vpop.f32.mrf.mxu0
      %v597 = vadd.f32 %v575, %v596
      %598 = vdwg.mxu0
      %599 = vmatpush.xpose.msra.mxu0 0.0
      %600 = vmatpush.xpose.msra.mxu0 0.0
      %601 = vmatpush.xpose.msra.mxu0 0.0
      %602 = vmatpush.xpose.msra.mxu0 0.0
      %603 = vmatpush.xpose.msra.mxu0 0.0
      %604 = vmatpush.xpose.msra.mxu0 0.0
      %605 = vmatpush.xpose.msra.mxu0 0.0
      %606 = vmatpush.xpose.msra.mxu0 0.0
      %607 = vmatpush.xpose.msra.mxu0 0.0
      %608 = vmatpush.xpose.msra.mxu0 0.0
      %609 = vmatpush.xpose.msra.mxu0 0.0
      %610 = vmatpush.xpose.msra.mxu0 0.0
      %611 = vmatpush.xpose.msra.mxu0 0.0
      %612 = vmatpush.xpose.msra.mxu0 0.0
      %613 = vmatpush.xpose.msra.mxu0 0.0
      %v614 = vand.u32 %v148, 4294901760
      %615 = vmatpush.xpose.msra.mxu0 %v614
      %v616 = vand.u32 %v148, 4294901760
      %v617 = vsub.f32 %v148, %v616
      %v618 = vand.u32 %v617, 4294901760
      %v619 = vsub.f32 %v617, %v618
      %v620 = vand.u32 %v619, 4294901760
      %621 = vmatmul.f32.gmra.mxu0 %v620
      %v622 = vpop.f32.mrf.mxu0
      %v623 = vadd.f32 %v597, %v622
      %624 = vdwg.mxu0
      %625 = vmatpush.xpose.msra.mxu0 0.0
      %626 = vmatpush.xpose.msra.mxu0 0.0
      %627 = vmatpush.xpose.msra.mxu0 0.0
      %628 = vmatpush.xpose.msra.mxu0 0.0
      %629 = vmatpush.xpose.msra.mxu0 0.0
      %630 = vmatpush.xpose.msra.mxu0 0.0
      %631 = vmatpush.xpose.msra.mxu0 0.0
      %632 = vmatpush.xpose.msra.mxu0 0.0
      %633 = vmatpush.xpose.msra.mxu0 0.0
      %634 = vmatpush.xpose.msra.mxu0 0.0
      %635 = vmatpush.xpose.msra.mxu0 0.0
      %636 = vmatpush.xpose.msra.mxu0 0.0
      %637 = vmatpush.xpose.msra.mxu0 0.0
      %638 = vmatpush.xpose.msra.mxu0 0.0
      %639 = vmatpush.xpose.msra.mxu0 0.0
      %v640 = vand.u32 %v148, 4294901760
      %v641 = vsub.f32 %v148, %v640
      %v642 = vand.u32 %v641, 4294901760
      %v643 = vsub.f32 %v641, %v642
      %v644 = vand.u32 %v643, 4294901760
      %645 = vmatpush.xpose.msra.mxu0 %v644
      %v646 = vand.u32 %v148, 4294901760
      %647 = vmatmul.f32.gmra.mxu0 %v646
      %v648 = vpop.f32.mrf.mxu0
      %v649 = vadd.f32 %v623, %v648
      %650 = vdwg.mxu0
      %651 = vmatpush.xpose.msra.mxu0 0.0
      %652 = vmatpush.xpose.msra.mxu0 0.0
      %653 = vmatpush.xpose.msra.mxu0 0.0
      %654 = vmatpush.xpose.msra.mxu0 0.0
      %655 = vmatpush.xpose.msra.mxu0 0.0
      %656 = vmatpush.xpose.msra.mxu0 0.0
      %657 = vmatpush.xpose.msra.mxu0 0.0
      %658 = vmatpush.xpose.msra.mxu0 0.0
      %659 = vmatpush.xpose.msra.mxu0 0.0
      %660 = vmatpush.xpose.msra.mxu0 0.0
      %661 = vmatpush.xpose.msra.mxu0 0.0
      %662 = vmatpush.xpose.msra.mxu0 0.0
      %663 = vmatpush.xpose.msra.mxu0 0.0
      %664 = vmatpush.xpose.msra.mxu0 0.0
      %665 = vmatpush.xpose.msra.mxu0 0.0
      %v666 = vand.u32 %v148, 4294901760
      %v667 = vsub.f32 %v148, %v666
      %668 = vmatpush.xpose.msra.mxu0 %v667
      %v669 = vand.u32 %v148, 4294901760
      %v670 = vsub.f32 %v148, %v669
      %671 = vmatmul.f32.gmra.mxu0 %v670
      %v672 = vpop.f32.mrf.mxu0
      %v673 = vadd.f32 %v649, %v672
      %674 = vdwg.mxu0
      %675 = vmatpush.xpose.msra.mxu0 0.0
      %676 = vmatpush.xpose.msra.mxu0 0.0
      %677 = vmatpush.xpose.msra.mxu0 0.0
      %678 = vmatpush.xpose.msra.mxu0 0.0
      %679 = vmatpush.xpose.msra.mxu0 0.0
      %680 = vmatpush.xpose.msra.mxu0 0.0
      %681 = vmatpush.xpose.msra.mxu0 0.0
      %682 = vmatpush.xpose.msra.mxu0 0.0
      %683 = vmatpush.xpose.msra.mxu0 0.0
      %684 = vmatpush.xpose.msra.mxu0 0.0
      %685 = vmatpush.xpose.msra.mxu0 0.0
      %686 = vmatpush.xpose.msra.mxu0 0.0
      %687 = vmatpush.xpose.msra.mxu0 0.0
      %688 = vmatpush.xpose.msra.mxu0 0.0
      %689 = vmatpush.xpose.msra.mxu0 0.0
      %v690 = vand.u32 %v148, 4294901760
      %691 = vmatpush.xpose.msra.mxu0 %v690
      %v692 = vand.u32 %v148, 4294901760
      %v693 = vsub.f32 %v148, %v692
      %v694 = vand.u32 %v693, 4294901760
      %695 = vmatmul.f32.gmra.mxu0 %v694
      %v696 = vpop.f32.mrf.mxu0
      %v697 = vadd.f32 %v673, %v696
      %698 = vdwg.mxu0
      %699 = vmatpush.xpose.msra.mxu0 0.0
      %700 = vmatpush.xpose.msra.mxu0 0.0
      %701 = vmatpush.xpose.msra.mxu0 0.0
      %702 = vmatpush.xpose.msra.mxu0 0.0
      %703 = vmatpush.xpose.msra.mxu0 0.0
      %704 = vmatpush.xpose.msra.mxu0 0.0
      %705 = vmatpush.xpose.msra.mxu0 0.0
      %706 = vmatpush.xpose.msra.mxu0 0.0
      %707 = vmatpush.xpose.msra.mxu0 0.0
      %708 = vmatpush.xpose.msra.mxu0 0.0
      %709 = vmatpush.xpose.msra.mxu0 0.0
      %710 = vmatpush.xpose.msra.mxu0 0.0
      %711 = vmatpush.xpose.msra.mxu0 0.0
      %712 = vmatpush.xpose.msra.mxu0 0.0
      %713 = vmatpush.xpose.msra.mxu0 0.0
      %v714 = vand.u32 %v148, 4294901760
      %v715 = vsub.f32 %v148, %v714
      %v716 = vand.u32 %v715, 4294901760
      %717 = vmatpush.xpose.msra.mxu0 %v716
      %v718 = vand.u32 %v148, 4294901760
      %719 = vmatmul.f32.gmra.mxu0 %v718
      %v720 = vpop.f32.mrf.mxu0
      %v721 = vadd.f32 %v697, %v720
      %722 = vdwg.mxu0
      %723 = vmatpush.xpose.msra.mxu0 0.0
      %724 = vmatpush.xpose.msra.mxu0 0.0
      %725 = vmatpush.xpose.msra.mxu0 0.0
      %726 = vmatpush.xpose.msra.mxu0 0.0
      %727 = vmatpush.xpose.msra.mxu0 0.0
      %728 = vmatpush.xpose.msra.mxu0 0.0
      %729 = vmatpush.xpose.msra.mxu0 0.0
      %730 = vmatpush.xpose.msra.mxu0 0.0
      %731 = vmatpush.xpose.msra.mxu0 0.0
      %732 = vmatpush.xpose.msra.mxu0 0.0
      %733 = vmatpush.xpose.msra.mxu0 0.0
      %734 = vmatpush.xpose.msra.mxu0 0.0
      %735 = vmatpush.xpose.msra.mxu0 0.0
      %736 = vmatpush.xpose.msra.mxu0 0.0
      %737 = vmatpush.xpose.msra.mxu0 0.0
      %v738 = vand.u32 %v148, 4294901760
      %739 = vmatpush.xpose.msra.mxu0 %v738
      %v740 = vand.u32 %v148, 4294901760
      %741 = vmatmul.f32.gmra.mxu0 %v740
      %v742 = vpop.f32.mrf.mxu0
      %v743 = vadd.f32 %v721, %v742
      %744 = vdwg.mxu0
      %745 = vmatpush.xpose.msra.mxu0 0.0
      %746 = vmatpush.xpose.msra.mxu0 0.0
      %747 = vmatpush.xpose.msra.mxu0 0.0
      %748 = vmatpush.xpose.msra.mxu0 0.0
      %749 = vmatpush.xpose.msra.mxu0 0.0
      %750 = vmatpush.xpose.msra.mxu0 0.0
      %751 = vmatpush.xpose.msra.mxu0 0.0
      %752 = vmatpush.xpose.msra.mxu0 0.0
      %753 = vmatpush.xpose.msra.mxu0 0.0
      %754 = vmatpush.xpose.msra.mxu0 0.0
      %755 = vmatpush.xpose.msra.mxu0 0.0
      %756 = vmatpush.xpose.msra.mxu0 0.0
      %757 = vmatpush.xpose.msra.mxu0 0.0
      %758 = vmatpush.xpose.msra.mxu0 0.0
      %759 = vmatpush.xpose.msra.mxu0 0.0
      %v760 = vand.u32 %v149, 4294901760
      %761 = vmatpush.xpose.msra.mxu0 %v760
      %v762 = vand.u32 %v149, 4294901760
      %v763 = vsub.f32 %v149, %v762
      %v764 = vand.u32 %v763, 4294901760
      %v765 = vsub.f32 %v763, %v764
      %v766 = vand.u32 %v765, 4294901760
      %767 = vmatmul.f32.gmra.mxu0 %v766
      %v768 = vpop.f32.mrf.mxu0
      %v769 = vadd.f32 %v743, %v768
      %770 = vdwg.mxu0
      %771 = vmatpush.xpose.msra.mxu0 0.0
      %772 = vmatpush.xpose.msra.mxu0 0.0
      %773 = vmatpush.xpose.msra.mxu0 0.0
      %774 = vmatpush.xpose.msra.mxu0 0.0
      %775 = vmatpush.xpose.msra.mxu0 0.0
      %776 = vmatpush.xpose.msra.mxu0 0.0
      %777 = vmatpush.xpose.msra.mxu0 0.0
      %778 = vmatpush.xpose.msra.mxu0 0.0
      %779 = vmatpush.xpose.msra.mxu0 0.0
      %780 = vmatpush.xpose.msra.mxu0 0.0
      %781 = vmatpush.xpose.msra.mxu0 0.0
      %782 = vmatpush.xpose.msra.mxu0 0.0
      %783 = vmatpush.xpose.msra.mxu0 0.0
      %784 = vmatpush.xpose.msra.mxu0 0.0
      %785 = vmatpush.xpose.msra.mxu0 0.0
      %v786 = vand.u32 %v149, 4294901760
      %v787 = vsub.f32 %v149, %v786
      %v788 = vand.u32 %v787, 4294901760
      %v789 = vsub.f32 %v787, %v788
      %v790 = vand.u32 %v789, 4294901760
      %791 = vmatpush.xpose.msra.mxu0 %v790
      %v792 = vand.u32 %v149, 4294901760
      %793 = vmatmul.f32.gmra.mxu0 %v792
      %v794 = vpop.f32.mrf.mxu0
      %v795 = vadd.f32 %v769, %v794
      %796 = vdwg.mxu0
      %797 = vmatpush.xpose.msra.mxu0 0.0
      %798 = vmatpush.xpose.msra.mxu0 0.0
      %799 = vmatpush.xpose.msra.mxu0 0.0
      %800 = vmatpush.xpose.msra.mxu0 0.0
      %801 = vmatpush.xpose.msra.mxu0 0.0
      %802 = vmatpush.xpose.msra.mxu0 0.0
      %803 = vmatpush.xpose.msra.mxu0 0.0
      %804 = vmatpush.xpose.msra.mxu0 0.0
      %805 = vmatpush.xpose.msra.mxu0 0.0
      %806 = vmatpush.xpose.msra.mxu0 0.0
      %807 = vmatpush.xpose.msra.mxu0 0.0
      %808 = vmatpush.xpose.msra.mxu0 0.0
      %809 = vmatpush.xpose.msra.mxu0 0.0
      %810 = vmatpush.xpose.msra.mxu0 0.0
      %811 = vmatpush.xpose.msra.mxu0 0.0
      %v812 = vand.u32 %v149, 4294901760
      %v813 = vsub.f32 %v149, %v812
      %814 = vmatpush.xpose.msra.mxu0 %v813
      %v815 = vand.u32 %v149, 4294901760
      %v816 = vsub.f32 %v149, %v815
      %817 = vmatmul.f32.gmra.mxu0 %v816
      %v818 = vpop.f32.mrf.mxu0
      %v819 = vadd.f32 %v795, %v818
      %820 = vdwg.mxu0
      %821 = vmatpush.xpose.msra.mxu0 0.0
      %822 = vmatpush.xpose.msra.mxu0 0.0
      %823 = vmatpush.xpose.msra.mxu0 0.0
      %824 = vmatpush.xpose.msra.mxu0 0.0
      %825 = vmatpush.xpose.msra.mxu0 0.0
      %826 = vmatpush.xpose.msra.mxu0 0.0
      %827 = vmatpush.xpose.msra.mxu0 0.0
      %828 = vmatpush.xpose.msra.mxu0 0.0
      %829 = vmatpush.xpose.msra.mxu0 0.0
      %830 = vmatpush.xpose.msra.mxu0 0.0
      %831 = vmatpush.xpose.msra.mxu0 0.0
      %832 = vmatpush.xpose.msra.mxu0 0.0
      %833 = vmatpush.xpose.msra.mxu0 0.0
      %834 = vmatpush.xpose.msra.mxu0 0.0
      %835 = vmatpush.xpose.msra.mxu0 0.0
      %v836 = vand.u32 %v149, 4294901760
      %837 = vmatpush.xpose.msra.mxu0 %v836
      %v838 = vand.u32 %v149, 4294901760
      %v839 = vsub.f32 %v149, %v838
      %v840 = vand.u32 %v839, 4294901760
      %841 = vmatmul.f32.gmra.mxu0 %v840
      %v842 = vpop.f32.mrf.mxu0
      %v843 = vadd.f32 %v819, %v842
      %844 = vdwg.mxu0
      %845 = vmatpush.xpose.msra.mxu0 0.0
      %846 = vmatpush.xpose.msra.mxu0 0.0
      %847 = vmatpush.xpose.msra.mxu0 0.0
      %848 = vmatpush.xpose.msra.mxu0 0.0
      %849 = vmatpush.xpose.msra.mxu0 0.0
      %850 = vmatpush.xpose.msra.mxu0 0.0
      %851 = vmatpush.xpose.msra.mxu0 0.0
      %852 = vmatpush.xpose.msra.mxu0 0.0
      %853 = vmatpush.xpose.msra.mxu0 0.0
      %854 = vmatpush.xpose.msra.mxu0 0.0
      %855 = vmatpush.xpose.msra.mxu0 0.0
      %856 = vmatpush.xpose.msra.mxu0 0.0
      %857 = vmatpush.xpose.msra.mxu0 0.0
      %858 = vmatpush.xpose.msra.mxu0 0.0
      %859 = vmatpush.xpose.msra.mxu0 0.0
      %v860 = vand.u32 %v149, 4294901760
      %v861 = vsub.f32 %v149, %v860
      %v862 = vand.u32 %v861, 4294901760
      %863 = vmatpush.xpose.msra.mxu0 %v862
      %v864 = vand.u32 %v149, 4294901760
      %865 = vmatmul.f32.gmra.mxu0 %v864
      %v866 = vpop.f32.mrf.mxu0
      %v867 = vadd.f32 %v843, %v866
      %868 = vdwg.mxu0
      %869 = vmatpush.xpose.msra.mxu0 0.0
      %870 = vmatpush.xpose.msra.mxu0 0.0
      %871 = vmatpush.xpose.msra.mxu0 0.0
      %872 = vmatpush.xpose.msra.mxu0 0.0
      %873 = vmatpush.xpose.msra.mxu0 0.0
      %874 = vmatpush.xpose.msra.mxu0 0.0
      %875 = vmatpush.xpose.msra.mxu0 0.0
      %876 = vmatpush.xpose.msra.mxu0 0.0
      %877 = vmatpush.xpose.msra.mxu0 0.0
      %878 = vmatpush.xpose.msra.mxu0 0.0
      %879 = vmatpush.xpose.msra.mxu0 0.0
      %880 = vmatpush.xpose.msra.mxu0 0.0
      %881 = vmatpush.xpose.msra.mxu0 0.0
      %882 = vmatpush.xpose.msra.mxu0 0.0
      %883 = vmatpush.xpose.msra.mxu0 0.0
      %v884 = vand.u32 %v149, 4294901760
      %885 = vmatpush.xpose.msra.mxu0 %v884
      %v886 = vand.u32 %v149, 4294901760
      %887 = vmatmul.f32.gmra.mxu0 %v886
      %v888 = vpop.f32.mrf.mxu0
      %v889 = vadd.f32 %v867, %v888
      %890 = vdwg.mxu0
      %891 = vmatpush.xpose.msra.mxu0 0.0
      %892 = vmatpush.xpose.msra.mxu0 0.0
      %893 = vmatpush.xpose.msra.mxu0 0.0
      %894 = vmatpush.xpose.msra.mxu0 0.0
      %895 = vmatpush.xpose.msra.mxu0 0.0
      %896 = vmatpush.xpose.msra.mxu0 0.0
      %897 = vmatpush.xpose.msra.mxu0 0.0
      %898 = vmatpush.xpose.msra.mxu0 0.0
      %899 = vmatpush.xpose.msra.mxu0 0.0
      %900 = vmatpush.xpose.msra.mxu0 0.0
      %901 = vmatpush.xpose.msra.mxu0 0.0
      %902 = vmatpush.xpose.msra.mxu0 0.0
      %903 = vmatpush.xpose.msra.mxu0 0.0
      %904 = vmatpush.xpose.msra.mxu0 0.0
      %905 = vmatpush.xpose.msra.mxu0 0.0
      %v906 = vand.u32 %v150, 4294901760
      %907 = vmatpush.xpose.msra.mxu0 %v906
      %v908 = vand.u32 %v150, 4294901760
      %v909 = vsub.f32 %v150, %v908
      %v910 = vand.u32 %v909, 4294901760
      %v911 = vsub.f32 %v909, %v910
      %v912 = vand.u32 %v911, 4294901760
      %913 = vmatmul.f32.gmra.mxu0 %v912
      %v914 = vpop.f32.mrf.mxu0
      %v915 = vadd.f32 %v889, %v914
      %916 = vdwg.mxu0
      %917 = vmatpush.xpose.msra.mxu0 0.0
      %918 = vmatpush.xpose.msra.mxu0 0.0
      %919 = vmatpush.xpose.msra.mxu0 0.0
      %920 = vmatpush.xpose.msra.mxu0 0.0
      %921 = vmatpush.xpose.msra.mxu0 0.0
      %922 = vmatpush.xpose.msra.mxu0 0.0
      %923 = vmatpush.xpose.msra.mxu0 0.0
      %924 = vmatpush.xpose.msra.mxu0 0.0
      %925 = vmatpush.xpose.msra.mxu0 0.0
      %926 = vmatpush.xpose.msra.mxu0 0.0
      %927 = vmatpush.xpose.msra.mxu0 0.0
      %928 = vmatpush.xpose.msra.mxu0 0.0
      %929 = vmatpush.xpose.msra.mxu0 0.0
      %930 = vmatpush.xpose.msra.mxu0 0.0
      %931 = vmatpush.xpose.msra.mxu0 0.0
      %v932 = vand.u32 %v150, 4294901760
      %v933 = vsub.f32 %v150, %v932
      %v934 = vand.u32 %v933, 4294901760
      %v935 = vsub.f32 %v933, %v934
      %v936 = vand.u32 %v935, 4294901760
      %937 = vmatpush.xpose.msra.mxu0 %v936
      %v938 = vand.u32 %v150, 4294901760
      %939 = vmatmul.f32.gmra.mxu0 %v938
      %v940 = vpop.f32.mrf.mxu0
      %v941 = vadd.f32 %v915, %v940
      %942 = vdwg.mxu0
      %943 = vmatpush.xpose.msra.mxu0 0.0
      %944 = vmatpush.xpose.msra.mxu0 0.0
      %945 = vmatpush.xpose.msra.mxu0 0.0
      %946 = vmatpush.xpose.msra.mxu0 0.0
      %947 = vmatpush.xpose.msra.mxu0 0.0
      %948 = vmatpush.xpose.msra.mxu0 0.0
      %949 = vmatpush.xpose.msra.mxu0 0.0
      %950 = vmatpush.xpose.msra.mxu0 0.0
      %951 = vmatpush.xpose.msra.mxu0 0.0
      %952 = vmatpush.xpose.msra.mxu0 0.0
      %953 = vmatpush.xpose.msra.mxu0 0.0
      %954 = vmatpush.xpose.msra.mxu0 0.0
      %955 = vmatpush.xpose.msra.mxu0 0.0
      %956 = vmatpush.xpose.msra.mxu0 0.0
      %957 = vmatpush.xpose.msra.mxu0 0.0
      %v958 = vand.u32 %v150, 4294901760
      %v959 = vsub.f32 %v150, %v958
      %960 = vmatpush.xpose.msra.mxu0 %v959
      %v961 = vand.u32 %v150, 4294901760
      %v962 = vsub.f32 %v150, %v961
      %963 = vmatmul.f32.gmra.mxu0 %v962
      %v964 = vpop.f32.mrf.mxu0
      %v965 = vadd.f32 %v941, %v964
      %966 = vdwg.mxu0
      %967 = vmatpush.xpose.msra.mxu0 0.0
      %968 = vmatpush.xpose.msra.mxu0 0.0
      %969 = vmatpush.xpose.msra.mxu0 0.0
      %970 = vmatpush.xpose.msra.mxu0 0.0
      %971 = vmatpush.xpose.msra.mxu0 0.0
      %972 = vmatpush.xpose.msra.mxu0 0.0
      %973 = vmatpush.xpose.msra.mxu0 0.0
      %974 = vmatpush.xpose.msra.mxu0 0.0
      %975 = vmatpush.xpose.msra.mxu0 0.0
      %976 = vmatpush.xpose.msra.mxu0 0.0
      %977 = vmatpush.xpose.msra.mxu0 0.0
      %978 = vmatpush.xpose.msra.mxu0 0.0
      %979 = vmatpush.xpose.msra.mxu0 0.0
      %980 = vmatpush.xpose.msra.mxu0 0.0
      %981 = vmatpush.xpose.msra.mxu0 0.0
      %v982 = vand.u32 %v150, 4294901760
      %983 = vmatpush.xpose.msra.mxu0 %v982
      %v984 = vand.u32 %v150, 4294901760
      %v985 = vsub.f32 %v150, %v984
      %v986 = vand.u32 %v985, 4294901760
      %987 = vmatmul.f32.gmra.mxu0 %v986
      %v988 = vpop.f32.mrf.mxu0
      %v989 = vadd.f32 %v965, %v988
      %990 = vdwg.mxu0
      %991 = vmatpush.xpose.msra.mxu0 0.0
      %992 = vmatpush.xpose.msra.mxu0 0.0
      %993 = vmatpush.xpose.msra.mxu0 0.0
      %994 = vmatpush.xpose.msra.mxu0 0.0
      %995 = vmatpush.xpose.msra.mxu0 0.0
      %996 = vmatpush.xpose.msra.mxu0 0.0
      %997 = vmatpush.xpose.msra.mxu0 0.0
      %998 = vmatpush.xpose.msra.mxu0 0.0
      %999 = vmatpush.xpose.msra.mxu0 0.0
      %1000 = vmatpush.xpose.msra.mxu0 0.0
      %1001 = vmatpush.xpose.msra.mxu0 0.0
      %1002 = vmatpush.xpose.msra.mxu0 0.0
      %1003 = vmatpush.xpose.msra.mxu0 0.0
      %1004 = vmatpush.xpose.msra.mxu0 0.0
      %1005 = vmatpush.xpose.msra.mxu0 0.0
      %v1006 = vand.u32 %v150, 4294901760
      %v1007 = vsub.f32 %v150, %v1006
      %v1008 = vand.u32 %v1007, 4294901760
      %1009 = vmatpush.xpose.msra.mxu0 %v1008
      %v1010 = vand.u32 %v150, 4294901760
      %1011 = vmatmul.f32.gmra.mxu0 %v1010
      %v1012 = vpop.f32.mrf.mxu0
      %v1013 = vadd.f32 %v989, %v1012
      %1014 = vdwg.mxu0
      %1015 = vmatpush.xpose.msra.mxu0 0.0
      %1016 = vmatpush.xpose.msra.mxu0 0.0
      %1017 = vmatpush.xpose.msra.mxu0 0.0
      %1018 = vmatpush.xpose.msra.mxu0 0.0
      %1019 = vmatpush.xpose.msra.mxu0 0.0
      %1020 = vmatpush.xpose.msra.mxu0 0.0
      %1021 = vmatpush.xpose.msra.mxu0 0.0
      %1022 = vmatpush.xpose.msra.mxu0 0.0
      %1023 = vmatpush.xpose.msra.mxu0 0.0
      %1024 = vmatpush.xpose.msra.mxu0 0.0
      %1025 = vmatpush.xpose.msra.mxu0 0.0
      %1026 = vmatpush.xpose.msra.mxu0 0.0
      %1027 = vmatpush.xpose.msra.mxu0 0.0
      %1028 = vmatpush.xpose.msra.mxu0 0.0
      %1029 = vmatpush.xpose.msra.mxu0 0.0
      %v1030 = vand.u32 %v150, 4294901760
      %1031 = vmatpush.xpose.msra.mxu0 %v1030
      %v1032 = vand.u32 %v150, 4294901760
      %1033 = vmatmul.f32.gmra.mxu0 %v1032
      %v1034 = vpop.f32.mrf.mxu0
      %v1035 = vadd.f32 %v1013, %v1034
      %1036 = vdwg.mxu0
      %1037 = vmatpush.xpose.msra.mxu0 0.0
      %1038 = vmatpush.xpose.msra.mxu0 0.0
      %1039 = vmatpush.xpose.msra.mxu0 0.0
      %1040 = vmatpush.xpose.msra.mxu0 0.0
      %1041 = vmatpush.xpose.msra.mxu0 0.0
      %1042 = vmatpush.xpose.msra.mxu0 0.0
      %1043 = vmatpush.xpose.msra.mxu0 0.0
      %1044 = vmatpush.xpose.msra.mxu0 0.0
      %1045 = vmatpush.xpose.msra.mxu0 0.0
      %1046 = vmatpush.xpose.msra.mxu0 0.0
      %1047 = vmatpush.xpose.msra.mxu0 0.0
      %1048 = vmatpush.xpose.msra.mxu0 0.0
      %1049 = vmatpush.xpose.msra.mxu0 0.0
      %1050 = vmatpush.xpose.msra.mxu0 0.0
      %1051 = vmatpush.xpose.msra.mxu0 0.0
      %v1052 = vand.u32 %v151, 4294901760
      %1053 = vmatpush.xpose.msra.mxu0 %v1052
      %v1054 = vand.u32 %v151, 4294901760
      %v1055 = vsub.f32 %v151, %v1054
      %v1056 = vand.u32 %v1055, 4294901760
      %v1057 = vsub.f32 %v1055, %v1056
      %v1058 = vand.u32 %v1057, 4294901760
      %1059 = vmatmul.f32.gmra.mxu0 %v1058
      %v1060 = vpop.f32.mrf.mxu0
      %v1061 = vadd.f32 %v1035, %v1060
      %1062 = vdwg.mxu0
      %1063 = vmatpush.xpose.msra.mxu0 0.0
      %1064 = vmatpush.xpose.msra.mxu0 0.0
      %1065 = vmatpush.xpose.msra.mxu0 0.0
      %1066 = vmatpush.xpose.msra.mxu0 0.0
      %1067 = vmatpush.xpose.msra.mxu0 0.0
      %1068 = vmatpush.xpose.msra.mxu0 0.0
      %1069 = vmatpush.xpose.msra.mxu0 0.0
      %1070 = vmatpush.xpose.msra.mxu0 0.0
      %1071 = vmatpush.xpose.msra.mxu0 0.0
      %1072 = vmatpush.xpose.msra.mxu0 0.0
      %1073 = vmatpush.xpose.msra.mxu0 0.0
      %1074 = vmatpush.xpose.msra.mxu0 0.0
      %1075 = vmatpush.xpose.msra.mxu0 0.0
      %1076 = vmatpush.xpose.msra.mxu0 0.0
      %1077 = vmatpush.xpose.msra.mxu0 0.0
      %v1078 = vand.u32 %v151, 4294901760
      %v1079 = vsub.f32 %v151, %v1078
      %v1080 = vand.u32 %v1079, 4294901760
      %v1081 = vsub.f32 %v1079, %v1080
      %v1082 = vand.u32 %v1081, 4294901760
      %1083 = vmatpush.xpose.msra.mxu0 %v1082
      %v1084 = vand.u32 %v151, 4294901760
      %1085 = vmatmul.f32.gmra.mxu0 %v1084
      %v1086 = vpop.f32.mrf.mxu0
      %v1087 = vadd.f32 %v1061, %v1086
      %1088 = vdwg.mxu0
      %1089 = vmatpush.xpose.msra.mxu0 0.0
      %1090 = vmatpush.xpose.msra.mxu0 0.0
      %1091 = vmatpush.xpose.msra.mxu0 0.0
      %1092 = vmatpush.xpose.msra.mxu0 0.0
      %1093 = vmatpush.xpose.msra.mxu0 0.0
      %1094 = vmatpush.xpose.msra.mxu0 0.0
      %1095 = vmatpush.xpose.msra.mxu0 0.0
      %1096 = vmatpush.xpose.msra.mxu0 0.0
      %1097 = vmatpush.xpose.msra.mxu0 0.0
      %1098 = vmatpush.xpose.msra.mxu0 0.0
      %1099 = vmatpush.xpose.msra.mxu0 0.0
      %1100 = vmatpush.xpose.msra.mxu0 0.0
      %1101 = vmatpush.xpose.msra.mxu0 0.0
      %1102 = vmatpush.xpose.msra.mxu0 0.0
      %1103 = vmatpush.xpose.msra.mxu0 0.0
      %v1104 = vand.u32 %v151, 4294901760
      %v1105 = vsub.f32 %v151, %v1104
      %1106 = vmatpush.xpose.msra.mxu0 %v1105
      %v1107 = vand.u32 %v151, 4294901760
      %v1108 = vsub.f32 %v151, %v1107
      %1109 = vmatmul.f32.gmra.mxu0 %v1108
      %v1110 = vpop.f32.mrf.mxu0
      %v1111 = vadd.f32 %v1087, %v1110
      %1112 = vdwg.mxu0
      %1113 = vmatpush.xpose.msra.mxu0 0.0
      %1114 = vmatpush.xpose.msra.mxu0 0.0
      %1115 = vmatpush.xpose.msra.mxu0 0.0
      %1116 = vmatpush.xpose.msra.mxu0 0.0
      %1117 = vmatpush.xpose.msra.mxu0 0.0
      %1118 = vmatpush.xpose.msra.mxu0 0.0
      %1119 = vmatpush.xpose.msra.mxu0 0.0
      %1120 = vmatpush.xpose.msra.mxu0 0.0
      %1121 = vmatpush.xpose.msra.mxu0 0.0
      %1122 = vmatpush.xpose.msra.mxu0 0.0
      %1123 = vmatpush.xpose.msra.mxu0 0.0
      %1124 = vmatpush.xpose.msra.mxu0 0.0
      %1125 = vmatpush.xpose.msra.mxu0 0.0
      %1126 = vmatpush.xpose.msra.mxu0 0.0
      %1127 = vmatpush.xpose.msra.mxu0 0.0
      %v1128 = vand.u32 %v151, 4294901760
      %1129 = vmatpush.xpose.msra.mxu0 %v1128
      %v1130 = vand.u32 %v151, 4294901760
      %v1131 = vsub.f32 %v151, %v1130
      %v1132 = vand.u32 %v1131, 4294901760
      %1133 = vmatmul.f32.gmra.mxu0 %v1132
      %v1134 = vpop.f32.mrf.mxu0
      %v1135 = vadd.f32 %v1111, %v1134
      %1136 = vdwg.mxu0
      %1137 = vmatpush.xpose.msra.mxu0 0.0
      %1138 = vmatpush.xpose.msra.mxu0 0.0
      %1139 = vmatpush.xpose.msra.mxu0 0.0
      %1140 = vmatpush.xpose.msra.mxu0 0.0
      %1141 = vmatpush.xpose.msra.mxu0 0.0
      %1142 = vmatpush.xpose.msra.mxu0 0.0
      %1143 = vmatpush.xpose.msra.mxu0 0.0
      %1144 = vmatpush.xpose.msra.mxu0 0.0
      %1145 = vmatpush.xpose.msra.mxu0 0.0
      %1146 = vmatpush.xpose.msra.mxu0 0.0
      %1147 = vmatpush.xpose.msra.mxu0 0.0
      %1148 = vmatpush.xpose.msra.mxu0 0.0
      %1149 = vmatpush.xpose.msra.mxu0 0.0
      %1150 = vmatpush.xpose.msra.mxu0 0.0
      %1151 = vmatpush.xpose.msra.mxu0 0.0
      %v1152 = vand.u32 %v151, 4294901760
      %v1153 = vsub.f32 %v151, %v1152
      %v1154 = vand.u32 %v1153, 4294901760
      %1155 = vmatpush.xpose.msra.mxu0 %v1154
      %v1156 = vand.u32 %v151, 4294901760
      %1157 = vmatmul.f32.gmra.mxu0 %v1156
      %v1158 = vpop.f32.mrf.mxu0
      %v1159 = vadd.f32 %v1135, %v1158
      %1160 = vdwg.mxu0
      %1161 = vmatpush.xpose.msra.mxu0 0.0
      %1162 = vmatpush.xpose.msra.mxu0 0.0
      %1163 = vmatpush.xpose.msra.mxu0 0.0
      %1164 = vmatpush.xpose.msra.mxu0 0.0
      %1165 = vmatpush.xpose.msra.mxu0 0.0
      %1166 = vmatpush.xpose.msra.mxu0 0.0
      %1167 = vmatpush.xpose.msra.mxu0 0.0
      %1168 = vmatpush.xpose.msra.mxu0 0.0
      %1169 = vmatpush.xpose.msra.mxu0 0.0
      %1170 = vmatpush.xpose.msra.mxu0 0.0
      %1171 = vmatpush.xpose.msra.mxu0 0.0
      %1172 = vmatpush.xpose.msra.mxu0 0.0
      %1173 = vmatpush.xpose.msra.mxu0 0.0
      %1174 = vmatpush.xpose.msra.mxu0 0.0
      %1175 = vmatpush.xpose.msra.mxu0 0.0
      %v1176 = vand.u32 %v151, 4294901760
      %1177 = vmatpush.xpose.msra.mxu0 %v1176
      %v1178 = vand.u32 %v151, 4294901760
      %1179 = vmatmul.f32.gmra.mxu0 %v1178
      %v1180 = vpop.f32.mrf.mxu0
      %v1181 = vadd.f32 %v1159, %v1180
      %1182 = vdwg.mxu0
      %1183 = vmatpush.xpose.msra.mxu0 0.0
      %1184 = vmatpush.xpose.msra.mxu0 0.0
      %1185 = vmatpush.xpose.msra.mxu0 0.0
      %1186 = vmatpush.xpose.msra.mxu0 0.0
      %1187 = vmatpush.xpose.msra.mxu0 0.0
      %1188 = vmatpush.xpose.msra.mxu0 0.0
      %1189 = vmatpush.xpose.msra.mxu0 0.0
      %1190 = vmatpush.xpose.msra.mxu0 0.0
      %1191 = vmatpush.xpose.msra.mxu0 0.0
      %1192 = vmatpush.xpose.msra.mxu0 0.0
      %1193 = vmatpush.xpose.msra.mxu0 0.0
      %1194 = vmatpush.xpose.msra.mxu0 0.0
      %1195 = vmatpush.xpose.msra.mxu0 0.0
      %1196 = vmatpush.xpose.msra.mxu0 0.0
      %1197 = vmatpush.xpose.msra.mxu0 0.0
      %v1198 = vand.u32 %v152, 4294901760
      %1199 = vmatpush.xpose.msra.mxu0 %v1198
      %v1200 = vand.u32 %v152, 4294901760
      %v1201 = vsub.f32 %v152, %v1200
      %v1202 = vand.u32 %v1201, 4294901760
      %v1203 = vsub.f32 %v1201, %v1202
      %v1204 = vand.u32 %v1203, 4294901760
      %1205 = vmatmul.f32.gmra.mxu0 %v1204
      %v1206 = vpop.f32.mrf.mxu0
      %v1207 = vadd.f32 %v1181, %v1206
      %1208 = vdwg.mxu0
      %1209 = vmatpush.xpose.msra.mxu0 0.0
      %1210 = vmatpush.xpose.msra.mxu0 0.0
      %1211 = vmatpush.xpose.msra.mxu0 0.0
      %1212 = vmatpush.xpose.msra.mxu0 0.0
      %1213 = vmatpush.xpose.msra.mxu0 0.0
      %1214 = vmatpush.xpose.msra.mxu0 0.0
      %1215 = vmatpush.xpose.msra.mxu0 0.0
      %1216 = vmatpush.xpose.msra.mxu0 0.0
      %1217 = vmatpush.xpose.msra.mxu0 0.0
      %1218 = vmatpush.xpose.msra.mxu0 0.0
      %1219 = vmatpush.xpose.msra.mxu0 0.0
      %1220 = vmatpush.xpose.msra.mxu0 0.0
      %1221 = vmatpush.xpose.msra.mxu0 0.0
      %1222 = vmatpush.xpose.msra.mxu0 0.0
      %1223 = vmatpush.xpose.msra.mxu0 0.0
      %v1224 = vand.u32 %v152, 4294901760
      %v1225 = vsub.f32 %v152, %v1224
      %v1226 = vand.u32 %v1225, 4294901760
      %v1227 = vsub.f32 %v1225, %v1226
      %v1228 = vand.u32 %v1227, 4294901760
      %1229 = vmatpush.xpose.msra.mxu0 %v1228
      %v1230 = vand.u32 %v152, 4294901760
      %1231 = vmatmul.f32.gmra.mxu0 %v1230
      %v1232 = vpop.f32.mrf.mxu0
      %v1233 = vadd.f32 %v1207, %v1232
      %1234 = vdwg.mxu0
      %1235 = vmatpush.xpose.msra.mxu0 0.0
      %1236 = vmatpush.xpose.msra.mxu0 0.0
      %1237 = vmatpush.xpose.msra.mxu0 0.0
      %1238 = vmatpush.xpose.msra.mxu0 0.0
      %1239 = vmatpush.xpose.msra.mxu0 0.0
      %1240 = vmatpush.xpose.msra.mxu0 0.0
      %1241 = vmatpush.xpose.msra.mxu0 0.0
      %1242 = vmatpush.xpose.msra.mxu0 0.0
      %1243 = vmatpush.xpose.msra.mxu0 0.0
      %1244 = vmatpush.xpose.msra.mxu0 0.0
      %1245 = vmatpush.xpose.msra.mxu0 0.0
      %1246 = vmatpush.xpose.msra.mxu0 0.0
      %1247 = vmatpush.xpose.msra.mxu0 0.0
      %1248 = vmatpush.xpose.msra.mxu0 0.0
      %1249 = vmatpush.xpose.msra.mxu0 0.0
      %v1250 = vand.u32 %v152, 4294901760
      %v1251 = vsub.f32 %v152, %v1250
      %1252 = vmatpush.xpose.msra.mxu0 %v1251
      %v1253 = vand.u32 %v152, 4294901760
      %v1254 = vsub.f32 %v152, %v1253
      %1255 = vmatmul.f32.gmra.mxu0 %v1254
      %v1256 = vpop.f32.mrf.mxu0
      %v1257 = vadd.f32 %v1233, %v1256
      %1258 = vdwg.mxu0
      %1259 = vmatpush.xpose.msra.mxu0 0.0
      %1260 = vmatpush.xpose.msra.mxu0 0.0
      %1261 = vmatpush.xpose.msra.mxu0 0.0
      %1262 = vmatpush.xpose.msra.mxu0 0.0
      %1263 = vmatpush.xpose.msra.mxu0 0.0
      %1264 = vmatpush.xpose.msra.mxu0 0.0
      %1265 = vmatpush.xpose.msra.mxu0 0.0
      %1266 = vmatpush.xpose.msra.mxu0 0.0
      %1267 = vmatpush.xpose.msra.mxu0 0.0
      %1268 = vmatpush.xpose.msra.mxu0 0.0
      %1269 = vmatpush.xpose.msra.mxu0 0.0
      %1270 = vmatpush.xpose.msra.mxu0 0.0
      %1271 = vmatpush.xpose.msra.mxu0 0.0
      %1272 = vmatpush.xpose.msra.mxu0 0.0
      %1273 = vmatpush.xpose.msra.mxu0 0.0
      %v1274 = vand.u32 %v152, 4294901760
      %1275 = vmatpush.xpose.msra.mxu0 %v1274
      %v1276 = vand.u32 %v152, 4294901760
      %v1277 = vsub.f32 %v152, %v1276
      %v1278 = vand.u32 %v1277, 4294901760
      %1279 = vmatmul.f32.gmra.mxu0 %v1278
      %v1280 = vpop.f32.mrf.mxu0
      %v1281 = vadd.f32 %v1257, %v1280
      %1282 = vdwg.mxu0
      %1283 = vmatpush.xpose.msra.mxu0 0.0
      %1284 = vmatpush.xpose.msra.mxu0 0.0
      %1285 = vmatpush.xpose.msra.mxu0 0.0
      %1286 = vmatpush.xpose.msra.mxu0 0.0
      %1287 = vmatpush.xpose.msra.mxu0 0.0
      %1288 = vmatpush.xpose.msra.mxu0 0.0
      %1289 = vmatpush.xpose.msra.mxu0 0.0
      %1290 = vmatpush.xpose.msra.mxu0 0.0
      %1291 = vmatpush.xpose.msra.mxu0 0.0
      %1292 = vmatpush.xpose.msra.mxu0 0.0
      %1293 = vmatpush.xpose.msra.mxu0 0.0
      %1294 = vmatpush.xpose.msra.mxu0 0.0
      %1295 = vmatpush.xpose.msra.mxu0 0.0
      %1296 = vmatpush.xpose.msra.mxu0 0.0
      %1297 = vmatpush.xpose.msra.mxu0 0.0
      %v1298 = vand.u32 %v152, 4294901760
      %v1299 = vsub.f32 %v152, %v1298
      %v1300 = vand.u32 %v1299, 4294901760
      %1301 = vmatpush.xpose.msra.mxu0 %v1300
      %v1302 = vand.u32 %v152, 4294901760
      %1303 = vmatmul.f32.gmra.mxu0 %v1302
      %v1304 = vpop.f32.mrf.mxu0
      %v1305 = vadd.f32 %v1281, %v1304
      %1306 = vdwg.mxu0
      %1307 = vmatpush.xpose.msra.mxu0 0.0
      %1308 = vmatpush.xpose.msra.mxu0 0.0
      %1309 = vmatpush.xpose.msra.mxu0 0.0
      %1310 = vmatpush.xpose.msra.mxu0 0.0
      %1311 = vmatpush.xpose.msra.mxu0 0.0
      %1312 = vmatpush.xpose.msra.mxu0 0.0
      %1313 = vmatpush.xpose.msra.mxu0 0.0
      %1314 = vmatpush.xpose.msra.mxu0 0.0
      %1315 = vmatpush.xpose.msra.mxu0 0.0
      %1316 = vmatpush.xpose.msra.mxu0 0.0
      %1317 = vmatpush.xpose.msra.mxu0 0.0
      %1318 = vmatpush.xpose.msra.mxu0 0.0
      %1319 = vmatpush.xpose.msra.mxu0 0.0
      %1320 = vmatpush.xpose.msra.mxu0 0.0
      %1321 = vmatpush.xpose.msra.mxu0 0.0
      %v1322 = vand.u32 %v152, 4294901760
      %1323 = vmatpush.xpose.msra.mxu0 %v1322
      %v1324 = vand.u32 %v152, 4294901760
      %1325 = vmatmul.f32.gmra.mxu0 %v1324
      %v1326 = vpop.f32.mrf.mxu0
      %v1327 = vadd.f32 %v1305, %v1326
      %1328 = vdwg.mxu0
      %1329 = vmatpush.xpose.msra.mxu0 0.0
      %1330 = vmatpush.xpose.msra.mxu0 0.0
      %1331 = vmatpush.xpose.msra.mxu0 0.0
      %1332 = vmatpush.xpose.msra.mxu0 0.0
      %1333 = vmatpush.xpose.msra.mxu0 0.0
      %1334 = vmatpush.xpose.msra.mxu0 0.0
      %1335 = vmatpush.xpose.msra.mxu0 0.0
      %1336 = vmatpush.xpose.msra.mxu0 0.0
      %1337 = vmatpush.xpose.msra.mxu0 0.0
      %1338 = vmatpush.xpose.msra.mxu0 0.0
      %1339 = vmatpush.xpose.msra.mxu0 0.0
      %1340 = vmatpush.xpose.msra.mxu0 0.0
      %1341 = vmatpush.xpose.msra.mxu0 0.0
      %1342 = vmatpush.xpose.msra.mxu0 0.0
      %1343 = vmatpush.xpose.msra.mxu0 0.0
      %v1344 = vand.u32 %v153, 4294901760
      %1345 = vmatpush.xpose.msra.mxu0 %v1344
      %v1346 = vand.u32 %v153, 4294901760
      %v1347 = vsub.f32 %v153, %v1346
      %v1348 = vand.u32 %v1347, 4294901760
      %v1349 = vsub.f32 %v1347, %v1348
      %v1350 = vand.u32 %v1349, 4294901760
      %1351 = vmatmul.f32.gmra.mxu0 %v1350
      %v1352 = vpop.f32.mrf.mxu0
      %v1353 = vadd.f32 %v1327, %v1352
      %1354 = vdwg.mxu0
      %1355 = vmatpush.xpose.msra.mxu0 0.0
      %1356 = vmatpush.xpose.msra.mxu0 0.0
      %1357 = vmatpush.xpose.msra.mxu0 0.0
      %1358 = vmatpush.xpose.msra.mxu0 0.0
      %1359 = vmatpush.xpose.msra.mxu0 0.0
      %1360 = vmatpush.xpose.msra.mxu0 0.0
      %1361 = vmatpush.xpose.msra.mxu0 0.0
      %1362 = vmatpush.xpose.msra.mxu0 0.0
      %1363 = vmatpush.xpose.msra.mxu0 0.0
      %1364 = vmatpush.xpose.msra.mxu0 0.0
      %1365 = vmatpush.xpose.msra.mxu0 0.0
      %1366 = vmatpush.xpose.msra.mxu0 0.0
      %1367 = vmatpush.xpose.msra.mxu0 0.0
      %1368 = vmatpush.xpose.msra.mxu0 0.0
      %1369 = vmatpush.xpose.msra.mxu0 0.0
      %v1370 = vand.u32 %v153, 4294901760
      %v1371 = vsub.f32 %v153, %v1370
      %v1372 = vand.u32 %v1371, 4294901760
      %v1373 = vsub.f32 %v1371, %v1372
      %v1374 = vand.u32 %v1373, 4294901760
      %1375 = vmatpush.xpose.msra.mxu0 %v1374
      %v1376 = vand.u32 %v153, 4294901760
      %1377 = vmatmul.f32.gmra.mxu0 %v1376
      %v1378 = vpop.f32.mrf.mxu0
      %v1379 = vadd.f32 %v1353, %v1378
      %1380 = vdwg.mxu0
      %1381 = vmatpush.xpose.msra.mxu0 0.0
      %1382 = vmatpush.xpose.msra.mxu0 0.0
      %1383 = vmatpush.xpose.msra.mxu0 0.0
      %1384 = vmatpush.xpose.msra.mxu0 0.0
      %1385 = vmatpush.xpose.msra.mxu0 0.0
      %1386 = vmatpush.xpose.msra.mxu0 0.0
      %1387 = vmatpush.xpose.msra.mxu0 0.0
      %1388 = vmatpush.xpose.msra.mxu0 0.0
      %1389 = vmatpush.xpose.msra.mxu0 0.0
      %1390 = vmatpush.xpose.msra.mxu0 0.0
      %1391 = vmatpush.xpose.msra.mxu0 0.0
      %1392 = vmatpush.xpose.msra.mxu0 0.0
      %1393 = vmatpush.xpose.msra.mxu0 0.0
      %1394 = vmatpush.xpose.msra.mxu0 0.0
      %1395 = vmatpush.xpose.msra.mxu0 0.0
      %v1396 = vand.u32 %v153, 4294901760
      %v1397 = vsub.f32 %v153, %v1396
      %1398 = vmatpush.xpose.msra.mxu0 %v1397
      %v1399 = vand.u32 %v153, 4294901760
      %v1400 = vsub.f32 %v153, %v1399
      %1401 = vmatmul.f32.gmra.mxu0 %v1400
      %v1402 = vpop.f32.mrf.mxu0
      %v1403 = vadd.f32 %v1379, %v1402
      %1404 = vdwg.mxu0
      %1405 = vmatpush.xpose.msra.mxu0 0.0
      %1406 = vmatpush.xpose.msra.mxu0 0.0
      %1407 = vmatpush.xpose.msra.mxu0 0.0
      %1408 = vmatpush.xpose.msra.mxu0 0.0
      %1409 = vmatpush.xpose.msra.mxu0 0.0
      %1410 = vmatpush.xpose.msra.mxu0 0.0
      %1411 = vmatpush.xpose.msra.mxu0 0.0
      %1412 = vmatpush.xpose.msra.mxu0 0.0
      %1413 = vmatpush.xpose.msra.mxu0 0.0
      %1414 = vmatpush.xpose.msra.mxu0 0.0
      %1415 = vmatpush.xpose.msra.mxu0 0.0
      %1416 = vmatpush.xpose.msra.mxu0 0.0
      %1417 = vmatpush.xpose.msra.mxu0 0.0
      %1418 = vmatpush.xpose.msra.mxu0 0.0
      %1419 = vmatpush.xpose.msra.mxu0 0.0
      %v1420 = vand.u32 %v153, 4294901760
      %1421 = vmatpush.xpose.msra.mxu0 %v1420
      %v1422 = vand.u32 %v153, 4294901760
      %v1423 = vsub.f32 %v153, %v1422
      %v1424 = vand.u32 %v1423, 4294901760
      %1425 = vmatmul.f32.gmra.mxu0 %v1424
      %v1426 = vpop.f32.mrf.mxu0
      %v1427 = vadd.f32 %v1403, %v1426
      %1428 = vdwg.mxu0
      %1429 = vmatpush.xpose.msra.mxu0 0.0
      %1430 = vmatpush.xpose.msra.mxu0 0.0
      %1431 = vmatpush.xpose.msra.mxu0 0.0
      %1432 = vmatpush.xpose.msra.mxu0 0.0
      %1433 = vmatpush.xpose.msra.mxu0 0.0
      %1434 = vmatpush.xpose.msra.mxu0 0.0
      %1435 = vmatpush.xpose.msra.mxu0 0.0
      %1436 = vmatpush.xpose.msra.mxu0 0.0
      %1437 = vmatpush.xpose.msra.mxu0 0.0
      %1438 = vmatpush.xpose.msra.mxu0 0.0
      %1439 = vmatpush.xpose.msra.mxu0 0.0
      %1440 = vmatpush.xpose.msra.mxu0 0.0
      %1441 = vmatpush.xpose.msra.mxu0 0.0
      %1442 = vmatpush.xpose.msra.mxu0 0.0
      %1443 = vmatpush.xpose.msra.mxu0 0.0
      %v1444 = vand.u32 %v153, 4294901760
      %v1445 = vsub.f32 %v153, %v1444
      %v1446 = vand.u32 %v1445, 4294901760
      %1447 = vmatpush.xpose.msra.mxu0 %v1446
      %v1448 = vand.u32 %v153, 4294901760
      %1449 = vmatmul.f32.gmra.mxu0 %v1448
      %v1450 = vpop.f32.mrf.mxu0
      %v1451 = vadd.f32 %v1427, %v1450
      %1452 = vdwg.mxu0
      %1453 = vmatpush.xpose.msra.mxu0 0.0
      %1454 = vmatpush.xpose.msra.mxu0 0.0
      %1455 = vmatpush.xpose.msra.mxu0 0.0
      %1456 = vmatpush.xpose.msra.mxu0 0.0
      %1457 = vmatpush.xpose.msra.mxu0 0.0
      %1458 = vmatpush.xpose.msra.mxu0 0.0
      %1459 = vmatpush.xpose.msra.mxu0 0.0
      %1460 = vmatpush.xpose.msra.mxu0 0.0
      %1461 = vmatpush.xpose.msra.mxu0 0.0
      %1462 = vmatpush.xpose.msra.mxu0 0.0
      %1463 = vmatpush.xpose.msra.mxu0 0.0
      %1464 = vmatpush.xpose.msra.mxu0 0.0
      %1465 = vmatpush.xpose.msra.mxu0 0.0
      %1466 = vmatpush.xpose.msra.mxu0 0.0
      %1467 = vmatpush.xpose.msra.mxu0 0.0
      %v1468 = vand.u32 %v153, 4294901760
      %1469 = vmatpush.xpose.msra.mxu0 %v1468
      %v1470 = vand.u32 %v153, 4294901760
      %1471 = vmatmul.f32.gmra.mxu0 %v1470
      %v1472 = vpop.f32.mrf.mxu0
      %v1473 = vadd.f32 %v1451, %v1472
      %1474 = vdwg.mxu0
      %1475 = vmatpush.xpose.msra.mxu0 0.0
      %1476 = vmatpush.xpose.msra.mxu0 0.0
      %1477 = vmatpush.xpose.msra.mxu0 0.0
      %1478 = vmatpush.xpose.msra.mxu0 0.0
      %1479 = vmatpush.xpose.msra.mxu0 0.0
      %1480 = vmatpush.xpose.msra.mxu0 0.0
      %1481 = vmatpush.xpose.msra.mxu0 0.0
      %1482 = vmatpush.xpose.msra.mxu0 0.0
      %1483 = vmatpush.xpose.msra.mxu0 0.0
      %1484 = vmatpush.xpose.msra.mxu0 0.0
      %1485 = vmatpush.xpose.msra.mxu0 0.0
      %1486 = vmatpush.xpose.msra.mxu0 0.0
      %1487 = vmatpush.xpose.msra.mxu0 0.0
      %1488 = vmatpush.xpose.msra.mxu0 0.0
      %1489 = vmatpush.xpose.msra.mxu0 0.0
      %v1490 = vand.u32 %v154, 4294901760
      %1491 = vmatpush.xpose.msra.mxu0 %v1490
      %v1492 = vand.u32 %v154, 4294901760
      %v1493 = vsub.f32 %v154, %v1492
      %v1494 = vand.u32 %v1493, 4294901760
      %v1495 = vsub.f32 %v1493, %v1494
      %v1496 = vand.u32 %v1495, 4294901760
      %1497 = vmatmul.f32.gmra.mxu0 %v1496
      %v1498 = vpop.f32.mrf.mxu0
      %v1499 = vadd.f32 %v1473, %v1498
      %1500 = vdwg.mxu0
      %1501 = vmatpush.xpose.msra.mxu0 0.0
      %1502 = vmatpush.xpose.msra.mxu0 0.0
      %1503 = vmatpush.xpose.msra.mxu0 0.0
      %1504 = vmatpush.xpose.msra.mxu0 0.0
      %1505 = vmatpush.xpose.msra.mxu0 0.0
      %1506 = vmatpush.xpose.msra.mxu0 0.0
      %1507 = vmatpush.xpose.msra.mxu0 0.0
      %1508 = vmatpush.xpose.msra.mxu0 0.0
      %1509 = vmatpush.xpose.msra.mxu0 0.0
      %1510 = vmatpush.xpose.msra.mxu0 0.0
      %1511 = vmatpush.xpose.msra.mxu0 0.0
      %1512 = vmatpush.xpose.msra.mxu0 0.0
      %1513 = vmatpush.xpose.msra.mxu0 0.0
      %1514 = vmatpush.xpose.msra.mxu0 0.0
      %1515 = vmatpush.xpose.msra.mxu0 0.0
      %v1516 = vand.u32 %v154, 4294901760
      %v1517 = vsub.f32 %v154, %v1516
      %v1518 = vand.u32 %v1517, 4294901760
      %v1519 = vsub.f32 %v1517, %v1518
      %v1520 = vand.u32 %v1519, 4294901760
      %1521 = vmatpush.xpose.msra.mxu0 %v1520
      %v1522 = vand.u32 %v154, 4294901760
      %1523 = vmatmul.f32.gmra.mxu0 %v1522
      %v1524 = vpop.f32.mrf.mxu0
      %v1525 = vadd.f32 %v1499, %v1524
      %1526 = vdwg.mxu0
      %1527 = vmatpush.xpose.msra.mxu0 0.0
      %1528 = vmatpush.xpose.msra.mxu0 0.0
      %1529 = vmatpush.xpose.msra.mxu0 0.0
      %1530 = vmatpush.xpose.msra.mxu0 0.0
      %1531 = vmatpush.xpose.msra.mxu0 0.0
      %1532 = vmatpush.xpose.msra.mxu0 0.0
      %1533 = vmatpush.xpose.msra.mxu0 0.0
      %1534 = vmatpush.xpose.msra.mxu0 0.0
      %1535 = vmatpush.xpose.msra.mxu0 0.0
      %1536 = vmatpush.xpose.msra.mxu0 0.0
      %1537 = vmatpush.xpose.msra.mxu0 0.0
      %1538 = vmatpush.xpose.msra.mxu0 0.0
      %1539 = vmatpush.xpose.msra.mxu0 0.0
      %1540 = vmatpush.xpose.msra.mxu0 0.0
      %1541 = vmatpush.xpose.msra.mxu0 0.0
      %v1542 = vand.u32 %v154, 4294901760
      %v1543 = vsub.f32 %v154, %v1542
      %1544 = vmatpush.xpose.msra.mxu0 %v1543
      %v1545 = vand.u32 %v154, 4294901760
      %v1546 = vsub.f32 %v154, %v1545
      %1547 = vmatmul.f32.gmra.mxu0 %v1546
      %v1548 = vpop.f32.mrf.mxu0
      %v1549 = vadd.f32 %v1525, %v1548
      %1550 = vdwg.mxu0
      %1551 = vmatpush.xpose.msra.mxu0 0.0
      %1552 = vmatpush.xpose.msra.mxu0 0.0
      %1553 = vmatpush.xpose.msra.mxu0 0.0
      %1554 = vmatpush.xpose.msra.mxu0 0.0
      %1555 = vmatpush.xpose.msra.mxu0 0.0
      %1556 = vmatpush.xpose.msra.mxu0 0.0
      %1557 = vmatpush.xpose.msra.mxu0 0.0
      %1558 = vmatpush.xpose.msra.mxu0 0.0
      %1559 = vmatpush.xpose.msra.mxu0 0.0
      %1560 = vmatpush.xpose.msra.mxu0 0.0
      %1561 = vmatpush.xpose.msra.mxu0 0.0
      %1562 = vmatpush.xpose.msra.mxu0 0.0
      %1563 = vmatpush.xpose.msra.mxu0 0.0
      %1564 = vmatpush.xpose.msra.mxu0 0.0
      %1565 = vmatpush.xpose.msra.mxu0 0.0
      %v1566 = vand.u32 %v154, 4294901760
      %1567 = vmatpush.xpose.msra.mxu0 %v1566
      %v1568 = vand.u32 %v154, 4294901760
      %v1569 = vsub.f32 %v154, %v1568
      %v1570 = vand.u32 %v1569, 4294901760
      %1571 = vmatmul.f32.gmra.mxu0 %v1570
      %v1572 = vpop.f32.mrf.mxu0
      %v1573 = vadd.f32 %v1549, %v1572
      %1574 = vdwg.mxu0
      %1575 = vmatpush.xpose.msra.mxu0 0.0
      %1576 = vmatpush.xpose.msra.mxu0 0.0
      %1577 = vmatpush.xpose.msra.mxu0 0.0
      %1578 = vmatpush.xpose.msra.mxu0 0.0
      %1579 = vmatpush.xpose.msra.mxu0 0.0
      %1580 = vmatpush.xpose.msra.mxu0 0.0
      %1581 = vmatpush.xpose.msra.mxu0 0.0
      %1582 = vmatpush.xpose.msra.mxu0 0.0
      %1583 = vmatpush.xpose.msra.mxu0 0.0
      %1584 = vmatpush.xpose.msra.mxu0 0.0
      %1585 = vmatpush.xpose.msra.mxu0 0.0
      %1586 = vmatpush.xpose.msra.mxu0 0.0
      %1587 = vmatpush.xpose.msra.mxu0 0.0
      %1588 = vmatpush.xpose.msra.mxu0 0.0
      %1589 = vmatpush.xpose.msra.mxu0 0.0
      %v1590 = vand.u32 %v154, 4294901760
      %v1591 = vsub.f32 %v154, %v1590
      %v1592 = vand.u32 %v1591, 4294901760
      %1593 = vmatpush.xpose.msra.mxu0 %v1592
      %v1594 = vand.u32 %v154, 4294901760
      %1595 = vmatmul.f32.gmra.mxu0 %v1594
      %v1596 = vpop.f32.mrf.mxu0
      %v1597 = vadd.f32 %v1573, %v1596
      %1598 = vdwg.mxu0
      %1599 = vmatpush.xpose.msra.mxu0 0.0
      %1600 = vmatpush.xpose.msra.mxu0 0.0
      %1601 = vmatpush.xpose.msra.mxu0 0.0
      %1602 = vmatpush.xpose.msra.mxu0 0.0
      %1603 = vmatpush.xpose.msra.mxu0 0.0
      %1604 = vmatpush.xpose.msra.mxu0 0.0
      %1605 = vmatpush.xpose.msra.mxu0 0.0
      %1606 = vmatpush.xpose.msra.mxu0 0.0
      %1607 = vmatpush.xpose.msra.mxu0 0.0
      %1608 = vmatpush.xpose.msra.mxu0 0.0
      %1609 = vmatpush.xpose.msra.mxu0 0.0
      %1610 = vmatpush.xpose.msra.mxu0 0.0
      %1611 = vmatpush.xpose.msra.mxu0 0.0
      %1612 = vmatpush.xpose.msra.mxu0 0.0
      %1613 = vmatpush.xpose.msra.mxu0 0.0
      %v1614 = vand.u32 %v154, 4294901760
      %1615 = vmatpush.xpose.msra.mxu0 %v1614
      %v1616 = vand.u32 %v154, 4294901760
      %1617 = vmatmul.f32.gmra.mxu0 %v1616
      %v1618 = vpop.f32.mrf.mxu0
      %v1619 = vadd.f32 %v1597, %v1618
      %1620 = vdwg.mxu0
      %1621 = vmatpush.xpose.msra.mxu0 0.0
      %1622 = vmatpush.xpose.msra.mxu0 0.0
      %1623 = vmatpush.xpose.msra.mxu0 0.0
      %1624 = vmatpush.xpose.msra.mxu0 0.0
      %1625 = vmatpush.xpose.msra.mxu0 0.0
      %1626 = vmatpush.xpose.msra.mxu0 0.0
      %1627 = vmatpush.xpose.msra.mxu0 0.0
      %1628 = vmatpush.xpose.msra.mxu0 0.0
      %1629 = vmatpush.xpose.msra.mxu0 0.0
      %1630 = vmatpush.xpose.msra.mxu0 0.0
      %1631 = vmatpush.xpose.msra.mxu0 0.0
      %1632 = vmatpush.xpose.msra.mxu0 0.0
      %1633 = vmatpush.xpose.msra.mxu0 0.0
      %1634 = vmatpush.xpose.msra.mxu0 0.0
      %1635 = vmatpush.xpose.msra.mxu0 0.0
      %v1636 = vand.u32 %v155, 4294901760
      %1637 = vmatpush.xpose.msra.mxu0 %v1636
      %v1638 = vand.u32 %v155, 4294901760
      %v1639 = vsub.f32 %v155, %v1638
      %v1640 = vand.u32 %v1639, 4294901760
      %v1641 = vsub.f32 %v1639, %v1640
      %v1642 = vand.u32 %v1641, 4294901760
      %1643 = vmatmul.f32.gmra.mxu0 %v1642
      %v1644 = vpop.f32.mrf.mxu0
      %v1645 = vadd.f32 %v1619, %v1644
      %1646 = vdwg.mxu0
      %1647 = vmatpush.xpose.msra.mxu0 0.0
      %1648 = vmatpush.xpose.msra.mxu0 0.0
      %1649 = vmatpush.xpose.msra.mxu0 0.0
      %1650 = vmatpush.xpose.msra.mxu0 0.0
      %1651 = vmatpush.xpose.msra.mxu0 0.0
      %1652 = vmatpush.xpose.msra.mxu0 0.0
      %1653 = vmatpush.xpose.msra.mxu0 0.0
      %1654 = vmatpush.xpose.msra.mxu0 0.0
      %1655 = vmatpush.xpose.msra.mxu0 0.0
      %1656 = vmatpush.xpose.msra.mxu0 0.0
      %1657 = vmatpush.xpose.msra.mxu0 0.0
      %1658 = vmatpush.xpose.msra.mxu0 0.0
      %1659 = vmatpush.xpose.msra.mxu0 0.0
      %1660 = vmatpush.xpose.msra.mxu0 0.0
      %1661 = vmatpush.xpose.msra.mxu0 0.0
      %v1662 = vand.u32 %v155, 4294901760
      %v1663 = vsub.f32 %v155, %v1662
      %v1664 = vand.u32 %v1663, 4294901760
      %v1665 = vsub.f32 %v1663, %v1664
      %v1666 = vand.u32 %v1665, 4294901760
      %1667 = vmatpush.xpose.msra.mxu0 %v1666
      %v1668 = vand.u32 %v155, 4294901760
      %1669 = vmatmul.f32.gmra.mxu0 %v1668
      %v1670 = vpop.f32.mrf.mxu0
      %v1671 = vadd.f32 %v1645, %v1670
      %1672 = vdwg.mxu0
      %1673 = vmatpush.xpose.msra.mxu0 0.0
      %1674 = vmatpush.xpose.msra.mxu0 0.0
      %1675 = vmatpush.xpose.msra.mxu0 0.0
      %1676 = vmatpush.xpose.msra.mxu0 0.0
      %1677 = vmatpush.xpose.msra.mxu0 0.0
      %1678 = vmatpush.xpose.msra.mxu0 0.0
      %1679 = vmatpush.xpose.msra.mxu0 0.0
      %1680 = vmatpush.xpose.msra.mxu0 0.0
      %1681 = vmatpush.xpose.msra.mxu0 0.0
      %1682 = vmatpush.xpose.msra.mxu0 0.0
      %1683 = vmatpush.xpose.msra.mxu0 0.0
      %1684 = vmatpush.xpose.msra.mxu0 0.0
      %1685 = vmatpush.xpose.msra.mxu0 0.0
      %1686 = vmatpush.xpose.msra.mxu0 0.0
      %1687 = vmatpush.xpose.msra.mxu0 0.0
      %v1688 = vand.u32 %v155, 4294901760
      %v1689 = vsub.f32 %v155, %v1688
      %1690 = vmatpush.xpose.msra.mxu0 %v1689
      %v1691 = vand.u32 %v155, 4294901760
      %v1692 = vsub.f32 %v155, %v1691
      %1693 = vmatmul.f32.gmra.mxu0 %v1692
      %v1694 = vpop.f32.mrf.mxu0
      %v1695 = vadd.f32 %v1671, %v1694
      %1696 = vdwg.mxu0
      %1697 = vmatpush.xpose.msra.mxu0 0.0
      %1698 = vmatpush.xpose.msra.mxu0 0.0
      %1699 = vmatpush.xpose.msra.mxu0 0.0
      %1700 = vmatpush.xpose.msra.mxu0 0.0
      %1701 = vmatpush.xpose.msra.mxu0 0.0
      %1702 = vmatpush.xpose.msra.mxu0 0.0
      %1703 = vmatpush.xpose.msra.mxu0 0.0
      %1704 = vmatpush.xpose.msra.mxu0 0.0
      %1705 = vmatpush.xpose.msra.mxu0 0.0
      %1706 = vmatpush.xpose.msra.mxu0 0.0
      %1707 = vmatpush.xpose.msra.mxu0 0.0
      %1708 = vmatpush.xpose.msra.mxu0 0.0
      %1709 = vmatpush.xpose.msra.mxu0 0.0
      %1710 = vmatpush.xpose.msra.mxu0 0.0
      %1711 = vmatpush.xpose.msra.mxu0 0.0
      %v1712 = vand.u32 %v155, 4294901760
      %1713 = vmatpush.xpose.msra.mxu0 %v1712
      %v1714 = vand.u32 %v155, 4294901760
      %v1715 = vsub.f32 %v155, %v1714
      %v1716 = vand.u32 %v1715, 4294901760
      %1717 = vmatmul.f32.gmra.mxu0 %v1716
      %v1718 = vpop.f32.mrf.mxu0
      %v1719 = vadd.f32 %v1695, %v1718
      %1720 = vdwg.mxu0
      %1721 = vmatpush.xpose.msra.mxu0 0.0
      %1722 = vmatpush.xpose.msra.mxu0 0.0
      %1723 = vmatpush.xpose.msra.mxu0 0.0
      %1724 = vmatpush.xpose.msra.mxu0 0.0
      %1725 = vmatpush.xpose.msra.mxu0 0.0
      %1726 = vmatpush.xpose.msra.mxu0 0.0
      %1727 = vmatpush.xpose.msra.mxu0 0.0
      %1728 = vmatpush.xpose.msra.mxu0 0.0
      %1729 = vmatpush.xpose.msra.mxu0 0.0
      %1730 = vmatpush.xpose.msra.mxu0 0.0
      %1731 = vmatpush.xpose.msra.mxu0 0.0
      %1732 = vmatpush.xpose.msra.mxu0 0.0
      %1733 = vmatpush.xpose.msra.mxu0 0.0
      %1734 = vmatpush.xpose.msra.mxu0 0.0
      %1735 = vmatpush.xpose.msra.mxu0 0.0
      %v1736 = vand.u32 %v155, 4294901760
      %v1737 = vsub.f32 %v155, %v1736
      %v1738 = vand.u32 %v1737, 4294901760
      %1739 = vmatpush.xpose.msra.mxu0 %v1738
      %v1740 = vand.u32 %v155, 4294901760
      %1741 = vmatmul.f32.gmra.mxu0 %v1740
      %v1742 = vpop.f32.mrf.mxu0
      %v1743 = vadd.f32 %v1719, %v1742
      %1744 = vdwg.mxu0
      %1745 = vmatpush.xpose.msra.mxu0 0.0
      %1746 = vmatpush.xpose.msra.mxu0 0.0
      %1747 = vmatpush.xpose.msra.mxu0 0.0
      %1748 = vmatpush.xpose.msra.mxu0 0.0
      %1749 = vmatpush.xpose.msra.mxu0 0.0
      %1750 = vmatpush.xpose.msra.mxu0 0.0
      %1751 = vmatpush.xpose.msra.mxu0 0.0
      %1752 = vmatpush.xpose.msra.mxu0 0.0
      %1753 = vmatpush.xpose.msra.mxu0 0.0
      %1754 = vmatpush.xpose.msra.mxu0 0.0
      %1755 = vmatpush.xpose.msra.mxu0 0.0
      %1756 = vmatpush.xpose.msra.mxu0 0.0
      %1757 = vmatpush.xpose.msra.mxu0 0.0
      %1758 = vmatpush.xpose.msra.mxu0 0.0
      %1759 = vmatpush.xpose.msra.mxu0 0.0
      %v1760 = vand.u32 %v155, 4294901760
      %1761 = vmatpush.xpose.msra.mxu0 %v1760
      %v1762 = vand.u32 %v155, 4294901760
      %1763 = vmatmul.f32.gmra.mxu0 %v1762
      %v1764 = vpop.f32.mrf.mxu0
      %v1765 = vadd.f32 %v1743, %v1764
      %1766 = vdwg.mxu0
      %1767 = vmatpush.xpose.msra.mxu0 0.0
      %1768 = vmatpush.xpose.msra.mxu0 0.0
      %1769 = vmatpush.xpose.msra.mxu0 0.0
      %1770 = vmatpush.xpose.msra.mxu0 0.0
      %1771 = vmatpush.xpose.msra.mxu0 0.0
      %1772 = vmatpush.xpose.msra.mxu0 0.0
      %1773 = vmatpush.xpose.msra.mxu0 0.0
      %1774 = vmatpush.xpose.msra.mxu0 0.0
      %1775 = vmatpush.xpose.msra.mxu0 0.0
      %1776 = vmatpush.xpose.msra.mxu0 0.0
      %1777 = vmatpush.xpose.msra.mxu0 0.0
      %1778 = vmatpush.xpose.msra.mxu0 0.0
      %1779 = vmatpush.xpose.msra.mxu0 0.0
      %1780 = vmatpush.xpose.msra.mxu0 0.0
      %1781 = vmatpush.xpose.msra.mxu0 0.0
      %v1782 = vand.u32 %v156, 4294901760
      %1783 = vmatpush.xpose.msra.mxu0 %v1782
      %v1784 = vand.u32 %v156, 4294901760
      %v1785 = vsub.f32 %v156, %v1784
      %v1786 = vand.u32 %v1785, 4294901760
      %v1787 = vsub.f32 %v1785, %v1786
      %v1788 = vand.u32 %v1787, 4294901760
      %1789 = vmatmul.f32.gmra.mxu0 %v1788
      %v1790 = vpop.f32.mrf.mxu0
      %v1791 = vadd.f32 %v1765, %v1790
      %1792 = vdwg.mxu0
      %1793 = vmatpush.xpose.msra.mxu0 0.0
      %1794 = vmatpush.xpose.msra.mxu0 0.0
      %1795 = vmatpush.xpose.msra.mxu0 0.0
      %1796 = vmatpush.xpose.msra.mxu0 0.0
      %1797 = vmatpush.xpose.msra.mxu0 0.0
      %1798 = vmatpush.xpose.msra.mxu0 0.0
      %1799 = vmatpush.xpose.msra.mxu0 0.0
      %1800 = vmatpush.xpose.msra.mxu0 0.0
      %1801 = vmatpush.xpose.msra.mxu0 0.0
      %1802 = vmatpush.xpose.msra.mxu0 0.0
      %1803 = vmatpush.xpose.msra.mxu0 0.0
      %1804 = vmatpush.xpose.msra.mxu0 0.0
      %1805 = vmatpush.xpose.msra.mxu0 0.0
      %1806 = vmatpush.xpose.msra.mxu0 0.0
      %1807 = vmatpush.xpose.msra.mxu0 0.0
      %v1808 = vand.u32 %v156, 4294901760
      %v1809 = vsub.f32 %v156, %v1808
      %v1810 = vand.u32 %v1809, 4294901760
      %v1811 = vsub.f32 %v1809, %v1810
      %v1812 = vand.u32 %v1811, 4294901760
      %1813 = vmatpush.xpose.msra.mxu0 %v1812
      %v1814 = vand.u32 %v156, 4294901760
      %1815 = vmatmul.f32.gmra.mxu0 %v1814
      %v1816 = vpop.f32.mrf.mxu0
      %v1817 = vadd.f32 %v1791, %v1816
      %1818 = vdwg.mxu0
      %1819 = vmatpush.xpose.msra.mxu0 0.0
      %1820 = vmatpush.xpose.msra.mxu0 0.0
      %1821 = vmatpush.xpose.msra.mxu0 0.0
      %1822 = vmatpush.xpose.msra.mxu0 0.0
      %1823 = vmatpush.xpose.msra.mxu0 0.0
      %1824 = vmatpush.xpose.msra.mxu0 0.0
      %1825 = vmatpush.xpose.msra.mxu0 0.0
      %1826 = vmatpush.xpose.msra.mxu0 0.0
      %1827 = vmatpush.xpose.msra.mxu0 0.0
      %1828 = vmatpush.xpose.msra.mxu0 0.0
      %1829 = vmatpush.xpose.msra.mxu0 0.0
      %1830 = vmatpush.xpose.msra.mxu0 0.0
      %1831 = vmatpush.xpose.msra.mxu0 0.0
      %1832 = vmatpush.xpose.msra.mxu0 0.0
      %1833 = vmatpush.xpose.msra.mxu0 0.0
      %v1834 = vand.u32 %v156, 4294901760
      %v1835 = vsub.f32 %v156, %v1834
      %1836 = vmatpush.xpose.msra.mxu0 %v1835
      %v1837 = vand.u32 %v156, 4294901760
      %v1838 = vsub.f32 %v156, %v1837
      %1839 = vmatmul.f32.gmra.mxu0 %v1838
      %v1840 = vpop.f32.mrf.mxu0
      %v1841 = vadd.f32 %v1817, %v1840
      %1842 = vdwg.mxu0
      %1843 = vmatpush.xpose.msra.mxu0 0.0
      %1844 = vmatpush.xpose.msra.mxu0 0.0
      %1845 = vmatpush.xpose.msra.mxu0 0.0
      %1846 = vmatpush.xpose.msra.mxu0 0.0
      %1847 = vmatpush.xpose.msra.mxu0 0.0
      %1848 = vmatpush.xpose.msra.mxu0 0.0
      %1849 = vmatpush.xpose.msra.mxu0 0.0
      %1850 = vmatpush.xpose.msra.mxu0 0.0
      %1851 = vmatpush.xpose.msra.mxu0 0.0
      %1852 = vmatpush.xpose.msra.mxu0 0.0
      %1853 = vmatpush.xpose.msra.mxu0 0.0
      %1854 = vmatpush.xpose.msra.mxu0 0.0
      %1855 = vmatpush.xpose.msra.mxu0 0.0
      %1856 = vmatpush.xpose.msra.mxu0 0.0
      %1857 = vmatpush.xpose.msra.mxu0 0.0
      %v1858 = vand.u32 %v156, 4294901760
      %1859 = vmatpush.xpose.msra.mxu0 %v1858
      %v1860 = vand.u32 %v156, 4294901760
      %v1861 = vsub.f32 %v156, %v1860
      %v1862 = vand.u32 %v1861, 4294901760
      %1863 = vmatmul.f32.gmra.mxu0 %v1862
      %v1864 = vpop.f32.mrf.mxu0
      %v1865 = vadd.f32 %v1841, %v1864
      %1866 = vdwg.mxu0
      %1867 = vmatpush.xpose.msra.mxu0 0.0
      %1868 = vmatpush.xpose.msra.mxu0 0.0
      %1869 = vmatpush.xpose.msra.mxu0 0.0
      %1870 = vmatpush.xpose.msra.mxu0 0.0
      %1871 = vmatpush.xpose.msra.mxu0 0.0
      %1872 = vmatpush.xpose.msra.mxu0 0.0
      %1873 = vmatpush.xpose.msra.mxu0 0.0
      %1874 = vmatpush.xpose.msra.mxu0 0.0
      %1875 = vmatpush.xpose.msra.mxu0 0.0
      %1876 = vmatpush.xpose.msra.mxu0 0.0
      %1877 = vmatpush.xpose.msra.mxu0 0.0
      %1878 = vmatpush.xpose.msra.mxu0 0.0
      %1879 = vmatpush.xpose.msra.mxu0 0.0
      %1880 = vmatpush.xpose.msra.mxu0 0.0
      %1881 = vmatpush.xpose.msra.mxu0 0.0
      %v1882 = vand.u32 %v156, 4294901760
      %v1883 = vsub.f32 %v156, %v1882
      %v1884 = vand.u32 %v1883, 4294901760
      %1885 = vmatpush.xpose.msra.mxu0 %v1884
      %v1886 = vand.u32 %v156, 4294901760
      %1887 = vmatmul.f32.gmra.mxu0 %v1886
      %v1888 = vpop.f32.mrf.mxu0
      %v1889 = vadd.f32 %v1865, %v1888
      %1890 = vdwg.mxu0
      %1891 = vmatpush.xpose.msra.mxu0 0.0
      %1892 = vmatpush.xpose.msra.mxu0 0.0
      %1893 = vmatpush.xpose.msra.mxu0 0.0
      %1894 = vmatpush.xpose.msra.mxu0 0.0
      %1895 = vmatpush.xpose.msra.mxu0 0.0
      %1896 = vmatpush.xpose.msra.mxu0 0.0
      %1897 = vmatpush.xpose.msra.mxu0 0.0
      %1898 = vmatpush.xpose.msra.mxu0 0.0
      %1899 = vmatpush.xpose.msra.mxu0 0.0
      %1900 = vmatpush.xpose.msra.mxu0 0.0
      %1901 = vmatpush.xpose.msra.mxu0 0.0
      %1902 = vmatpush.xpose.msra.mxu0 0.0
      %1903 = vmatpush.xpose.msra.mxu0 0.0
      %1904 = vmatpush.xpose.msra.mxu0 0.0
      %1905 = vmatpush.xpose.msra.mxu0 0.0
      %v1906 = vand.u32 %v156, 4294901760
      %1907 = vmatpush.xpose.msra.mxu0 %v1906
      %v1908 = vand.u32 %v156, 4294901760
      %1909 = vmatmul.f32.gmra.mxu0 %v1908
      %v1910 = vpop.f32.mrf.mxu0
      %v1911 = vadd.f32 %v1889, %v1910
      %1912 = vdwg.mxu0
      %1913 = vmatpush.xpose.msra.mxu0 0.0
      %1914 = vmatpush.xpose.msra.mxu0 0.0
      %1915 = vmatpush.xpose.msra.mxu0 0.0
      %1916 = vmatpush.xpose.msra.mxu0 0.0
      %1917 = vmatpush.xpose.msra.mxu0 0.0
      %1918 = vmatpush.xpose.msra.mxu0 0.0
      %1919 = vmatpush.xpose.msra.mxu0 0.0
      %1920 = vmatpush.xpose.msra.mxu0 0.0
      %1921 = vmatpush.xpose.msra.mxu0 0.0
      %1922 = vmatpush.xpose.msra.mxu0 0.0
      %1923 = vmatpush.xpose.msra.mxu0 0.0
      %1924 = vmatpush.xpose.msra.mxu0 0.0
      %1925 = vmatpush.xpose.msra.mxu0 0.0
      %1926 = vmatpush.xpose.msra.mxu0 0.0
      %1927 = vmatpush.xpose.msra.mxu0 0.0
      %v1928 = vand.u32 %v157, 4294901760
      %1929 = vmatpush.xpose.msra.mxu0 %v1928
      %v1930 = vand.u32 %v157, 4294901760
      %v1931 = vsub.f32 %v157, %v1930
      %v1932 = vand.u32 %v1931, 4294901760
      %v1933 = vsub.f32 %v1931, %v1932
      %v1934 = vand.u32 %v1933, 4294901760
      %1935 = vmatmul.f32.gmra.mxu0 %v1934
      %v1936 = vpop.f32.mrf.mxu0
      %v1937 = vadd.f32 %v1911, %v1936
      %1938 = vdwg.mxu0
      %1939 = vmatpush.xpose.msra.mxu0 0.0
      %1940 = vmatpush.xpose.msra.mxu0 0.0
      %1941 = vmatpush.xpose.msra.mxu0 0.0
      %1942 = vmatpush.xpose.msra.mxu0 0.0
      %1943 = vmatpush.xpose.msra.mxu0 0.0
      %1944 = vmatpush.xpose.msra.mxu0 0.0
      %1945 = vmatpush.xpose.msra.mxu0 0.0
      %1946 = vmatpush.xpose.msra.mxu0 0.0
      %1947 = vmatpush.xpose.msra.mxu0 0.0
      %1948 = vmatpush.xpose.msra.mxu0 0.0
      %1949 = vmatpush.xpose.msra.mxu0 0.0
      %1950 = vmatpush.xpose.msra.mxu0 0.0
      %1951 = vmatpush.xpose.msra.mxu0 0.0
      %1952 = vmatpush.xpose.msra.mxu0 0.0
      %1953 = vmatpush.xpose.msra.mxu0 0.0
      %v1954 = vand.u32 %v157, 4294901760
      %v1955 = vsub.f32 %v157, %v1954
      %v1956 = vand.u32 %v1955, 4294901760
      %v1957 = vsub.f32 %v1955, %v1956
      %v1958 = vand.u32 %v1957, 4294901760
      %1959 = vmatpush.xpose.msra.mxu0 %v1958
      %v1960 = vand.u32 %v157, 4294901760
      %1961 = vmatmul.f32.gmra.mxu0 %v1960
      %v1962 = vpop.f32.mrf.mxu0
      %v1963 = vadd.f32 %v1937, %v1962
      %1964 = vdwg.mxu0
      %1965 = vmatpush.xpose.msra.mxu0 0.0
      %1966 = vmatpush.xpose.msra.mxu0 0.0
      %1967 = vmatpush.xpose.msra.mxu0 0.0
      %1968 = vmatpush.xpose.msra.mxu0 0.0
      %1969 = vmatpush.xpose.msra.mxu0 0.0
      %1970 = vmatpush.xpose.msra.mxu0 0.0
      %1971 = vmatpush.xpose.msra.mxu0 0.0
      %1972 = vmatpush.xpose.msra.mxu0 0.0
      %1973 = vmatpush.xpose.msra.mxu0 0.0
      %1974 = vmatpush.xpose.msra.mxu0 0.0
      %1975 = vmatpush.xpose.msra.mxu0 0.0
      %1976 = vmatpush.xpose.msra.mxu0 0.0
      %1977 = vmatpush.xpose.msra.mxu0 0.0
      %1978 = vmatpush.xpose.msra.mxu0 0.0
      %1979 = vmatpush.xpose.msra.mxu0 0.0
      %v1980 = vand.u32 %v157, 4294901760
      %v1981 = vsub.f32 %v157, %v1980
      %1982 = vmatpush.xpose.msra.mxu0 %v1981
      %v1983 = vand.u32 %v157, 4294901760
      %v1984 = vsub.f32 %v157, %v1983
      %1985 = vmatmul.f32.gmra.mxu0 %v1984
      %v1986 = vpop.f32.mrf.mxu0
      %v1987 = vadd.f32 %v1963, %v1986
      %1988 = vdwg.mxu0
      %1989 = vmatpush.xpose.msra.mxu0 0.0
      %1990 = vmatpush.xpose.msra.mxu0 0.0
      %1991 = vmatpush.xpose.msra.mxu0 0.0
      %1992 = vmatpush.xpose.msra.mxu0 0.0
      %1993 = vmatpush.xpose.msra.mxu0 0.0
      %1994 = vmatpush.xpose.msra.mxu0 0.0
      %1995 = vmatpush.xpose.msra.mxu0 0.0
      %1996 = vmatpush.xpose.msra.mxu0 0.0
      %1997 = vmatpush.xpose.msra.mxu0 0.0
      %1998 = vmatpush.xpose.msra.mxu0 0.0
      %1999 = vmatpush.xpose.msra.mxu0 0.0
      %2000 = vmatpush.xpose.msra.mxu0 0.0
      %2001 = vmatpush.xpose.msra.mxu0 0.0
      %2002 = vmatpush.xpose.msra.mxu0 0.0
      %2003 = vmatpush.xpose.msra.mxu0 0.0
      %v2004 = vand.u32 %v157, 4294901760
      %2005 = vmatpush.xpose.msra.mxu0 %v2004
      %v2006 = vand.u32 %v157, 4294901760
      %v2007 = vsub.f32 %v157, %v2006
      %v2008 = vand.u32 %v2007, 4294901760
      %2009 = vmatmul.f32.gmra.mxu0 %v2008
      %v2010 = vpop.f32.mrf.mxu0
      %v2011 = vadd.f32 %v1987, %v2010
      %2012 = vdwg.mxu0
      %2013 = vmatpush.xpose.msra.mxu0 0.0
      %2014 = vmatpush.xpose.msra.mxu0 0.0
      %2015 = vmatpush.xpose.msra.mxu0 0.0
      %2016 = vmatpush.xpose.msra.mxu0 0.0
      %2017 = vmatpush.xpose.msra.mxu0 0.0
      %2018 = vmatpush.xpose.msra.mxu0 0.0
      %2019 = vmatpush.xpose.msra.mxu0 0.0
      %2020 = vmatpush.xpose.msra.mxu0 0.0
      %2021 = vmatpush.xpose.msra.mxu0 0.0
      %2022 = vmatpush.xpose.msra.mxu0 0.0
      %2023 = vmatpush.xpose.msra.mxu0 0.0
      %2024 = vmatpush.xpose.msra.mxu0 0.0
      %2025 = vmatpush.xpose.msra.mxu0 0.0
      %2026 = vmatpush.xpose.msra.mxu0 0.0
      %2027 = vmatpush.xpose.msra.mxu0 0.0
      %v2028 = vand.u32 %v157, 4294901760
      %v2029 = vsub.f32 %v157, %v2028
      %v2030 = vand.u32 %v2029, 4294901760
      %2031 = vmatpush.xpose.msra.mxu0 %v2030
      %v2032 = vand.u32 %v157, 4294901760
      %2033 = vmatmul.f32.gmra.mxu0 %v2032
      %v2034 = vpop.f32.mrf.mxu0
      %v2035 = vadd.f32 %v2011, %v2034
      %2036 = vdwg.mxu0
      %2037 = vmatpush.xpose.msra.mxu0 0.0
      %2038 = vmatpush.xpose.msra.mxu0 0.0
      %2039 = vmatpush.xpose.msra.mxu0 0.0
      %2040 = vmatpush.xpose.msra.mxu0 0.0
      %2041 = vmatpush.xpose.msra.mxu0 0.0
      %2042 = vmatpush.xpose.msra.mxu0 0.0
      %2043 = vmatpush.xpose.msra.mxu0 0.0
      %2044 = vmatpush.xpose.msra.mxu0 0.0
      %2045 = vmatpush.xpose.msra.mxu0 0.0
      %2046 = vmatpush.xpose.msra.mxu0 0.0
      %2047 = vmatpush.xpose.msra.mxu0 0.0
      %2048 = vmatpush.xpose.msra.mxu0 0.0
      %2049 = vmatpush.xpose.msra.mxu0 0.0
      %2050 = vmatpush.xpose.msra.mxu0 0.0
      %2051 = vmatpush.xpose.msra.mxu0 0.0
      %v2052 = vand.u32 %v157, 4294901760
      %2053 = vmatpush.xpose.msra.mxu0 %v2052
      %v2054 = vand.u32 %v157, 4294901760
      %2055 = vmatmul.f32.gmra.mxu0 %v2054
      %v2056 = vpop.f32.mrf.mxu0
      %v2057 = vadd.f32 %v2035, %v2056
      %2058 = vdwg.mxu0
      %2059 = vmatpush.xpose.msra.mxu0 0.0
      %2060 = vmatpush.xpose.msra.mxu0 0.0
      %2061 = vmatpush.xpose.msra.mxu0 0.0
      %2062 = vmatpush.xpose.msra.mxu0 0.0
      %2063 = vmatpush.xpose.msra.mxu0 0.0
      %2064 = vmatpush.xpose.msra.mxu0 0.0
      %2065 = vmatpush.xpose.msra.mxu0 0.0
      %2066 = vmatpush.xpose.msra.mxu0 0.0
      %2067 = vmatpush.xpose.msra.mxu0 0.0
      %2068 = vmatpush.xpose.msra.mxu0 0.0
      %2069 = vmatpush.xpose.msra.mxu0 0.0
      %2070 = vmatpush.xpose.msra.mxu0 0.0
      %2071 = vmatpush.xpose.msra.mxu0 0.0
      %2072 = vmatpush.xpose.msra.mxu0 0.0
      %2073 = vmatpush.xpose.msra.mxu0 0.0
      %v2074 = vand.u32 %v158, 4294901760
      %2075 = vmatpush.xpose.msra.mxu0 %v2074
      %v2076 = vand.u32 %v158, 4294901760
      %v2077 = vsub.f32 %v158, %v2076
      %v2078 = vand.u32 %v2077, 4294901760
      %v2079 = vsub.f32 %v2077, %v2078
      %v2080 = vand.u32 %v2079, 4294901760
      %2081 = vmatmul.f32.gmra.mxu0 %v2080
      %v2082 = vpop.f32.mrf.mxu0
      %v2083 = vadd.f32 %v2057, %v2082
      %2084 = vdwg.mxu0
      %2085 = vmatpush.xpose.msra.mxu0 0.0
      %2086 = vmatpush.xpose.msra.mxu0 0.0
      %2087 = vmatpush.xpose.msra.mxu0 0.0
      %2088 = vmatpush.xpose.msra.mxu0 0.0
      %2089 = vmatpush.xpose.msra.mxu0 0.0
      %2090 = vmatpush.xpose.msra.mxu0 0.0
      %2091 = vmatpush.xpose.msra.mxu0 0.0
      %2092 = vmatpush.xpose.msra.mxu0 0.0
      %2093 = vmatpush.xpose.msra.mxu0 0.0
      %2094 = vmatpush.xpose.msra.mxu0 0.0
      %2095 = vmatpush.xpose.msra.mxu0 0.0
      %2096 = vmatpush.xpose.msra.mxu0 0.0
      %2097 = vmatpush.xpose.msra.mxu0 0.0
      %2098 = vmatpush.xpose.msra.mxu0 0.0
      %2099 = vmatpush.xpose.msra.mxu0 0.0
      %v2100 = vand.u32 %v158, 4294901760
      %v2101 = vsub.f32 %v158, %v2100
      %v2102 = vand.u32 %v2101, 4294901760
      %v2103 = vsub.f32 %v2101, %v2102
      %v2104 = vand.u32 %v2103, 4294901760
      %2105 = vmatpush.xpose.msra.mxu0 %v2104
      %v2106 = vand.u32 %v158, 4294901760
      %2107 = vmatmul.f32.gmra.mxu0 %v2106
      %v2108 = vpop.f32.mrf.mxu0
      %v2109 = vadd.f32 %v2083, %v2108
      %2110 = vdwg.mxu0
      %2111 = vmatpush.xpose.msra.mxu0 0.0
      %2112 = vmatpush.xpose.msra.mxu0 0.0
      %2113 = vmatpush.xpose.msra.mxu0 0.0
      %2114 = vmatpush.xpose.msra.mxu0 0.0
      %2115 = vmatpush.xpose.msra.mxu0 0.0
      %2116 = vmatpush.xpose.msra.mxu0 0.0
      %2117 = vmatpush.xpose.msra.mxu0 0.0
      %2118 = vmatpush.xpose.msra.mxu0 0.0
      %2119 = vmatpush.xpose.msra.mxu0 0.0
      %2120 = vmatpush.xpose.msra.mxu0 0.0
      %2121 = vmatpush.xpose.msra.mxu0 0.0
      %2122 = vmatpush.xpose.msra.mxu0 0.0
      %2123 = vmatpush.xpose.msra.mxu0 0.0
      %2124 = vmatpush.xpose.msra.mxu0 0.0
      %2125 = vmatpush.xpose.msra.mxu0 0.0
      %v2126 = vand.u32 %v158, 4294901760
      %v2127 = vsub.f32 %v158, %v2126
      %2128 = vmatpush.xpose.msra.mxu0 %v2127
      %v2129 = vand.u32 %v158, 4294901760
      %v2130 = vsub.f32 %v158, %v2129
      %2131 = vmatmul.f32.gmra.mxu0 %v2130
      %v2132 = vpop.f32.mrf.mxu0
      %v2133 = vadd.f32 %v2109, %v2132
      %2134 = vdwg.mxu0
      %2135 = vmatpush.xpose.msra.mxu0 0.0
      %2136 = vmatpush.xpose.msra.mxu0 0.0
      %2137 = vmatpush.xpose.msra.mxu0 0.0
      %2138 = vmatpush.xpose.msra.mxu0 0.0
      %2139 = vmatpush.xpose.msra.mxu0 0.0
      %2140 = vmatpush.xpose.msra.mxu0 0.0
      %2141 = vmatpush.xpose.msra.mxu0 0.0
      %2142 = vmatpush.xpose.msra.mxu0 0.0
      %2143 = vmatpush.xpose.msra.mxu0 0.0
      %2144 = vmatpush.xpose.msra.mxu0 0.0
      %2145 = vmatpush.xpose.msra.mxu0 0.0
      %2146 = vmatpush.xpose.msra.mxu0 0.0
      %2147 = vmatpush.xpose.msra.mxu0 0.0
      %2148 = vmatpush.xpose.msra.mxu0 0.0
      %2149 = vmatpush.xpose.msra.mxu0 0.0
      %v2150 = vand.u32 %v158, 4294901760
      %2151 = vmatpush.xpose.msra.mxu0 %v2150
      %v2152 = vand.u32 %v158, 4294901760
      %v2153 = vsub.f32 %v158, %v2152
      %v2154 = vand.u32 %v2153, 4294901760
      %2155 = vmatmul.f32.gmra.mxu0 %v2154
      %v2156 = vpop.f32.mrf.mxu0
      %v2157 = vadd.f32 %v2133, %v2156
      %2158 = vdwg.mxu0
      %2159 = vmatpush.xpose.msra.mxu0 0.0
      %2160 = vmatpush.xpose.msra.mxu0 0.0
      %2161 = vmatpush.xpose.msra.mxu0 0.0
      %2162 = vmatpush.xpose.msra.mxu0 0.0
      %2163 = vmatpush.xpose.msra.mxu0 0.0
      %2164 = vmatpush.xpose.msra.mxu0 0.0
      %2165 = vmatpush.xpose.msra.mxu0 0.0
      %2166 = vmatpush.xpose.msra.mxu0 0.0
      %2167 = vmatpush.xpose.msra.mxu0 0.0
      %2168 = vmatpush.xpose.msra.mxu0 0.0
      %2169 = vmatpush.xpose.msra.mxu0 0.0
      %2170 = vmatpush.xpose.msra.mxu0 0.0
      %2171 = vmatpush.xpose.msra.mxu0 0.0
      %2172 = vmatpush.xpose.msra.mxu0 0.0
      %2173 = vmatpush.xpose.msra.mxu0 0.0
      %v2174 = vand.u32 %v158, 4294901760
      %v2175 = vsub.f32 %v158, %v2174
      %v2176 = vand.u32 %v2175, 4294901760
      %2177 = vmatpush.xpose.msra.mxu0 %v2176
      %v2178 = vand.u32 %v158, 4294901760
      %2179 = vmatmul.f32.gmra.mxu0 %v2178
      %v2180 = vpop.f32.mrf.mxu0
      %v2181 = vadd.f32 %v2157, %v2180
      %2182 = vdwg.mxu0
      %2183 = vmatpush.xpose.msra.mxu0 0.0
      %2184 = vmatpush.xpose.msra.mxu0 0.0
      %2185 = vmatpush.xpose.msra.mxu0 0.0
      %2186 = vmatpush.xpose.msra.mxu0 0.0
      %2187 = vmatpush.xpose.msra.mxu0 0.0
      %2188 = vmatpush.xpose.msra.mxu0 0.0
      %2189 = vmatpush.xpose.msra.mxu0 0.0
      %2190 = vmatpush.xpose.msra.mxu0 0.0
      %2191 = vmatpush.xpose.msra.mxu0 0.0
      %2192 = vmatpush.xpose.msra.mxu0 0.0
      %2193 = vmatpush.xpose.msra.mxu0 0.0
      %2194 = vmatpush.xpose.msra.mxu0 0.0
      %2195 = vmatpush.xpose.msra.mxu0 0.0
      %2196 = vmatpush.xpose.msra.mxu0 0.0
      %2197 = vmatpush.xpose.msra.mxu0 0.0
      %v2198 = vand.u32 %v158, 4294901760
      %2199 = vmatpush.xpose.msra.mxu0 %v2198
      %v2200 = vand.u32 %v158, 4294901760
      %2201 = vmatmul.f32.gmra.mxu0 %v2200
      %v2202 = vpop.f32.mrf.mxu0
      %v2203 = vadd.f32 %v2181, %v2202
      %2204 = vdwg.mxu0
      %2205 = vmatpush.xpose.msra.mxu0 0.0
      %2206 = vmatpush.xpose.msra.mxu0 0.0
      %2207 = vmatpush.xpose.msra.mxu0 0.0
      %2208 = vmatpush.xpose.msra.mxu0 0.0
      %2209 = vmatpush.xpose.msra.mxu0 0.0
      %2210 = vmatpush.xpose.msra.mxu0 0.0
      %2211 = vmatpush.xpose.msra.mxu0 0.0
      %2212 = vmatpush.xpose.msra.mxu0 0.0
      %2213 = vmatpush.xpose.msra.mxu0 0.0
      %2214 = vmatpush.xpose.msra.mxu0 0.0
      %2215 = vmatpush.xpose.msra.mxu0 0.0
      %2216 = vmatpush.xpose.msra.mxu0 0.0
      %2217 = vmatpush.xpose.msra.mxu0 0.0
      %2218 = vmatpush.xpose.msra.mxu0 0.0
      %2219 = vmatpush.xpose.msra.mxu0 0.0
      %v2220 = vand.u32 %v159, 4294901760
      %2221 = vmatpush.xpose.msra.mxu0 %v2220
      %v2222 = vand.u32 %v159, 4294901760
      %v2223 = vsub.f32 %v159, %v2222
      %v2224 = vand.u32 %v2223, 4294901760
      %v2225 = vsub.f32 %v2223, %v2224
      %v2226 = vand.u32 %v2225, 4294901760
      %2227 = vmatmul.f32.gmra.mxu0 %v2226
      %v2228 = vpop.f32.mrf.mxu0
      %v2229 = vadd.f32 %v2203, %v2228
      %2230 = vdwg.mxu0
      %2231 = vmatpush.xpose.msra.mxu0 0.0
      %2232 = vmatpush.xpose.msra.mxu0 0.0
      %2233 = vmatpush.xpose.msra.mxu0 0.0
      %2234 = vmatpush.xpose.msra.mxu0 0.0
      %2235 = vmatpush.xpose.msra.mxu0 0.0
      %2236 = vmatpush.xpose.msra.mxu0 0.0
      %2237 = vmatpush.xpose.msra.mxu0 0.0
      %2238 = vmatpush.xpose.msra.mxu0 0.0
      %2239 = vmatpush.xpose.msra.mxu0 0.0
      %2240 = vmatpush.xpose.msra.mxu0 0.0
      %2241 = vmatpush.xpose.msra.mxu0 0.0
      %2242 = vmatpush.xpose.msra.mxu0 0.0
      %2243 = vmatpush.xpose.msra.mxu0 0.0
      %2244 = vmatpush.xpose.msra.mxu0 0.0
      %2245 = vmatpush.xpose.msra.mxu0 0.0
      %v2246 = vand.u32 %v159, 4294901760
      %v2247 = vsub.f32 %v159, %v2246
      %v2248 = vand.u32 %v2247, 4294901760
      %v2249 = vsub.f32 %v2247, %v2248
      %v2250 = vand.u32 %v2249, 4294901760
      %2251 = vmatpush.xpose.msra.mxu0 %v2250
      %v2252 = vand.u32 %v159, 4294901760
      %2253 = vmatmul.f32.gmra.mxu0 %v2252
      %v2254 = vpop.f32.mrf.mxu0
      %v2255 = vadd.f32 %v2229, %v2254
      %2256 = vdwg.mxu0
      %2257 = vmatpush.xpose.msra.mxu0 0.0
      %2258 = vmatpush.xpose.msra.mxu0 0.0
      %2259 = vmatpush.xpose.msra.mxu0 0.0
      %2260 = vmatpush.xpose.msra.mxu0 0.0
      %2261 = vmatpush.xpose.msra.mxu0 0.0
      %2262 = vmatpush.xpose.msra.mxu0 0.0
      %2263 = vmatpush.xpose.msra.mxu0 0.0
      %2264 = vmatpush.xpose.msra.mxu0 0.0
      %2265 = vmatpush.xpose.msra.mxu0 0.0
      %2266 = vmatpush.xpose.msra.mxu0 0.0
      %2267 = vmatpush.xpose.msra.mxu0 0.0
      %2268 = vmatpush.xpose.msra.mxu0 0.0
      %2269 = vmatpush.xpose.msra.mxu0 0.0
      %2270 = vmatpush.xpose.msra.mxu0 0.0
      %2271 = vmatpush.xpose.msra.mxu0 0.0
      %v2272 = vand.u32 %v159, 4294901760
      %v2273 = vsub.f32 %v159, %v2272
      %2274 = vmatpush.xpose.msra.mxu0 %v2273
      %v2275 = vand.u32 %v159, 4294901760
      %v2276 = vsub.f32 %v159, %v2275
      %2277 = vmatmul.f32.gmra.mxu0 %v2276
      %v2278 = vpop.f32.mrf.mxu0
      %v2279 = vadd.f32 %v2255, %v2278
      %2280 = vdwg.mxu0
      %2281 = vmatpush.xpose.msra.mxu0 0.0
      %2282 = vmatpush.xpose.msra.mxu0 0.0
      %2283 = vmatpush.xpose.msra.mxu0 0.0
      %2284 = vmatpush.xpose.msra.mxu0 0.0
      %2285 = vmatpush.xpose.msra.mxu0 0.0
      %2286 = vmatpush.xpose.msra.mxu0 0.0
      %2287 = vmatpush.xpose.msra.mxu0 0.0
      %2288 = vmatpush.xpose.msra.mxu0 0.0
      %2289 = vmatpush.xpose.msra.mxu0 0.0
      %2290 = vmatpush.xpose.msra.mxu0 0.0
      %2291 = vmatpush.xpose.msra.mxu0 0.0
      %2292 = vmatpush.xpose.msra.mxu0 0.0
      %2293 = vmatpush.xpose.msra.mxu0 0.0
      %2294 = vmatpush.xpose.msra.mxu0 0.0
      %2295 = vmatpush.xpose.msra.mxu0 0.0
      %v2296 = vand.u32 %v159, 4294901760
      %2297 = vmatpush.xpose.msra.mxu0 %v2296
      %v2298 = vand.u32 %v159, 4294901760
      %v2299 = vsub.f32 %v159, %v2298
      %v2300 = vand.u32 %v2299, 4294901760
      %2301 = vmatmul.f32.gmra.mxu0 %v2300
      %v2302 = vpop.f32.mrf.mxu0
      %v2303 = vadd.f32 %v2279, %v2302
      %2304 = vdwg.mxu0
      %2305 = vmatpush.xpose.msra.mxu0 0.0
      %2306 = vmatpush.xpose.msra.mxu0 0.0
      %2307 = vmatpush.xpose.msra.mxu0 0.0
      %2308 = vmatpush.xpose.msra.mxu0 0.0
      %2309 = vmatpush.xpose.msra.mxu0 0.0
      %2310 = vmatpush.xpose.msra.mxu0 0.0
      %2311 = vmatpush.xpose.msra.mxu0 0.0
      %2312 = vmatpush.xpose.msra.mxu0 0.0
      %2313 = vmatpush.xpose.msra.mxu0 0.0
      %2314 = vmatpush.xpose.msra.mxu0 0.0
      %2315 = vmatpush.xpose.msra.mxu0 0.0
      %2316 = vmatpush.xpose.msra.mxu0 0.0
      %2317 = vmatpush.xpose.msra.mxu0 0.0
      %2318 = vmatpush.xpose.msra.mxu0 0.0
      %2319 = vmatpush.xpose.msra.mxu0 0.0
      %v2320 = vand.u32 %v159, 4294901760
      %v2321 = vsub.f32 %v159, %v2320
      %v2322 = vand.u32 %v2321, 4294901760
      %2323 = vmatpush.xpose.msra.mxu0 %v2322
      %v2324 = vand.u32 %v159, 4294901760
      %2325 = vmatmul.f32.gmra.mxu0 %v2324
      %v2326 = vpop.f32.mrf.mxu0
      %v2327 = vadd.f32 %v2303, %v2326
      %2328 = vdwg.mxu0
      %2329 = vmatpush.xpose.msra.mxu0 0.0
      %2330 = vmatpush.xpose.msra.mxu0 0.0
      %2331 = vmatpush.xpose.msra.mxu0 0.0
      %2332 = vmatpush.xpose.msra.mxu0 0.0
      %2333 = vmatpush.xpose.msra.mxu0 0.0
      %2334 = vmatpush.xpose.msra.mxu0 0.0
      %2335 = vmatpush.xpose.msra.mxu0 0.0
      %2336 = vmatpush.xpose.msra.mxu0 0.0
      %2337 = vmatpush.xpose.msra.mxu0 0.0
      %2338 = vmatpush.xpose.msra.mxu0 0.0
      %2339 = vmatpush.xpose.msra.mxu0 0.0
      %2340 = vmatpush.xpose.msra.mxu0 0.0
      %2341 = vmatpush.xpose.msra.mxu0 0.0
      %2342 = vmatpush.xpose.msra.mxu0 0.0
      %2343 = vmatpush.xpose.msra.mxu0 0.0
      %v2344 = vand.u32 %v159, 4294901760
      %2345 = vmatpush.xpose.msra.mxu0 %v2344
      %v2346 = vand.u32 %v159, 4294901760
      %2347 = vmatmul.f32.gmra.mxu0 %v2346
      %v2348 = vpop.f32.mrf.mxu0
      %v2349 = vadd.f32 %v2327, %v2348
      %2350 = vdwg.mxu0
      %2351 = vmatpush.xpose.msra.mxu0 0.0
      %2352 = vmatpush.xpose.msra.mxu0 0.0
      %2353 = vmatpush.xpose.msra.mxu0 0.0
      %2354 = vmatpush.xpose.msra.mxu0 0.0
      %2355 = vmatpush.xpose.msra.mxu0 0.0
      %2356 = vmatpush.xpose.msra.mxu0 0.0
      %2357 = vmatpush.xpose.msra.mxu0 0.0
      %2358 = vmatpush.xpose.msra.mxu0 0.0
      %2359 = vmatpush.xpose.msra.mxu0 0.0
      %2360 = vmatpush.xpose.msra.mxu0 0.0
      %2361 = vmatpush.xpose.msra.mxu0 0.0
      %2362 = vmatpush.xpose.msra.mxu0 0.0
      %2363 = vmatpush.xpose.msra.mxu0 0.0
      %2364 = vmatpush.xpose.msra.mxu0 0.0
      %2365 = vmatpush.xpose.msra.mxu0 0.0
      %v2366 = vand.u32 %v160, 4294901760
      %2367 = vmatpush.xpose.msra.mxu0 %v2366
      %v2368 = vand.u32 %v160, 4294901760
      %v2369 = vsub.f32 %v160, %v2368
      %v2370 = vand.u32 %v2369, 4294901760
      %v2371 = vsub.f32 %v2369, %v2370
      %v2372 = vand.u32 %v2371, 4294901760
      %2373 = vmatmul.f32.gmra.mxu0 %v2372
      %v2374 = vpop.f32.mrf.mxu0
      %v2375 = vadd.f32 %v2349, %v2374
      %2376 = vdwg.mxu0
      %2377 = vmatpush.xpose.msra.mxu0 0.0
      %2378 = vmatpush.xpose.msra.mxu0 0.0
      %2379 = vmatpush.xpose.msra.mxu0 0.0
      %2380 = vmatpush.xpose.msra.mxu0 0.0
      %2381 = vmatpush.xpose.msra.mxu0 0.0
      %2382 = vmatpush.xpose.msra.mxu0 0.0
      %2383 = vmatpush.xpose.msra.mxu0 0.0
      %2384 = vmatpush.xpose.msra.mxu0 0.0
      %2385 = vmatpush.xpose.msra.mxu0 0.0
      %2386 = vmatpush.xpose.msra.mxu0 0.0
      %2387 = vmatpush.xpose.msra.mxu0 0.0
      %2388 = vmatpush.xpose.msra.mxu0 0.0
      %2389 = vmatpush.xpose.msra.mxu0 0.0
      %2390 = vmatpush.xpose.msra.mxu0 0.0
      %2391 = vmatpush.xpose.msra.mxu0 0.0
      %v2392 = vand.u32 %v160, 4294901760
      %v2393 = vsub.f32 %v160, %v2392
      %v2394 = vand.u32 %v2393, 4294901760
      %v2395 = vsub.f32 %v2393, %v2394
      %v2396 = vand.u32 %v2395, 4294901760
      %2397 = vmatpush.xpose.msra.mxu0 %v2396
      %v2398 = vand.u32 %v160, 4294901760
      %2399 = vmatmul.f32.gmra.mxu0 %v2398
      %v2400 = vpop.f32.mrf.mxu0
      %v2401 = vadd.f32 %v2375, %v2400
      %2402 = vdwg.mxu0
      %2403 = vmatpush.xpose.msra.mxu0 0.0
      %2404 = vmatpush.xpose.msra.mxu0 0.0
      %2405 = vmatpush.xpose.msra.mxu0 0.0
      %2406 = vmatpush.xpose.msra.mxu0 0.0
      %2407 = vmatpush.xpose.msra.mxu0 0.0
      %2408 = vmatpush.xpose.msra.mxu0 0.0
      %2409 = vmatpush.xpose.msra.mxu0 0.0
      %2410 = vmatpush.xpose.msra.mxu0 0.0
      %2411 = vmatpush.xpose.msra.mxu0 0.0
      %2412 = vmatpush.xpose.msra.mxu0 0.0
      %2413 = vmatpush.xpose.msra.mxu0 0.0
      %2414 = vmatpush.xpose.msra.mxu0 0.0
      %2415 = vmatpush.xpose.msra.mxu0 0.0
      %2416 = vmatpush.xpose.msra.mxu0 0.0
      %2417 = vmatpush.xpose.msra.mxu0 0.0
      %v2418 = vand.u32 %v160, 4294901760
      %v2419 = vsub.f32 %v160, %v2418
      %2420 = vmatpush.xpose.msra.mxu0 %v2419
      %v2421 = vand.u32 %v160, 4294901760
      %v2422 = vsub.f32 %v160, %v2421
      %2423 = vmatmul.f32.gmra.mxu0 %v2422
      %v2424 = vpop.f32.mrf.mxu0
      %v2425 = vadd.f32 %v2401, %v2424
      %2426 = vdwg.mxu0
      %2427 = vmatpush.xpose.msra.mxu0 0.0
      %2428 = vmatpush.xpose.msra.mxu0 0.0
      %2429 = vmatpush.xpose.msra.mxu0 0.0
      %2430 = vmatpush.xpose.msra.mxu0 0.0
      %2431 = vmatpush.xpose.msra.mxu0 0.0
      %2432 = vmatpush.xpose.msra.mxu0 0.0
      %2433 = vmatpush.xpose.msra.mxu0 0.0
      %2434 = vmatpush.xpose.msra.mxu0 0.0
      %2435 = vmatpush.xpose.msra.mxu0 0.0
      %2436 = vmatpush.xpose.msra.mxu0 0.0
      %2437 = vmatpush.xpose.msra.mxu0 0.0
      %2438 = vmatpush.xpose.msra.mxu0 0.0
      %2439 = vmatpush.xpose.msra.mxu0 0.0
      %2440 = vmatpush.xpose.msra.mxu0 0.0
      %2441 = vmatpush.xpose.msra.mxu0 0.0
      %v2442 = vand.u32 %v160, 4294901760
      %2443 = vmatpush.xpose.msra.mxu0 %v2442
      %v2444 = vand.u32 %v160, 4294901760
      %v2445 = vsub.f32 %v160, %v2444
      %v2446 = vand.u32 %v2445, 4294901760
      %2447 = vmatmul.f32.gmra.mxu0 %v2446
      %v2448 = vpop.f32.mrf.mxu0
      %v2449 = vadd.f32 %v2425, %v2448
      %2450 = vdwg.mxu0
      %2451 = vmatpush.xpose.msra.mxu0 0.0
      %2452 = vmatpush.xpose.msra.mxu0 0.0
      %2453 = vmatpush.xpose.msra.mxu0 0.0
      %2454 = vmatpush.xpose.msra.mxu0 0.0
      %2455 = vmatpush.xpose.msra.mxu0 0.0
      %2456 = vmatpush.xpose.msra.mxu0 0.0
      %2457 = vmatpush.xpose.msra.mxu0 0.0
      %2458 = vmatpush.xpose.msra.mxu0 0.0
      %2459 = vmatpush.xpose.msra.mxu0 0.0
      %2460 = vmatpush.xpose.msra.mxu0 0.0
      %2461 = vmatpush.xpose.msra.mxu0 0.0
      %2462 = vmatpush.xpose.msra.mxu0 0.0
      %2463 = vmatpush.xpose.msra.mxu0 0.0
      %2464 = vmatpush.xpose.msra.mxu0 0.0
      %2465 = vmatpush.xpose.msra.mxu0 0.0
      %v2466 = vand.u32 %v160, 4294901760
      %v2467 = vsub.f32 %v160, %v2466
      %v2468 = vand.u32 %v2467, 4294901760
      %2469 = vmatpush.xpose.msra.mxu0 %v2468
      %v2470 = vand.u32 %v160, 4294901760
      %2471 = vmatmul.f32.gmra.mxu0 %v2470
      %v2472 = vpop.f32.mrf.mxu0
      %v2473 = vadd.f32 %v2449, %v2472
      %2474 = vdwg.mxu0
      %2475 = vmatpush.xpose.msra.mxu0 0.0
      %2476 = vmatpush.xpose.msra.mxu0 0.0
      %2477 = vmatpush.xpose.msra.mxu0 0.0
      %2478 = vmatpush.xpose.msra.mxu0 0.0
      %2479 = vmatpush.xpose.msra.mxu0 0.0
      %2480 = vmatpush.xpose.msra.mxu0 0.0
      %2481 = vmatpush.xpose.msra.mxu0 0.0
      %2482 = vmatpush.xpose.msra.mxu0 0.0
      %2483 = vmatpush.xpose.msra.mxu0 0.0
      %2484 = vmatpush.xpose.msra.mxu0 0.0
      %2485 = vmatpush.xpose.msra.mxu0 0.0
      %2486 = vmatpush.xpose.msra.mxu0 0.0
      %2487 = vmatpush.xpose.msra.mxu0 0.0
      %2488 = vmatpush.xpose.msra.mxu0 0.0
      %2489 = vmatpush.xpose.msra.mxu0 0.0
      %v2490 = vand.u32 %v160, 4294901760
      %2491 = vmatpush.xpose.msra.mxu0 %v2490
      %v2492 = vand.u32 %v160, 4294901760
      %2493 = vmatmul.f32.gmra.mxu0 %v2492
      %v2494 = vpop.f32.mrf.mxu0
      %v2495 = vadd.f32 %v2473, %v2494
      %2496 = vdwg.mxu0
      %vm2497 = vcmask 64512
      %v2498 = vsel %vm2497, %v2495, -inf
      %2499 = vmax.xlane.f32.xlu0 %v2498
      %v2500 = vpop.xlane.xlu0 %2499
      %v2501 = vsub.f32 %v2500, %v2495
      %v2502 = vsel %vm2497, %v2501, -inf
      %2503 = vmax.xlane.f32.xlu0 %v2502
      %v2504 = vpop.xlane.xlu0 %2503
      %v2505 = vsub.f32 %v2501, %v2504
      %v2506 = vmul.f32 %v2505, 1.442695
      %v2507 = vpow.pop %v2506
      %v2508 = vsel %vm2497, %v2507, 0.0
      %2509 = vadd.xlane.f32.xlu0 %v2508
      %v2510 = vpop.xlane.xlu0 %2509
      %v2511 = vrcp.pop %v2510
      %v2512 = vmul.f32 %v2510, %v2511
      %v2513 = vsub.f32 1.0, %v2512
      %v2514 = vmul.f32 %v2511, %v2513
      %v2515 = vadd.f32 %v2511, %v2514
      %vm2516 = vweird.f32 %v2510
      %vm2517 = vweird.f32 %v2511
      %vm2518 = vmor %vm2516, %vm2517
      %v2519 = vsel %vm2518, %v2511, %v2515
      %v2520 = vand.u32 2147483647, %v2510
      %vm2521 = vcmp.eq.f32.partialorder %v2520, 8.507059e+37
      %v2522 = vand.u32 %v2510, 2147483648
      %v2523 = vor.u32 1.1754944e-38, %v2522
      %v2524 = vsel %vm2521, %v2523, %v2519
      %v2525 = vmul.f32 %v2507, %v2524
      %v2527 = vsel %vm2497, %v2525, 0
      %2529 = vmatpush.msra.mxu0 0.0
      %2530 = vmatpush.msra.mxu0 0.0
      %2531 = vmatpush.msra.mxu0 0.0
      %2532 = vmatpush.msra.mxu0 0.0
      %2533 = vmatpush.msra.mxu0 0.0
      %2534 = vmatpush.msra.mxu0 0.0
      %2535 = vmatpush.msra.mxu0 0.0
      %2536 = vmatpush.msra.mxu0 0.0
      %2537 = vmatpush.msra.mxu0 0.0
      %2538 = vmatpush.msra.mxu0 0.0
      %2539 = vmatpush.msra.mxu0 0.0
      %2540 = vmatpush.msra.mxu0 0.0
      %2541 = vmatpush.msra.mxu0 0.0
      %2542 = vmatpush.msra.mxu0 0.0
      %2543 = vmatpush.msra.mxu0 0.0
      %v2544 = vand.u32 %v145, 4294901760
      %2545 = vmatpush.msra.mxu0 %v2544
      %v2546 = vand.u32 %v2527, 4294901760
      %v2547 = vsub.f32 %v2527, %v2546
      %v2548 = vand.u32 %v2547, 4294901760
      %v2549 = vsub.f32 %v2547, %v2548
      %v2550 = vand.u32 %v2549, 4294901760
      %2551 = vmatmul.f32.gmra.mxu0 %v2550
      %v2552 = vpop.f32.mrf.mxu0
      %v2553 = vadd.f32 0.0, %v2552
      %2554 = vdwg.mxu0
      %2555 = vmatpush.msra.mxu0 0.0
      %2556 = vmatpush.msra.mxu0 0.0
      %2557 = vmatpush.msra.mxu0 0.0
      %2558 = vmatpush.msra.mxu0 0.0
      %2559 = vmatpush.msra.mxu0 0.0
      %2560 = vmatpush.msra.mxu0 0.0
      %2561 = vmatpush.msra.mxu0 0.0
      %2562 = vmatpush.msra.mxu0 0.0
      %2563 = vmatpush.msra.mxu0 0.0
      %2564 = vmatpush.msra.mxu0 0.0
      %2565 = vmatpush.msra.mxu0 0.0
      %2566 = vmatpush.msra.mxu0 0.0
      %2567 = vmatpush.msra.mxu0 0.0
      %2568 = vmatpush.msra.mxu0 0.0
      %2569 = vmatpush.msra.mxu0 0.0
      %v2570 = vand.u32 %v145, 4294901760
      %v2571 = vsub.f32 %v145, %v2570
      %v2572 = vand.u32 %v2571, 4294901760
      %v2573 = vsub.f32 %v2571, %v2572
      %v2574 = vand.u32 %v2573, 4294901760
      %2575 = vmatpush.msra.mxu0 %v2574
      %v2576 = vand.u32 %v2527, 4294901760
      %2577 = vmatmul.f32.gmra.mxu0 %v2576
      %v2578 = vpop.f32.mrf.mxu0
      %v2579 = vadd.f32 %v2553, %v2578
      %2580 = vdwg.mxu0
      %2581 = vmatpush.msra.mxu0 0.0
      %2582 = vmatpush.msra.mxu0 0.0
      %2583 = vmatpush.msra.mxu0 0.0
      %2584 = vmatpush.msra.mxu0 0.0
      %2585 = vmatpush.msra.mxu0 0.0
      %2586 = vmatpush.msra.mxu0 0.0
      %2587 = vmatpush.msra.mxu0 0.0
      %2588 = vmatpush.msra.mxu0 0.0
      %2589 = vmatpush.msra.mxu0 0.0
      %2590 = vmatpush.msra.mxu0 0.0
      %2591 = vmatpush.msra.mxu0 0.0
      %2592 = vmatpush.msra.mxu0 0.0
      %2593 = vmatpush.msra.mxu0 0.0
      %2594 = vmatpush.msra.mxu0 0.0
      %2595 = vmatpush.msra.mxu0 0.0
      %v2596 = vand.u32 %v145, 4294901760
      %v2597 = vsub.f32 %v145, %v2596
      %2598 = vmatpush.msra.mxu0 %v2597
      %v2599 = vand.u32 %v2527, 4294901760
      %v2600 = vsub.f32 %v2527, %v2599
      %2601 = vmatmul.f32.gmra.mxu0 %v2600
      %v2602 = vpop.f32.mrf.mxu0
      %v2603 = vadd.f32 %v2579, %v2602
      %2604 = vdwg.mxu0
      %2605 = vmatpush.msra.mxu0 0.0
      %2606 = vmatpush.msra.mxu0 0.0
      %2607 = vmatpush.msra.mxu0 0.0
      %2608 = vmatpush.msra.mxu0 0.0
      %2609 = vmatpush.msra.mxu0 0.0
      %2610 = vmatpush.msra.mxu0 0.0
      %2611 = vmatpush.msra.mxu0 0.0
      %2612 = vmatpush.msra.mxu0 0.0
      %2613 = vmatpush.msra.mxu0 0.0
      %2614 = vmatpush.msra.mxu0 0.0
      %2615 = vmatpush.msra.mxu0 0.0
      %2616 = vmatpush.msra.mxu0 0.0
      %2617 = vmatpush.msra.mxu0 0.0
      %2618 = vmatpush.msra.mxu0 0.0
      %2619 = vmatpush.msra.mxu0 0.0
      %v2620 = vand.u32 %v145, 4294901760
      %2621 = vmatpush.msra.mxu0 %v2620
      %v2622 = vand.u32 %v2527, 4294901760
      %v2623 = vsub.f32 %v2527, %v2622
      %v2624 = vand.u32 %v2623, 4294901760
      %2625 = vmatmul.f32.gmra.mxu0 %v2624
      %v2626 = vpop.f32.mrf.mxu0
      %v2627 = vadd.f32 %v2603, %v2626
      %2628 = vdwg.mxu0
      %2629 = vmatpush.msra.mxu0 0.0
      %2630 = vmatpush.msra.mxu0 0.0
      %2631 = vmatpush.msra.mxu0 0.0
      %2632 = vmatpush.msra.mxu0 0.0
      %2633 = vmatpush.msra.mxu0 0.0
      %2634 = vmatpush.msra.mxu0 0.0
      %2635 = vmatpush.msra.mxu0 0.0
      %2636 = vmatpush.msra.mxu0 0.0
      %2637 = vmatpush.msra.mxu0 0.0
      %2638 = vmatpush.msra.mxu0 0.0
      %2639 = vmatpush.msra.mxu0 0.0
      %2640 = vmatpush.msra.mxu0 0.0
      %2641 = vmatpush.msra.mxu0 0.0
      %2642 = vmatpush.msra.mxu0 0.0
      %2643 = vmatpush.msra.mxu0 0.0
      %v2644 = vand.u32 %v145, 4294901760
      %v2645 = vsub.f32 %v145, %v2644
      %v2646 = vand.u32 %v2645, 4294901760
      %2647 = vmatpush.msra.mxu0 %v2646
      %v2648 = vand.u32 %v2527, 4294901760
      %2649 = vmatmul.f32.gmra.mxu0 %v2648
      %v2650 = vpop.f32.mrf.mxu0
      %v2651 = vadd.f32 %v2627, %v2650
      %2652 = vdwg.mxu0
      %2653 = vmatpush.msra.mxu0 0.0
      %2654 = vmatpush.msra.mxu0 0.0
      %2655 = vmatpush.msra.mxu0 0.0
      %2656 = vmatpush.msra.mxu0 0.0
      %2657 = vmatpush.msra.mxu0 0.0
      %2658 = vmatpush.msra.mxu0 0.0
      %2659 = vmatpush.msra.mxu0 0.0
      %2660 = vmatpush.msra.mxu0 0.0
      %2661 = vmatpush.msra.mxu0 0.0
      %2662 = vmatpush.msra.mxu0 0.0
      %2663 = vmatpush.msra.mxu0 0.0
      %2664 = vmatpush.msra.mxu0 0.0
      %2665 = vmatpush.msra.mxu0 0.0
      %2666 = vmatpush.msra.mxu0 0.0
      %2667 = vmatpush.msra.mxu0 0.0
      %v2668 = vand.u32 %v145, 4294901760
      %2669 = vmatpush.msra.mxu0 %v2668
      %v2670 = vand.u32 %v2527, 4294901760
      %2671 = vmatmul.f32.gmra.mxu0 %v2670
      %v2672 = vpop.f32.mrf.mxu0
      %v2673 = vadd.f32 %v2651, %v2672
      %2674 = vdwg.mxu0
      %2675 = vmatpush.msra.mxu0 0.0
      %2676 = vmatpush.msra.mxu0 0.0
      %2677 = vmatpush.msra.mxu0 0.0
      %2678 = vmatpush.msra.mxu0 0.0
      %2679 = vmatpush.msra.mxu0 0.0
      %2680 = vmatpush.msra.mxu0 0.0
      %2681 = vmatpush.msra.mxu0 0.0
      %2682 = vmatpush.msra.mxu0 0.0
      %2683 = vmatpush.msra.mxu0 0.0
      %2684 = vmatpush.msra.mxu0 0.0
      %2685 = vmatpush.msra.mxu0 0.0
      %2686 = vmatpush.msra.mxu0 0.0
      %2687 = vmatpush.msra.mxu0 0.0
      %2688 = vmatpush.msra.mxu0 0.0
      %2689 = vmatpush.msra.mxu0 0.0
      %v2690 = vand.u32 %v146, 4294901760
      %2691 = vmatpush.msra.mxu0 %v2690
      %v2692 = vand.u32 %v2527, 4294901760
      %v2693 = vsub.f32 %v2527, %v2692
      %v2694 = vand.u32 %v2693, 4294901760
      %v2695 = vsub.f32 %v2693, %v2694
      %v2696 = vand.u32 %v2695, 4294901760
      %2697 = vmatmul.f32.gmra.mxu0 %v2696
      %v2698 = vpop.f32.mrf.mxu0
      %v2699 = vadd.f32 0.0, %v2698
      %2700 = vdwg.mxu0
      %2701 = vmatpush.msra.mxu0 0.0
      %2702 = vmatpush.msra.mxu0 0.0
      %2703 = vmatpush.msra.mxu0 0.0
      %2704 = vmatpush.msra.mxu0 0.0
      %2705 = vmatpush.msra.mxu0 0.0
      %2706 = vmatpush.msra.mxu0 0.0
      %2707 = vmatpush.msra.mxu0 0.0
      %2708 = vmatpush.msra.mxu0 0.0
      %2709 = vmatpush.msra.mxu0 0.0
      %2710 = vmatpush.msra.mxu0 0.0
      %2711 = vmatpush.msra.mxu0 0.0
      %2712 = vmatpush.msra.mxu0 0.0
      %2713 = vmatpush.msra.mxu0 0.0
      %2714 = vmatpush.msra.mxu0 0.0
      %2715 = vmatpush.msra.mxu0 0.0
      %v2716 = vand.u32 %v146, 4294901760
      %v2717 = vsub.f32 %v146, %v2716
      %v2718 = vand.u32 %v2717, 4294901760
      %v2719 = vsub.f32 %v2717, %v2718
      %v2720 = vand.u32 %v2719, 4294901760
      %2721 = vmatpush.msra.mxu0 %v2720
      %v2722 = vand.u32 %v2527, 4294901760
      %2723 = vmatmul.f32.gmra.mxu0 %v2722
      %v2724 = vpop.f32.mrf.mxu0
      %v2725 = vadd.f32 %v2699, %v2724
      %2726 = vdwg.mxu0
      %2727 = vmatpush.msra.mxu0 0.0
      %2728 = vmatpush.msra.mxu0 0.0
      %2729 = vmatpush.msra.mxu0 0.0
      %2730 = vmatpush.msra.mxu0 0.0
      %2731 = vmatpush.msra.mxu0 0.0
      %2732 = vmatpush.msra.mxu0 0.0
      %2733 = vmatpush.msra.mxu0 0.0
      %2734 = vmatpush.msra.mxu0 0.0
      %2735 = vmatpush.msra.mxu0 0.0
      %2736 = vmatpush.msra.mxu0 0.0
      %2737 = vmatpush.msra.mxu0 0.0
      %2738 = vmatpush.msra.mxu0 0.0
      %2739 = vmatpush.msra.mxu0 0.0
      %2740 = vmatpush.msra.mxu0 0.0
      %2741 = vmatpush.msra.mxu0 0.0
      %v2742 = vand.u32 %v146, 4294901760
      %v2743 = vsub.f32 %v146, %v2742
      %2744 = vmatpush.msra.mxu0 %v2743
      %v2745 = vand.u32 %v2527, 4294901760
      %v2746 = vsub.f32 %v2527, %v2745
      %2747 = vmatmul.f32.gmra.mxu0 %v2746
      %v2748 = vpop.f32.mrf.mxu0
      %v2749 = vadd.f32 %v2725, %v2748
      %2750 = vdwg.mxu0
      %2751 = vmatpush.msra.mxu0 0.0
      %2752 = vmatpush.msra.mxu0 0.0
      %2753 = vmatpush.msra.mxu0 0.0
      %2754 = vmatpush.msra.mxu0 0.0
      %2755 = vmatpush.msra.mxu0 0.0
      %2756 = vmatpush.msra.mxu0 0.0
      %2757 = vmatpush.msra.mxu0 0.0
      %2758 = vmatpush.msra.mxu0 0.0
      %2759 = vmatpush.msra.mxu0 0.0
      %2760 = vmatpush.msra.mxu0 0.0
      %2761 = vmatpush.msra.mxu0 0.0
      %2762 = vmatpush.msra.mxu0 0.0
      %2763 = vmatpush.msra.mxu0 0.0
      %2764 = vmatpush.msra.mxu0 0.0
      %2765 = vmatpush.msra.mxu0 0.0
      %v2766 = vand.u32 %v146, 4294901760
      %2767 = vmatpush.msra.mxu0 %v2766
      %v2768 = vand.u32 %v2527, 4294901760
      %v2769 = vsub.f32 %v2527, %v2768
      %v2770 = vand.u32 %v2769, 4294901760
      %2771 = vmatmul.f32.gmra.mxu0 %v2770
      %v2772 = vpop.f32.mrf.mxu0
      %v2773 = vadd.f32 %v2749, %v2772
      %2774 = vdwg.mxu0
      %2775 = vmatpush.msra.mxu0 0.0
      %2776 = vmatpush.msra.mxu0 0.0
      %2777 = vmatpush.msra.mxu0 0.0
      %2778 = vmatpush.msra.mxu0 0.0
      %2779 = vmatpush.msra.mxu0 0.0
      %2780 = vmatpush.msra.mxu0 0.0
      %2781 = vmatpush.msra.mxu0 0.0
      %2782 = vmatpush.msra.mxu0 0.0
      %2783 = vmatpush.msra.mxu0 0.0
      %2784 = vmatpush.msra.mxu0 0.0
      %2785 = vmatpush.msra.mxu0 0.0
      %2786 = vmatpush.msra.mxu0 0.0
      %2787 = vmatpush.msra.mxu0 0.0
      %2788 = vmatpush.msra.mxu0 0.0
      %2789 = vmatpush.msra.mxu0 0.0
      %v2790 = vand.u32 %v146, 4294901760
      %v2791 = vsub.f32 %v146, %v2790
      %v2792 = vand.u32 %v2791, 4294901760
      %2793 = vmatpush.msra.mxu0 %v2792
      %v2794 = vand.u32 %v2527, 4294901760
      %2795 = vmatmul.f32.gmra.mxu0 %v2794
      %v2796 = vpop.f32.mrf.mxu0
      %v2797 = vadd.f32 %v2773, %v2796
      %2798 = vdwg.mxu0
      %2799 = vmatpush.msra.mxu0 0.0
      %2800 = vmatpush.msra.mxu0 0.0
      %2801 = vmatpush.msra.mxu0 0.0
      %2802 = vmatpush.msra.mxu0 0.0
      %2803 = vmatpush.msra.mxu0 0.0
      %2804 = vmatpush.msra.mxu0 0.0
      %2805 = vmatpush.msra.mxu0 0.0
      %2806 = vmatpush.msra.mxu0 0.0
      %2807 = vmatpush.msra.mxu0 0.0
      %2808 = vmatpush.msra.mxu0 0.0
      %2809 = vmatpush.msra.mxu0 0.0
      %2810 = vmatpush.msra.mxu0 0.0
      %2811 = vmatpush.msra.mxu0 0.0
      %2812 = vmatpush.msra.mxu0 0.0
      %2813 = vmatpush.msra.mxu0 0.0
      %v2814 = vand.u32 %v146, 4294901760
      %2815 = vmatpush.msra.mxu0 %v2814
      %v2816 = vand.u32 %v2527, 4294901760
      %2817 = vmatmul.f32.gmra.mxu0 %v2816
      %v2818 = vpop.f32.mrf.mxu0
      %v2819 = vadd.f32 %v2797, %v2818
      %2820 = vdwg.mxu0
      %2821 = vmatpush.msra.mxu0 0.0
      %2822 = vmatpush.msra.mxu0 0.0
      %2823 = vmatpush.msra.mxu0 0.0
      %2824 = vmatpush.msra.mxu0 0.0
      %2825 = vmatpush.msra.mxu0 0.0
      %2826 = vmatpush.msra.mxu0 0.0
      %2827 = vmatpush.msra.mxu0 0.0
      %2828 = vmatpush.msra.mxu0 0.0
      %2829 = vmatpush.msra.mxu0 0.0
      %2830 = vmatpush.msra.mxu0 0.0
      %2831 = vmatpush.msra.mxu0 0.0
      %2832 = vmatpush.msra.mxu0 0.0
      %2833 = vmatpush.msra.mxu0 0.0
      %2834 = vmatpush.msra.mxu0 0.0
      %2835 = vmatpush.msra.mxu0 0.0
      %v2836 = vand.u32 %v147, 4294901760
      %2837 = vmatpush.msra.mxu0 %v2836
      %v2838 = vand.u32 %v2527, 4294901760
      %v2839 = vsub.f32 %v2527, %v2838
      %v2840 = vand.u32 %v2839, 4294901760
      %v2841 = vsub.f32 %v2839, %v2840
      %v2842 = vand.u32 %v2841, 4294901760
      %2843 = vmatmul.f32.gmra.mxu0 %v2842
      %v2844 = vpop.f32.mrf.mxu0
      %v2845 = vadd.f32 0.0, %v2844
      %2846 = vdwg.mxu0
      %2847 = vmatpush.msra.mxu0 0.0
      %2848 = vmatpush.msra.mxu0 0.0
      %2849 = vmatpush.msra.mxu0 0.0
      %2850 = vmatpush.msra.mxu0 0.0
      %2851 = vmatpush.msra.mxu0 0.0
      %2852 = vmatpush.msra.mxu0 0.0
      %2853 = vmatpush.msra.mxu0 0.0
      %2854 = vmatpush.msra.mxu0 0.0
      %2855 = vmatpush.msra.mxu0 0.0
      %2856 = vmatpush.msra.mxu0 0.0
      %2857 = vmatpush.msra.mxu0 0.0
      %2858 = vmatpush.msra.mxu0 0.0
      %2859 = vmatpush.msra.mxu0 0.0
      %2860 = vmatpush.msra.mxu0 0.0
      %2861 = vmatpush.msra.mxu0 0.0
      %v2862 = vand.u32 %v147, 4294901760
      %v2863 = vsub.f32 %v147, %v2862
      %v2864 = vand.u32 %v2863, 4294901760
      %v2865 = vsub.f32 %v2863, %v2864
      %v2866 = vand.u32 %v2865, 4294901760
      %2867 = vmatpush.msra.mxu0 %v2866
      %v2868 = vand.u32 %v2527, 4294901760
      %2869 = vmatmul.f32.gmra.mxu0 %v2868
      %v2870 = vpop.f32.mrf.mxu0
      %v2871 = vadd.f32 %v2845, %v2870
      %2872 = vdwg.mxu0
      %2873 = vmatpush.msra.mxu0 0.0
      %2874 = vmatpush.msra.mxu0 0.0
      %2875 = vmatpush.msra.mxu0 0.0
      %2876 = vmatpush.msra.mxu0 0.0
      %2877 = vmatpush.msra.mxu0 0.0
      %2878 = vmatpush.msra.mxu0 0.0
      %2879 = vmatpush.msra.mxu0 0.0
      %2880 = vmatpush.msra.mxu0 0.0
      %2881 = vmatpush.msra.mxu0 0.0
      %2882 = vmatpush.msra.mxu0 0.0
      %2883 = vmatpush.msra.mxu0 0.0
      %2884 = vmatpush.msra.mxu0 0.0
      %2885 = vmatpush.msra.mxu0 0.0
      %2886 = vmatpush.msra.mxu0 0.0
      %2887 = vmatpush.msra.mxu0 0.0
      %v2888 = vand.u32 %v147, 4294901760
      %v2889 = vsub.f32 %v147, %v2888
      %2890 = vmatpush.msra.mxu0 %v2889
      %v2891 = vand.u32 %v2527, 4294901760
      %v2892 = vsub.f32 %v2527, %v2891
      %2893 = vmatmul.f32.gmra.mxu0 %v2892
      %v2894 = vpop.f32.mrf.mxu0
      %v2895 = vadd.f32 %v2871, %v2894
      %2896 = vdwg.mxu0
      %2897 = vmatpush.msra.mxu0 0.0
      %2898 = vmatpush.msra.mxu0 0.0
      %2899 = vmatpush.msra.mxu0 0.0
      %2900 = vmatpush.msra.mxu0 0.0
      %2901 = vmatpush.msra.mxu0 0.0
      %2902 = vmatpush.msra.mxu0 0.0
      %2903 = vmatpush.msra.mxu0 0.0
      %2904 = vmatpush.msra.mxu0 0.0
      %2905 = vmatpush.msra.mxu0 0.0
      %2906 = vmatpush.msra.mxu0 0.0
      %2907 = vmatpush.msra.mxu0 0.0
      %2908 = vmatpush.msra.mxu0 0.0
      %2909 = vmatpush.msra.mxu0 0.0
      %2910 = vmatpush.msra.mxu0 0.0
      %2911 = vmatpush.msra.mxu0 0.0
      %v2912 = vand.u32 %v147, 4294901760
      %2913 = vmatpush.msra.mxu0 %v2912
      %v2914 = vand.u32 %v2527, 4294901760
      %v2915 = vsub.f32 %v2527, %v2914
      %v2916 = vand.u32 %v2915, 4294901760
      %2917 = vmatmul.f32.gmra.mxu0 %v2916
      %v2918 = vpop.f32.mrf.mxu0
      %v2919 = vadd.f32 %v2895, %v2918
      %2920 = vdwg.mxu0
      %2921 = vmatpush.msra.mxu0 0.0
      %2922 = vmatpush.msra.mxu0 0.0
      %2923 = vmatpush.msra.mxu0 0.0
      %2924 = vmatpush.msra.mxu0 0.0
      %2925 = vmatpush.msra.mxu0 0.0
      %2926 = vmatpush.msra.mxu0 0.0
      %2927 = vmatpush.msra.mxu0 0.0
      %2928 = vmatpush.msra.mxu0 0.0
      %2929 = vmatpush.msra.mxu0 0.0
      %2930 = vmatpush.msra.mxu0 0.0
      %2931 = vmatpush.msra.mxu0 0.0
      %2932 = vmatpush.msra.mxu0 0.0
      %2933 = vmatpush.msra.mxu0 0.0
      %2934 = vmatpush.msra.mxu0 0.0
      %2935 = vmatpush.msra.mxu0 0.0
      %v2936 = vand.u32 %v147, 4294901760
      %v2937 = vsub.f32 %v147, %v2936
      %v2938 = vand.u32 %v2937, 4294901760
      %2939 = vmatpush.msra.mxu0 %v2938
      %v2940 = vand.u32 %v2527, 4294901760
      %2941 = vmatmul.f32.gmra.mxu0 %v2940
      %v2942 = vpop.f32.mrf.mxu0
      %v2943 = vadd.f32 %v2919, %v2942
      %2944 = vdwg.mxu0
      %2945 = vmatpush.msra.mxu0 0.0
      %2946 = vmatpush.msra.mxu0 0.0
      %2947 = vmatpush.msra.mxu0 0.0
      %2948 = vmatpush.msra.mxu0 0.0
      %2949 = vmatpush.msra.mxu0 0.0
      %2950 = vmatpush.msra.mxu0 0.0
      %2951 = vmatpush.msra.mxu0 0.0
      %2952 = vmatpush.msra.mxu0 0.0
      %2953 = vmatpush.msra.mxu0 0.0
      %2954 = vmatpush.msra.mxu0 0.0
      %2955 = vmatpush.msra.mxu0 0.0
      %2956 = vmatpush.msra.mxu0 0.0
      %2957 = vmatpush.msra.mxu0 0.0
      %2958 = vmatpush.msra.mxu0 0.0
      %2959 = vmatpush.msra.mxu0 0.0
      %v2960 = vand.u32 %v147, 4294901760
      %2961 = vmatpush.msra.mxu0 %v2960
      %v2962 = vand.u32 %v2527, 4294901760
      %2963 = vmatmul.f32.gmra.mxu0 %v2962
      %v2964 = vpop.f32.mrf.mxu0
      %v2965 = vadd.f32 %v2943, %v2964
      %2966 = vdwg.mxu0
      %2967 = vmatpush.msra.mxu0 0.0
      %2968 = vmatpush.msra.mxu0 0.0
      %2969 = vmatpush.msra.mxu0 0.0
      %2970 = vmatpush.msra.mxu0 0.0
      %2971 = vmatpush.msra.mxu0 0.0
      %2972 = vmatpush.msra.mxu0 0.0
      %2973 = vmatpush.msra.mxu0 0.0
      %2974 = vmatpush.msra.mxu0 0.0
      %2975 = vmatpush.msra.mxu0 0.0
      %2976 = vmatpush.msra.mxu0 0.0
      %2977 = vmatpush.msra.mxu0 0.0
      %2978 = vmatpush.msra.mxu0 0.0
      %2979 = vmatpush.msra.mxu0 0.0
      %2980 = vmatpush.msra.mxu0 0.0
      %2981 = vmatpush.msra.mxu0 0.0
      %v2982 = vand.u32 %v148, 4294901760
      %2983 = vmatpush.msra.mxu0 %v2982
      %v2984 = vand.u32 %v2527, 4294901760
      %v2985 = vsub.f32 %v2527, %v2984
      %v2986 = vand.u32 %v2985, 4294901760
      %v2987 = vsub.f32 %v2985, %v2986
      %v2988 = vand.u32 %v2987, 4294901760
      %2989 = vmatmul.f32.gmra.mxu0 %v2988
      %v2990 = vpop.f32.mrf.mxu0
      %v2991 = vadd.f32 0.0, %v2990
      %2992 = vdwg.mxu0
      %2993 = vmatpush.msra.mxu0 0.0
      %2994 = vmatpush.msra.mxu0 0.0
      %2995 = vmatpush.msra.mxu0 0.0
      %2996 = vmatpush.msra.mxu0 0.0
      %2997 = vmatpush.msra.mxu0 0.0
      %2998 = vmatpush.msra.mxu0 0.0
      %2999 = vmatpush.msra.mxu0 0.0
      %3000 = vmatpush.msra.mxu0 0.0
      %3001 = vmatpush.msra.mxu0 0.0
      %3002 = vmatpush.msra.mxu0 0.0
      %3003 = vmatpush.msra.mxu0 0.0
      %3004 = vmatpush.msra.mxu0 0.0
      %3005 = vmatpush.msra.mxu0 0.0
      %3006 = vmatpush.msra.mxu0 0.0
      %3007 = vmatpush.msra.mxu0 0.0
      %v3008 = vand.u32 %v148, 4294901760
      %v3009 = vsub.f32 %v148, %v3008
      %v3010 = vand.u32 %v3009, 4294901760
      %v3011 = vsub.f32 %v3009, %v3010
      %v3012 = vand.u32 %v3011, 4294901760
      %3013 = vmatpush.msra.mxu0 %v3012
      %v3014 = vand.u32 %v2527, 4294901760
      %3015 = vmatmul.f32.gmra.mxu0 %v3014
      %v3016 = vpop.f32.mrf.mxu0
      %v3017 = vadd.f32 %v2991, %v3016
      %3018 = vdwg.mxu0
      %3019 = vmatpush.msra.mxu0 0.0
      %3020 = vmatpush.msra.mxu0 0.0
      %3021 = vmatpush.msra.mxu0 0.0
      %3022 = vmatpush.msra.mxu0 0.0
      %3023 = vmatpush.msra.mxu0 0.0
      %3024 = vmatpush.msra.mxu0 0.0
      %3025 = vmatpush.msra.mxu0 0.0
      %3026 = vmatpush.msra.mxu0 0.0
      %3027 = vmatpush.msra.mxu0 0.0
      %3028 = vmatpush.msra.mxu0 0.0
      %3029 = vmatpush.msra.mxu0 0.0
      %3030 = vmatpush.msra.mxu0 0.0
      %3031 = vmatpush.msra.mxu0 0.0
      %3032 = vmatpush.msra.mxu0 0.0
      %3033 = vmatpush.msra.mxu0 0.0
      %v3034 = vand.u32 %v148, 4294901760
      %v3035 = vsub.f32 %v148, %v3034
      %3036 = vmatpush.msra.mxu0 %v3035
      %v3037 = vand.u32 %v2527, 4294901760
      %v3038 = vsub.f32 %v2527, %v3037
      %3039 = vmatmul.f32.gmra.mxu0 %v3038
      %v3040 = vpop.f32.mrf.mxu0
      %v3041 = vadd.f32 %v3017, %v3040
      %3042 = vdwg.mxu0
      %3043 = vmatpush.msra.mxu0 0.0
      %3044 = vmatpush.msra.mxu0 0.0
      %3045 = vmatpush.msra.mxu0 0.0
      %3046 = vmatpush.msra.mxu0 0.0
      %3047 = vmatpush.msra.mxu0 0.0
      %3048 = vmatpush.msra.mxu0 0.0
      %3049 = vmatpush.msra.mxu0 0.0
      %3050 = vmatpush.msra.mxu0 0.0
      %3051 = vmatpush.msra.mxu0 0.0
      %3052 = vmatpush.msra.mxu0 0.0
      %3053 = vmatpush.msra.mxu0 0.0
      %3054 = vmatpush.msra.mxu0 0.0
      %3055 = vmatpush.msra.mxu0 0.0
      %3056 = vmatpush.msra.mxu0 0.0
      %3057 = vmatpush.msra.mxu0 0.0
      %v3058 = vand.u32 %v148, 4294901760
      %3059 = vmatpush.msra.mxu0 %v3058
      %v3060 = vand.u32 %v2527, 4294901760
      %v3061 = vsub.f32 %v2527, %v3060
      %v3062 = vand.u32 %v3061, 4294901760
      %3063 = vmatmul.f32.gmra.mxu0 %v3062
      %v3064 = vpop.f32.mrf.mxu0
      %v3065 = vadd.f32 %v3041, %v3064
      %3066 = vdwg.mxu0
      %3067 = vmatpush.msra.mxu0 0.0
      %3068 = vmatpush.msra.mxu0 0.0
      %3069 = vmatpush.msra.mxu0 0.0
      %3070 = vmatpush.msra.mxu0 0.0
      %3071 = vmatpush.msra.mxu0 0.0
      %3072 = vmatpush.msra.mxu0 0.0
      %3073 = vmatpush.msra.mxu0 0.0
      %3074 = vmatpush.msra.mxu0 0.0
      %3075 = vmatpush.msra.mxu0 0.0
      %3076 = vmatpush.msra.mxu0 0.0
      %3077 = vmatpush.msra.mxu0 0.0
      %3078 = vmatpush.msra.mxu0 0.0
      %3079 = vmatpush.msra.mxu0 0.0
      %3080 = vmatpush.msra.mxu0 0.0
      %3081 = vmatpush.msra.mxu0 0.0
      %v3082 = vand.u32 %v148, 4294901760
      %v3083 = vsub.f32 %v148, %v3082
      %v3084 = vand.u32 %v3083, 4294901760
      %3085 = vmatpush.msra.mxu0 %v3084
      %v3086 = vand.u32 %v2527, 4294901760
      %3087 = vmatmul.f32.gmra.mxu0 %v3086
      %v3088 = vpop.f32.mrf.mxu0
      %v3089 = vadd.f32 %v3065, %v3088
      %3090 = vdwg.mxu0
      %3091 = vmatpush.msra.mxu0 0.0
      %3092 = vmatpush.msra.mxu0 0.0
      %3093 = vmatpush.msra.mxu0 0.0
      %3094 = vmatpush.msra.mxu0 0.0
      %3095 = vmatpush.msra.mxu0 0.0
      %3096 = vmatpush.msra.mxu0 0.0
      %3097 = vmatpush.msra.mxu0 0.0
      %3098 = vmatpush.msra.mxu0 0.0
      %3099 = vmatpush.msra.mxu0 0.0
      %3100 = vmatpush.msra.mxu0 0.0
      %3101 = vmatpush.msra.mxu0 0.0
      %3102 = vmatpush.msra.mxu0 0.0
      %3103 = vmatpush.msra.mxu0 0.0
      %3104 = vmatpush.msra.mxu0 0.0
      %3105 = vmatpush.msra.mxu0 0.0
      %v3106 = vand.u32 %v148, 4294901760
      %3107 = vmatpush.msra.mxu0 %v3106
      %v3108 = vand.u32 %v2527, 4294901760
      %3109 = vmatmul.f32.gmra.mxu0 %v3108
      %v3110 = vpop.f32.mrf.mxu0
      %v3111 = vadd.f32 %v3089, %v3110
      %3112 = vdwg.mxu0
      %3113 = vmatpush.msra.mxu0 0.0
      %3114 = vmatpush.msra.mxu0 0.0
      %3115 = vmatpush.msra.mxu0 0.0
      %3116 = vmatpush.msra.mxu0 0.0
      %3117 = vmatpush.msra.mxu0 0.0
      %3118 = vmatpush.msra.mxu0 0.0
      %3119 = vmatpush.msra.mxu0 0.0
      %3120 = vmatpush.msra.mxu0 0.0
      %3121 = vmatpush.msra.mxu0 0.0
      %3122 = vmatpush.msra.mxu0 0.0
      %3123 = vmatpush.msra.mxu0 0.0
      %3124 = vmatpush.msra.mxu0 0.0
      %3125 = vmatpush.msra.mxu0 0.0
      %3126 = vmatpush.msra.mxu0 0.0
      %3127 = vmatpush.msra.mxu0 0.0
      %v3128 = vand.u32 %v149, 4294901760
      %3129 = vmatpush.msra.mxu0 %v3128
      %v3130 = vand.u32 %v2527, 4294901760
      %v3131 = vsub.f32 %v2527, %v3130
      %v3132 = vand.u32 %v3131, 4294901760
      %v3133 = vsub.f32 %v3131, %v3132
      %v3134 = vand.u32 %v3133, 4294901760
      %3135 = vmatmul.f32.gmra.mxu0 %v3134
      %v3136 = vpop.f32.mrf.mxu0
      %v3137 = vadd.f32 0.0, %v3136
      %3138 = vdwg.mxu0
      %3139 = vmatpush.msra.mxu0 0.0
      %3140 = vmatpush.msra.mxu0 0.0
      %3141 = vmatpush.msra.mxu0 0.0
      %3142 = vmatpush.msra.mxu0 0.0
      %3143 = vmatpush.msra.mxu0 0.0
      %3144 = vmatpush.msra.mxu0 0.0
      %3145 = vmatpush.msra.mxu0 0.0
      %3146 = vmatpush.msra.mxu0 0.0
      %3147 = vmatpush.msra.mxu0 0.0
      %3148 = vmatpush.msra.mxu0 0.0
      %3149 = vmatpush.msra.mxu0 0.0
      %3150 = vmatpush.msra.mxu0 0.0
      %3151 = vmatpush.msra.mxu0 0.0
      %3152 = vmatpush.msra.mxu0 0.0
      %3153 = vmatpush.msra.mxu0 0.0
      %v3154 = vand.u32 %v149, 4294901760
      %v3155 = vsub.f32 %v149, %v3154
      %v3156 = vand.u32 %v3155, 4294901760
      %v3157 = vsub.f32 %v3155, %v3156
      %v3158 = vand.u32 %v3157, 4294901760
      %3159 = vmatpush.msra.mxu0 %v3158
      %v3160 = vand.u32 %v2527, 4294901760
      %3161 = vmatmul.f32.gmra.mxu0 %v3160
      %v3162 = vpop.f32.mrf.mxu0
      %v3163 = vadd.f32 %v3137, %v3162
      %3164 = vdwg.mxu0
      %3165 = vmatpush.msra.mxu0 0.0
      %3166 = vmatpush.msra.mxu0 0.0
      %3167 = vmatpush.msra.mxu0 0.0
      %3168 = vmatpush.msra.mxu0 0.0
      %3169 = vmatpush.msra.mxu0 0.0
      %3170 = vmatpush.msra.mxu0 0.0
      %3171 = vmatpush.msra.mxu0 0.0
      %3172 = vmatpush.msra.mxu0 0.0
      %3173 = vmatpush.msra.mxu0 0.0
      %3174 = vmatpush.msra.mxu0 0.0
      %3175 = vmatpush.msra.mxu0 0.0
      %3176 = vmatpush.msra.mxu0 0.0
      %3177 = vmatpush.msra.mxu0 0.0
      %3178 = vmatpush.msra.mxu0 0.0
      %3179 = vmatpush.msra.mxu0 0.0
      %v3180 = vand.u32 %v149, 4294901760
      %v3181 = vsub.f32 %v149, %v3180
      %3182 = vmatpush.msra.mxu0 %v3181
      %v3183 = vand.u32 %v2527, 4294901760
      %v3184 = vsub.f32 %v2527, %v3183
      %3185 = vmatmul.f32.gmra.mxu0 %v3184
      %v3186 = vpop.f32.mrf.mxu0
      %v3187 = vadd.f32 %v3163, %v3186
      %3188 = vdwg.mxu0
      %3189 = vmatpush.msra.mxu0 0.0
      %3190 = vmatpush.msra.mxu0 0.0
      %3191 = vmatpush.msra.mxu0 0.0
      %3192 = vmatpush.msra.mxu0 0.0
      %3193 = vmatpush.msra.mxu0 0.0
      %3194 = vmatpush.msra.mxu0 0.0
      %3195 = vmatpush.msra.mxu0 0.0
      %3196 = vmatpush.msra.mxu0 0.0
      %3197 = vmatpush.msra.mxu0 0.0
      %3198 = vmatpush.msra.mxu0 0.0
      %3199 = vmatpush.msra.mxu0 0.0
      %3200 = vmatpush.msra.mxu0 0.0
      %3201 = vmatpush.msra.mxu0 0.0
      %3202 = vmatpush.msra.mxu0 0.0
      %3203 = vmatpush.msra.mxu0 0.0
      %v3204 = vand.u32 %v149, 4294901760
      %3205 = vmatpush.msra.mxu0 %v3204
      %v3206 = vand.u32 %v2527, 4294901760
      %v3207 = vsub.f32 %v2527, %v3206
      %v3208 = vand.u32 %v3207, 4294901760
      %3209 = vmatmul.f32.gmra.mxu0 %v3208
      %v3210 = vpop.f32.mrf.mxu0
      %v3211 = vadd.f32 %v3187, %v3210
      %3212 = vdwg.mxu0
      %3213 = vmatpush.msra.mxu0 0.0
      %3214 = vmatpush.msra.mxu0 0.0
      %3215 = vmatpush.msra.mxu0 0.0
      %3216 = vmatpush.msra.mxu0 0.0
      %3217 = vmatpush.msra.mxu0 0.0
      %3218 = vmatpush.msra.mxu0 0.0
      %3219 = vmatpush.msra.mxu0 0.0
      %3220 = vmatpush.msra.mxu0 0.0
      %3221 = vmatpush.msra.mxu0 0.0
      %3222 = vmatpush.msra.mxu0 0.0
      %3223 = vmatpush.msra.mxu0 0.0
      %3224 = vmatpush.msra.mxu0 0.0
      %3225 = vmatpush.msra.mxu0 0.0
      %3226 = vmatpush.msra.mxu0 0.0
      %3227 = vmatpush.msra.mxu0 0.0
      %v3228 = vand.u32 %v149, 4294901760
      %v3229 = vsub.f32 %v149, %v3228
      %v3230 = vand.u32 %v3229, 4294901760
      %3231 = vmatpush.msra.mxu0 %v3230
      %v3232 = vand.u32 %v2527, 4294901760
      %3233 = vmatmul.f32.gmra.mxu0 %v3232
      %v3234 = vpop.f32.mrf.mxu0
      %v3235 = vadd.f32 %v3211, %v3234
      %3236 = vdwg.mxu0
      %3237 = vmatpush.msra.mxu0 0.0
      %3238 = vmatpush.msra.mxu0 0.0
      %3239 = vmatpush.msra.mxu0 0.0
      %3240 = vmatpush.msra.mxu0 0.0
      %3241 = vmatpush.msra.mxu0 0.0
      %3242 = vmatpush.msra.mxu0 0.0
      %3243 = vmatpush.msra.mxu0 0.0
      %3244 = vmatpush.msra.mxu0 0.0
      %3245 = vmatpush.msra.mxu0 0.0
      %3246 = vmatpush.msra.mxu0 0.0
      %3247 = vmatpush.msra.mxu0 0.0
      %3248 = vmatpush.msra.mxu0 0.0
      %3249 = vmatpush.msra.mxu0 0.0
      %3250 = vmatpush.msra.mxu0 0.0
      %3251 = vmatpush.msra.mxu0 0.0
      %v3252 = vand.u32 %v149, 4294901760
      %3253 = vmatpush.msra.mxu0 %v3252
      %v3254 = vand.u32 %v2527, 4294901760
      %3255 = vmatmul.f32.gmra.mxu0 %v3254
      %v3256 = vpop.f32.mrf.mxu0
      %v3257 = vadd.f32 %v3235, %v3256
      %3258 = vdwg.mxu0
      %3259 = vmatpush.msra.mxu0 0.0
      %3260 = vmatpush.msra.mxu0 0.0
      %3261 = vmatpush.msra.mxu0 0.0
      %3262 = vmatpush.msra.mxu0 0.0
      %3263 = vmatpush.msra.mxu0 0.0
      %3264 = vmatpush.msra.mxu0 0.0
      %3265 = vmatpush.msra.mxu0 0.0
      %3266 = vmatpush.msra.mxu0 0.0
      %3267 = vmatpush.msra.mxu0 0.0
      %3268 = vmatpush.msra.mxu0 0.0
      %3269 = vmatpush.msra.mxu0 0.0
      %3270 = vmatpush.msra.mxu0 0.0
      %3271 = vmatpush.msra.mxu0 0.0
      %3272 = vmatpush.msra.mxu0 0.0
      %3273 = vmatpush.msra.mxu0 0.0
      %v3274 = vand.u32 %v150, 4294901760
      %3275 = vmatpush.msra.mxu0 %v3274
      %v3276 = vand.u32 %v2527, 4294901760
      %v3277 = vsub.f32 %v2527, %v3276
      %v3278 = vand.u32 %v3277, 4294901760
      %v3279 = vsub.f32 %v3277, %v3278
      %v3280 = vand.u32 %v3279, 4294901760
      %3281 = vmatmul.f32.gmra.mxu0 %v3280
      %v3282 = vpop.f32.mrf.mxu0
      %v3283 = vadd.f32 0.0, %v3282
      %3284 = vdwg.mxu0
      %3285 = vmatpush.msra.mxu0 0.0
      %3286 = vmatpush.msra.mxu0 0.0
      %3287 = vmatpush.msra.mxu0 0.0
      %3288 = vmatpush.msra.mxu0 0.0
      %3289 = vmatpush.msra.mxu0 0.0
      %3290 = vmatpush.msra.mxu0 0.0
      %3291 = vmatpush.msra.mxu0 0.0
      %3292 = vmatpush.msra.mxu0 0.0
      %3293 = vmatpush.msra.mxu0 0.0
      %3294 = vmatpush.msra.mxu0 0.0
      %3295 = vmatpush.msra.mxu0 0.0
      %3296 = vmatpush.msra.mxu0 0.0
      %3297 = vmatpush.msra.mxu0 0.0
      %3298 = vmatpush.msra.mxu0 0.0
      %3299 = vmatpush.msra.mxu0 0.0
      %v3300 = vand.u32 %v150, 4294901760
      %v3301 = vsub.f32 %v150, %v3300
      %v3302 = vand.u32 %v3301, 4294901760
      %v3303 = vsub.f32 %v3301, %v3302
      %v3304 = vand.u32 %v3303, 4294901760
      %3305 = vmatpush.msra.mxu0 %v3304
      %v3306 = vand.u32 %v2527, 4294901760
      %3307 = vmatmul.f32.gmra.mxu0 %v3306
      %v3308 = vpop.f32.mrf.mxu0
      %v3309 = vadd.f32 %v3283, %v3308
      %3310 = vdwg.mxu0
      %3311 = vmatpush.msra.mxu0 0.0
      %3312 = vmatpush.msra.mxu0 0.0
      %3313 = vmatpush.msra.mxu0 0.0
      %3314 = vmatpush.msra.mxu0 0.0
      %3315 = vmatpush.msra.mxu0 0.0
      %3316 = vmatpush.msra.mxu0 0.0
      %3317 = vmatpush.msra.mxu0 0.0
      %3318 = vmatpush.msra.mxu0 0.0
      %3319 = vmatpush.msra.mxu0 0.0
      %3320 = vmatpush.msra.mxu0 0.0
      %3321 = vmatpush.msra.mxu0 0.0
      %3322 = vmatpush.msra.mxu0 0.0
      %3323 = vmatpush.msra.mxu0 0.0
      %3324 = vmatpush.msra.mxu0 0.0
      %3325 = vmatpush.msra.mxu0 0.0
      %v3326 = vand.u32 %v150, 4294901760
      %v3327 = vsub.f32 %v150, %v3326
      %3328 = vmatpush.msra.mxu0 %v3327
      %v3329 = vand.u32 %v2527, 4294901760
      %v3330 = vsub.f32 %v2527, %v3329
      %3331 = vmatmul.f32.gmra.mxu0 %v3330
      %v3332 = vpop.f32.mrf.mxu0
      %v3333 = vadd.f32 %v3309, %v3332
      %3334 = vdwg.mxu0
      %3335 = vmatpush.msra.mxu0 0.0
      %3336 = vmatpush.msra.mxu0 0.0
      %3337 = vmatpush.msra.mxu0 0.0
      %3338 = vmatpush.msra.mxu0 0.0
      %3339 = vmatpush.msra.mxu0 0.0
      %3340 = vmatpush.msra.mxu0 0.0
      %3341 = vmatpush.msra.mxu0 0.0
      %3342 = vmatpush.msra.mxu0 0.0
      %3343 = vmatpush.msra.mxu0 0.0
      %3344 = vmatpush.msra.mxu0 0.0
      %3345 = vmatpush.msra.mxu0 0.0
      %3346 = vmatpush.msra.mxu0 0.0
      %3347 = vmatpush.msra.mxu0 0.0
      %3348 = vmatpush.msra.mxu0 0.0
      %3349 = vmatpush.msra.mxu0 0.0
      %v3350 = vand.u32 %v150, 4294901760
      %3351 = vmatpush.msra.mxu0 %v3350
      %v3352 = vand.u32 %v2527, 4294901760
      %v3353 = vsub.f32 %v2527, %v3352
      %v3354 = vand.u32 %v3353, 4294901760
      %3355 = vmatmul.f32.gmra.mxu0 %v3354
      %v3356 = vpop.f32.mrf.mxu0
      %v3357 = vadd.f32 %v3333, %v3356
      %3358 = vdwg.mxu0
      %3359 = vmatpush.msra.mxu0 0.0
      %3360 = vmatpush.msra.mxu0 0.0
      %3361 = vmatpush.msra.mxu0 0.0
      %3362 = vmatpush.msra.mxu0 0.0
      %3363 = vmatpush.msra.mxu0 0.0
      %3364 = vmatpush.msra.mxu0 0.0
      %3365 = vmatpush.msra.mxu0 0.0
      %3366 = vmatpush.msra.mxu0 0.0
      %3367 = vmatpush.msra.mxu0 0.0
      %3368 = vmatpush.msra.mxu0 0.0
      %3369 = vmatpush.msra.mxu0 0.0
      %3370 = vmatpush.msra.mxu0 0.0
      %3371 = vmatpush.msra.mxu0 0.0
      %3372 = vmatpush.msra.mxu0 0.0
      %3373 = vmatpush.msra.mxu0 0.0
      %v3374 = vand.u32 %v150, 4294901760
      %v3375 = vsub.f32 %v150, %v3374
      %v3376 = vand.u32 %v3375, 4294901760
      %3377 = vmatpush.msra.mxu0 %v3376
      %v3378 = vand.u32 %v2527, 4294901760
      %3379 = vmatmul.f32.gmra.mxu0 %v3378
      %v3380 = vpop.f32.mrf.mxu0
      %v3381 = vadd.f32 %v3357, %v3380
      %3382 = vdwg.mxu0
      %3383 = vmatpush.msra.mxu0 0.0
      %3384 = vmatpush.msra.mxu0 0.0
      %3385 = vmatpush.msra.mxu0 0.0
      %3386 = vmatpush.msra.mxu0 0.0
      %3387 = vmatpush.msra.mxu0 0.0
      %3388 = vmatpush.msra.mxu0 0.0
      %3389 = vmatpush.msra.mxu0 0.0
      %3390 = vmatpush.msra.mxu0 0.0
      %3391 = vmatpush.msra.mxu0 0.0
      %3392 = vmatpush.msra.mxu0 0.0
      %3393 = vmatpush.msra.mxu0 0.0
      %3394 = vmatpush.msra.mxu0 0.0
      %3395 = vmatpush.msra.mxu0 0.0
      %3396 = vmatpush.msra.mxu0 0.0
      %3397 = vmatpush.msra.mxu0 0.0
      %v3398 = vand.u32 %v150, 4294901760
      %3399 = vmatpush.msra.mxu0 %v3398
      %v3400 = vand.u32 %v2527, 4294901760
      %3401 = vmatmul.f32.gmra.mxu0 %v3400
      %v3402 = vpop.f32.mrf.mxu0
      %v3403 = vadd.f32 %v3381, %v3402
      %3404 = vdwg.mxu0
      %3405 = vmatpush.msra.mxu0 0.0
      %3406 = vmatpush.msra.mxu0 0.0
      %3407 = vmatpush.msra.mxu0 0.0
      %3408 = vmatpush.msra.mxu0 0.0
      %3409 = vmatpush.msra.mxu0 0.0
      %3410 = vmatpush.msra.mxu0 0.0
      %3411 = vmatpush.msra.mxu0 0.0
      %3412 = vmatpush.msra.mxu0 0.0
      %3413 = vmatpush.msra.mxu0 0.0
      %3414 = vmatpush.msra.mxu0 0.0
      %3415 = vmatpush.msra.mxu0 0.0
      %3416 = vmatpush.msra.mxu0 0.0
      %3417 = vmatpush.msra.mxu0 0.0
      %3418 = vmatpush.msra.mxu0 0.0
      %3419 = vmatpush.msra.mxu0 0.0
      %v3420 = vand.u32 %v151, 4294901760
      %3421 = vmatpush.msra.mxu0 %v3420
      %v3422 = vand.u32 %v2527, 4294901760
      %v3423 = vsub.f32 %v2527, %v3422
      %v3424 = vand.u32 %v3423, 4294901760
      %v3425 = vsub.f32 %v3423, %v3424
      %v3426 = vand.u32 %v3425, 4294901760
      %3427 = vmatmul.f32.gmra.mxu0 %v3426
      %v3428 = vpop.f32.mrf.mxu0
      %v3429 = vadd.f32 0.0, %v3428
      %3430 = vdwg.mxu0
      %3431 = vmatpush.msra.mxu0 0.0
      %3432 = vmatpush.msra.mxu0 0.0
      %3433 = vmatpush.msra.mxu0 0.0
      %3434 = vmatpush.msra.mxu0 0.0
      %3435 = vmatpush.msra.mxu0 0.0
      %3436 = vmatpush.msra.mxu0 0.0
      %3437 = vmatpush.msra.mxu0 0.0
      %3438 = vmatpush.msra.mxu0 0.0
      %3439 = vmatpush.msra.mxu0 0.0
      %3440 = vmatpush.msra.mxu0 0.0
      %3441 = vmatpush.msra.mxu0 0.0
      %3442 = vmatpush.msra.mxu0 0.0
      %3443 = vmatpush.msra.mxu0 0.0
      %3444 = vmatpush.msra.mxu0 0.0
      %3445 = vmatpush.msra.mxu0 0.0
      %v3446 = vand.u32 %v151, 4294901760
      %v3447 = vsub.f32 %v151, %v3446
      %v3448 = vand.u32 %v3447, 4294901760
      %v3449 = vsub.f32 %v3447, %v3448
      %v3450 = vand.u32 %v3449, 4294901760
      %3451 = vmatpush.msra.mxu0 %v3450
      %v3452 = vand.u32 %v2527, 4294901760
      %3453 = vmatmul.f32.gmra.mxu0 %v3452
      %v3454 = vpop.f32.mrf.mxu0
      %v3455 = vadd.f32 %v3429, %v3454
      %3456 = vdwg.mxu0
      %3457 = vmatpush.msra.mxu0 0.0
      %3458 = vmatpush.msra.mxu0 0.0
      %3459 = vmatpush.msra.mxu0 0.0
      %3460 = vmatpush.msra.mxu0 0.0
      %3461 = vmatpush.msra.mxu0 0.0
      %3462 = vmatpush.msra.mxu0 0.0
      %3463 = vmatpush.msra.mxu0 0.0
      %3464 = vmatpush.msra.mxu0 0.0
      %3465 = vmatpush.msra.mxu0 0.0
      %3466 = vmatpush.msra.mxu0 0.0
      %3467 = vmatpush.msra.mxu0 0.0
      %3468 = vmatpush.msra.mxu0 0.0
      %3469 = vmatpush.msra.mxu0 0.0
      %3470 = vmatpush.msra.mxu0 0.0
      %3471 = vmatpush.msra.mxu0 0.0
      %v3472 = vand.u32 %v151, 4294901760
      %v3473 = vsub.f32 %v151, %v3472
      %3474 = vmatpush.msra.mxu0 %v3473
      %v3475 = vand.u32 %v2527, 4294901760
      %v3476 = vsub.f32 %v2527, %v3475
      %3477 = vmatmul.f32.gmra.mxu0 %v3476
      %v3478 = vpop.f32.mrf.mxu0
      %v3479 = vadd.f32 %v3455, %v3478
      %3480 = vdwg.mxu0
      %3481 = vmatpush.msra.mxu0 0.0
      %3482 = vmatpush.msra.mxu0 0.0
      %3483 = vmatpush.msra.mxu0 0.0
      %3484 = vmatpush.msra.mxu0 0.0
      %3485 = vmatpush.msra.mxu0 0.0
      %3486 = vmatpush.msra.mxu0 0.0
      %3487 = vmatpush.msra.mxu0 0.0
      %3488 = vmatpush.msra.mxu0 0.0
      %3489 = vmatpush.msra.mxu0 0.0
      %3490 = vmatpush.msra.mxu0 0.0
      %3491 = vmatpush.msra.mxu0 0.0
      %3492 = vmatpush.msra.mxu0 0.0
      %3493 = vmatpush.msra.mxu0 0.0
      %3494 = vmatpush.msra.mxu0 0.0
      %3495 = vmatpush.msra.mxu0 0.0
      %v3496 = vand.u32 %v151, 4294901760
      %3497 = vmatpush.msra.mxu0 %v3496
      %v3498 = vand.u32 %v2527, 4294901760
      %v3499 = vsub.f32 %v2527, %v3498
      %v3500 = vand.u32 %v3499, 4294901760
      %3501 = vmatmul.f32.gmra.mxu0 %v3500
      %v3502 = vpop.f32.mrf.mxu0
      %v3503 = vadd.f32 %v3479, %v3502
      %3504 = vdwg.mxu0
      %3505 = vmatpush.msra.mxu0 0.0
      %3506 = vmatpush.msra.mxu0 0.0
      %3507 = vmatpush.msra.mxu0 0.0
      %3508 = vmatpush.msra.mxu0 0.0
      %3509 = vmatpush.msra.mxu0 0.0
      %3510 = vmatpush.msra.mxu0 0.0
      %3511 = vmatpush.msra.mxu0 0.0
      %3512 = vmatpush.msra.mxu0 0.0
      %3513 = vmatpush.msra.mxu0 0.0
      %3514 = vmatpush.msra.mxu0 0.0
      %3515 = vmatpush.msra.mxu0 0.0
      %3516 = vmatpush.msra.mxu0 0.0
      %3517 = vmatpush.msra.mxu0 0.0
      %3518 = vmatpush.msra.mxu0 0.0
      %3519 = vmatpush.msra.mxu0 0.0
      %v3520 = vand.u32 %v151, 4294901760
      %v3521 = vsub.f32 %v151, %v3520
      %v3522 = vand.u32 %v3521, 4294901760
      %3523 = vmatpush.msra.mxu0 %v3522
      %v3524 = vand.u32 %v2527, 4294901760
      %3525 = vmatmul.f32.gmra.mxu0 %v3524
      %v3526 = vpop.f32.mrf.mxu0
      %v3527 = vadd.f32 %v3503, %v3526
      %3528 = vdwg.mxu0
      %3529 = vmatpush.msra.mxu0 0.0
      %3530 = vmatpush.msra.mxu0 0.0
      %3531 = vmatpush.msra.mxu0 0.0
      %3532 = vmatpush.msra.mxu0 0.0
      %3533 = vmatpush.msra.mxu0 0.0
      %3534 = vmatpush.msra.mxu0 0.0
      %3535 = vmatpush.msra.mxu0 0.0
      %3536 = vmatpush.msra.mxu0 0.0
      %3537 = vmatpush.msra.mxu0 0.0
      %3538 = vmatpush.msra.mxu0 0.0
      %3539 = vmatpush.msra.mxu0 0.0
      %3540 = vmatpush.msra.mxu0 0.0
      %3541 = vmatpush.msra.mxu0 0.0
      %3542 = vmatpush.msra.mxu0 0.0
      %3543 = vmatpush.msra.mxu0 0.0
      %v3544 = vand.u32 %v151, 4294901760
      %3545 = vmatpush.msra.mxu0 %v3544
      %v3546 = vand.u32 %v2527, 4294901760
      %3547 = vmatmul.f32.gmra.mxu0 %v3546
      %v3548 = vpop.f32.mrf.mxu0
      %v3549 = vadd.f32 %v3527, %v3548
      %3550 = vdwg.mxu0
      %3551 = vmatpush.msra.mxu0 0.0
      %3552 = vmatpush.msra.mxu0 0.0
      %3553 = vmatpush.msra.mxu0 0.0
      %3554 = vmatpush.msra.mxu0 0.0
      %3555 = vmatpush.msra.mxu0 0.0
      %3556 = vmatpush.msra.mxu0 0.0
      %3557 = vmatpush.msra.mxu0 0.0
      %3558 = vmatpush.msra.mxu0 0.0
      %3559 = vmatpush.msra.mxu0 0.0
      %3560 = vmatpush.msra.mxu0 0.0
      %3561 = vmatpush.msra.mxu0 0.0
      %3562 = vmatpush.msra.mxu0 0.0
      %3563 = vmatpush.msra.mxu0 0.0
      %3564 = vmatpush.msra.mxu0 0.0
      %3565 = vmatpush.msra.mxu0 0.0
      %v3566 = vand.u32 %v152, 4294901760
      %3567 = vmatpush.msra.mxu0 %v3566
      %v3568 = vand.u32 %v2527, 4294901760
      %v3569 = vsub.f32 %v2527, %v3568
      %v3570 = vand.u32 %v3569, 4294901760
      %v3571 = vsub.f32 %v3569, %v3570
      %v3572 = vand.u32 %v3571, 4294901760
      %3573 = vmatmul.f32.gmra.mxu0 %v3572
      %v3574 = vpop.f32.mrf.mxu0
      %v3575 = vadd.f32 0.0, %v3574
      %3576 = vdwg.mxu0
      %3577 = vmatpush.msra.mxu0 0.0
      %3578 = vmatpush.msra.mxu0 0.0
      %3579 = vmatpush.msra.mxu0 0.0
      %3580 = vmatpush.msra.mxu0 0.0
      %3581 = vmatpush.msra.mxu0 0.0
      %3582 = vmatpush.msra.mxu0 0.0
      %3583 = vmatpush.msra.mxu0 0.0
      %3584 = vmatpush.msra.mxu0 0.0
      %3585 = vmatpush.msra.mxu0 0.0
      %3586 = vmatpush.msra.mxu0 0.0
      %3587 = vmatpush.msra.mxu0 0.0
      %3588 = vmatpush.msra.mxu0 0.0
      %3589 = vmatpush.msra.mxu0 0.0
      %3590 = vmatpush.msra.mxu0 0.0
      %3591 = vmatpush.msra.mxu0 0.0
      %v3592 = vand.u32 %v152, 4294901760
      %v3593 = vsub.f32 %v152, %v3592
      %v3594 = vand.u32 %v3593, 4294901760
      %v3595 = vsub.f32 %v3593, %v3594
      %v3596 = vand.u32 %v3595, 4294901760
      %3597 = vmatpush.msra.mxu0 %v3596
      %v3598 = vand.u32 %v2527, 4294901760
      %3599 = vmatmul.f32.gmra.mxu0 %v3598
      %v3600 = vpop.f32.mrf.mxu0
      %v3601 = vadd.f32 %v3575, %v3600
      %3602 = vdwg.mxu0
      %3603 = vmatpush.msra.mxu0 0.0
      %3604 = vmatpush.msra.mxu0 0.0
      %3605 = vmatpush.msra.mxu0 0.0
      %3606 = vmatpush.msra.mxu0 0.0
      %3607 = vmatpush.msra.mxu0 0.0
      %3608 = vmatpush.msra.mxu0 0.0
      %3609 = vmatpush.msra.mxu0 0.0
      %3610 = vmatpush.msra.mxu0 0.0
      %3611 = vmatpush.msra.mxu0 0.0
      %3612 = vmatpush.msra.mxu0 0.0
      %3613 = vmatpush.msra.mxu0 0.0
      %3614 = vmatpush.msra.mxu0 0.0
      %3615 = vmatpush.msra.mxu0 0.0
      %3616 = vmatpush.msra.mxu0 0.0
      %3617 = vmatpush.msra.mxu0 0.0
      %v3618 = vand.u32 %v152, 4294901760
      %v3619 = vsub.f32 %v152, %v3618
      %3620 = vmatpush.msra.mxu0 %v3619
      %v3621 = vand.u32 %v2527, 4294901760
      %v3622 = vsub.f32 %v2527, %v3621
      %3623 = vmatmul.f32.gmra.mxu0 %v3622
      %v3624 = vpop.f32.mrf.mxu0
      %v3625 = vadd.f32 %v3601, %v3624
      %3626 = vdwg.mxu0
      %3627 = vmatpush.msra.mxu0 0.0
      %3628 = vmatpush.msra.mxu0 0.0
      %3629 = vmatpush.msra.mxu0 0.0
      %3630 = vmatpush.msra.mxu0 0.0
      %3631 = vmatpush.msra.mxu0 0.0
      %3632 = vmatpush.msra.mxu0 0.0
      %3633 = vmatpush.msra.mxu0 0.0
      %3634 = vmatpush.msra.mxu0 0.0
      %3635 = vmatpush.msra.mxu0 0.0
      %3636 = vmatpush.msra.mxu0 0.0
      %3637 = vmatpush.msra.mxu0 0.0
      %3638 = vmatpush.msra.mxu0 0.0
      %3639 = vmatpush.msra.mxu0 0.0
      %3640 = vmatpush.msra.mxu0 0.0
      %3641 = vmatpush.msra.mxu0 0.0
      %v3642 = vand.u32 %v152, 4294901760
      %3643 = vmatpush.msra.mxu0 %v3642
      %v3644 = vand.u32 %v2527, 4294901760
      %v3645 = vsub.f32 %v2527, %v3644
      %v3646 = vand.u32 %v3645, 4294901760
      %3647 = vmatmul.f32.gmra.mxu0 %v3646
      %v3648 = vpop.f32.mrf.mxu0
      %v3649 = vadd.f32 %v3625, %v3648
      %3650 = vdwg.mxu0
      %3651 = vmatpush.msra.mxu0 0.0
      %3652 = vmatpush.msra.mxu0 0.0
      %3653 = vmatpush.msra.mxu0 0.0
      %3654 = vmatpush.msra.mxu0 0.0
      %3655 = vmatpush.msra.mxu0 0.0
      %3656 = vmatpush.msra.mxu0 0.0
      %3657 = vmatpush.msra.mxu0 0.0
      %3658 = vmatpush.msra.mxu0 0.0
      %3659 = vmatpush.msra.mxu0 0.0
      %3660 = vmatpush.msra.mxu0 0.0
      %3661 = vmatpush.msra.mxu0 0.0
      %3662 = vmatpush.msra.mxu0 0.0
      %3663 = vmatpush.msra.mxu0 0.0
      %3664 = vmatpush.msra.mxu0 0.0
      %3665 = vmatpush.msra.mxu0 0.0
      %v3666 = vand.u32 %v152, 4294901760
      %v3667 = vsub.f32 %v152, %v3666
      %v3668 = vand.u32 %v3667, 4294901760
      %3669 = vmatpush.msra.mxu0 %v3668
      %v3670 = vand.u32 %v2527, 4294901760
      %3671 = vmatmul.f32.gmra.mxu0 %v3670
      %v3672 = vpop.f32.mrf.mxu0
      %v3673 = vadd.f32 %v3649, %v3672
      %3674 = vdwg.mxu0
      %3675 = vmatpush.msra.mxu0 0.0
      %3676 = vmatpush.msra.mxu0 0.0
      %3677 = vmatpush.msra.mxu0 0.0
      %3678 = vmatpush.msra.mxu0 0.0
      %3679 = vmatpush.msra.mxu0 0.0
      %3680 = vmatpush.msra.mxu0 0.0
      %3681 = vmatpush.msra.mxu0 0.0
      %3682 = vmatpush.msra.mxu0 0.0
      %3683 = vmatpush.msra.mxu0 0.0
      %3684 = vmatpush.msra.mxu0 0.0
      %3685 = vmatpush.msra.mxu0 0.0
      %3686 = vmatpush.msra.mxu0 0.0
      %3687 = vmatpush.msra.mxu0 0.0
      %3688 = vmatpush.msra.mxu0 0.0
      %3689 = vmatpush.msra.mxu0 0.0
      %v3690 = vand.u32 %v152, 4294901760
      %3691 = vmatpush.msra.mxu0 %v3690
      %v3692 = vand.u32 %v2527, 4294901760
      %3693 = vmatmul.f32.gmra.mxu0 %v3692
      %v3694 = vpop.f32.mrf.mxu0
      %v3695 = vadd.f32 %v3673, %v3694
      %3696 = vdwg.mxu0
      %3697 = vmatpush.msra.mxu0 0.0
      %3698 = vmatpush.msra.mxu0 0.0
      %3699 = vmatpush.msra.mxu0 0.0
      %3700 = vmatpush.msra.mxu0 0.0
      %3701 = vmatpush.msra.mxu0 0.0
      %3702 = vmatpush.msra.mxu0 0.0
      %3703 = vmatpush.msra.mxu0 0.0
      %3704 = vmatpush.msra.mxu0 0.0
      %3705 = vmatpush.msra.mxu0 0.0
      %3706 = vmatpush.msra.mxu0 0.0
      %3707 = vmatpush.msra.mxu0 0.0
      %3708 = vmatpush.msra.mxu0 0.0
      %3709 = vmatpush.msra.mxu0 0.0
      %3710 = vmatpush.msra.mxu0 0.0
      %3711 = vmatpush.msra.mxu0 0.0
      %v3712 = vand.u32 %v153, 4294901760
      %3713 = vmatpush.msra.mxu0 %v3712
      %v3714 = vand.u32 %v2527, 4294901760
      %v3715 = vsub.f32 %v2527, %v3714
      %v3716 = vand.u32 %v3715, 4294901760
      %v3717 = vsub.f32 %v3715, %v3716
      %v3718 = vand.u32 %v3717, 4294901760
      %3719 = vmatmul.f32.gmra.mxu0 %v3718
      %v3720 = vpop.f32.mrf.mxu0
      %v3721 = vadd.f32 0.0, %v3720
      %3722 = vdwg.mxu0
      %3723 = vmatpush.msra.mxu0 0.0
      %3724 = vmatpush.msra.mxu0 0.0
      %3725 = vmatpush.msra.mxu0 0.0
      %3726 = vmatpush.msra.mxu0 0.0
      %3727 = vmatpush.msra.mxu0 0.0
      %3728 = vmatpush.msra.mxu0 0.0
      %3729 = vmatpush.msra.mxu0 0.0
      %3730 = vmatpush.msra.mxu0 0.0
      %3731 = vmatpush.msra.mxu0 0.0
      %3732 = vmatpush.msra.mxu0 0.0
      %3733 = vmatpush.msra.mxu0 0.0
      %3734 = vmatpush.msra.mxu0 0.0
      %3735 = vmatpush.msra.mxu0 0.0
      %3736 = vmatpush.msra.mxu0 0.0
      %3737 = vmatpush.msra.mxu0 0.0
      %v3738 = vand.u32 %v153, 4294901760
      %v3739 = vsub.f32 %v153, %v3738
      %v3740 = vand.u32 %v3739, 4294901760
      %v3741 = vsub.f32 %v3739, %v3740
      %v3742 = vand.u32 %v3741, 4294901760
      %3743 = vmatpush.msra.mxu0 %v3742
      %v3744 = vand.u32 %v2527, 4294901760
      %3745 = vmatmul.f32.gmra.mxu0 %v3744
      %v3746 = vpop.f32.mrf.mxu0
      %v3747 = vadd.f32 %v3721, %v3746
      %3748 = vdwg.mxu0
      %3749 = vmatpush.msra.mxu0 0.0
      %3750 = vmatpush.msra.mxu0 0.0
      %3751 = vmatpush.msra.mxu0 0.0
      %3752 = vmatpush.msra.mxu0 0.0
      %3753 = vmatpush.msra.mxu0 0.0
      %3754 = vmatpush.msra.mxu0 0.0
      %3755 = vmatpush.msra.mxu0 0.0
      %3756 = vmatpush.msra.mxu0 0.0
      %3757 = vmatpush.msra.mxu0 0.0
      %3758 = vmatpush.msra.mxu0 0.0
      %3759 = vmatpush.msra.mxu0 0.0
      %3760 = vmatpush.msra.mxu0 0.0
      %3761 = vmatpush.msra.mxu0 0.0
      %3762 = vmatpush.msra.mxu0 0.0
      %3763 = vmatpush.msra.mxu0 0.0
      %v3764 = vand.u32 %v153, 4294901760
      %v3765 = vsub.f32 %v153, %v3764
      %3766 = vmatpush.msra.mxu0 %v3765
      %v3767 = vand.u32 %v2527, 4294901760
      %v3768 = vsub.f32 %v2527, %v3767
      %3769 = vmatmul.f32.gmra.mxu0 %v3768
      %v3770 = vpop.f32.mrf.mxu0
      %v3771 = vadd.f32 %v3747, %v3770
      %3772 = vdwg.mxu0
      %3773 = vmatpush.msra.mxu0 0.0
      %3774 = vmatpush.msra.mxu0 0.0
      %3775 = vmatpush.msra.mxu0 0.0
      %3776 = vmatpush.msra.mxu0 0.0
      %3777 = vmatpush.msra.mxu0 0.0
      %3778 = vmatpush.msra.mxu0 0.0
      %3779 = vmatpush.msra.mxu0 0.0
      %3780 = vmatpush.msra.mxu0 0.0
      %3781 = vmatpush.msra.mxu0 0.0
      %3782 = vmatpush.msra.mxu0 0.0
      %3783 = vmatpush.msra.mxu0 0.0
      %3784 = vmatpush.msra.mxu0 0.0
      %3785 = vmatpush.msra.mxu0 0.0
      %3786 = vmatpush.msra.mxu0 0.0
      %3787 = vmatpush.msra.mxu0 0.0
      %v3788 = vand.u32 %v153, 4294901760
      %3789 = vmatpush.msra.mxu0 %v3788
      %v3790 = vand.u32 %v2527, 4294901760
      %v3791 = vsub.f32 %v2527, %v3790
      %v3792 = vand.u32 %v3791, 4294901760
      %3793 = vmatmul.f32.gmra.mxu0 %v3792
      %v3794 = vpop.f32.mrf.mxu0
      %v3795 = vadd.f32 %v3771, %v3794
      %3796 = vdwg.mxu0
      %3797 = vmatpush.msra.mxu0 0.0
      %3798 = vmatpush.msra.mxu0 0.0
      %3799 = vmatpush.msra.mxu0 0.0
      %3800 = vmatpush.msra.mxu0 0.0
      %3801 = vmatpush.msra.mxu0 0.0
      %3802 = vmatpush.msra.mxu0 0.0
      %3803 = vmatpush.msra.mxu0 0.0
      %3804 = vmatpush.msra.mxu0 0.0
      %3805 = vmatpush.msra.mxu0 0.0
      %3806 = vmatpush.msra.mxu0 0.0
      %3807 = vmatpush.msra.mxu0 0.0
      %3808 = vmatpush.msra.mxu0 0.0
      %3809 = vmatpush.msra.mxu0 0.0
      %3810 = vmatpush.msra.mxu0 0.0
      %3811 = vmatpush.msra.mxu0 0.0
      %v3812 = vand.u32 %v153, 4294901760
      %v3813 = vsub.f32 %v153, %v3812
      %v3814 = vand.u32 %v3813, 4294901760
      %3815 = vmatpush.msra.mxu0 %v3814
      %v3816 = vand.u32 %v2527, 4294901760
      %3817 = vmatmul.f32.gmra.mxu0 %v3816
      %v3818 = vpop.f32.mrf.mxu0
      %v3819 = vadd.f32 %v3795, %v3818
      %3820 = vdwg.mxu0
      %3821 = vmatpush.msra.mxu0 0.0
      %3822 = vmatpush.msra.mxu0 0.0
      %3823 = vmatpush.msra.mxu0 0.0
      %3824 = vmatpush.msra.mxu0 0.0
      %3825 = vmatpush.msra.mxu0 0.0
      %3826 = vmatpush.msra.mxu0 0.0
      %3827 = vmatpush.msra.mxu0 0.0
      %3828 = vmatpush.msra.mxu0 0.0
      %3829 = vmatpush.msra.mxu0 0.0
      %3830 = vmatpush.msra.mxu0 0.0
      %3831 = vmatpush.msra.mxu0 0.0
      %3832 = vmatpush.msra.mxu0 0.0
      %3833 = vmatpush.msra.mxu0 0.0
      %3834 = vmatpush.msra.mxu0 0.0
      %3835 = vmatpush.msra.mxu0 0.0
      %v3836 = vand.u32 %v153, 4294901760
      %3837 = vmatpush.msra.mxu0 %v3836
      %v3838 = vand.u32 %v2527, 4294901760
      %3839 = vmatmul.f32.gmra.mxu0 %v3838
      %v3840 = vpop.f32.mrf.mxu0
      %v3841 = vadd.f32 %v3819, %v3840
      %3842 = vdwg.mxu0
      %3843 = vmatpush.msra.mxu0 0.0
      %3844 = vmatpush.msra.mxu0 0.0
      %3845 = vmatpush.msra.mxu0 0.0
      %3846 = vmatpush.msra.mxu0 0.0
      %3847 = vmatpush.msra.mxu0 0.0
      %3848 = vmatpush.msra.mxu0 0.0
      %3849 = vmatpush.msra.mxu0 0.0
      %3850 = vmatpush.msra.mxu0 0.0
      %3851 = vmatpush.msra.mxu0 0.0
      %3852 = vmatpush.msra.mxu0 0.0
      %3853 = vmatpush.msra.mxu0 0.0
      %3854 = vmatpush.msra.mxu0 0.0
      %3855 = vmatpush.msra.mxu0 0.0
      %3856 = vmatpush.msra.mxu0 0.0
      %3857 = vmatpush.msra.mxu0 0.0
      %v3858 = vand.u32 %v154, 4294901760
      %3859 = vmatpush.msra.mxu0 %v3858
      %v3860 = vand.u32 %v2527, 4294901760
      %v3861 = vsub.f32 %v2527, %v3860
      %v3862 = vand.u32 %v3861, 4294901760
      %v3863 = vsub.f32 %v3861, %v3862
      %v3864 = vand.u32 %v3863, 4294901760
      %3865 = vmatmul.f32.gmra.mxu0 %v3864
      %v3866 = vpop.f32.mrf.mxu0
      %v3867 = vadd.f32 0.0, %v3866
      %3868 = vdwg.mxu0
      %3869 = vmatpush.msra.mxu0 0.0
      %3870 = vmatpush.msra.mxu0 0.0
      %3871 = vmatpush.msra.mxu0 0.0
      %3872 = vmatpush.msra.mxu0 0.0
      %3873 = vmatpush.msra.mxu0 0.0
      %3874 = vmatpush.msra.mxu0 0.0
      %3875 = vmatpush.msra.mxu0 0.0
      %3876 = vmatpush.msra.mxu0 0.0
      %3877 = vmatpush.msra.mxu0 0.0
      %3878 = vmatpush.msra.mxu0 0.0
      %3879 = vmatpush.msra.mxu0 0.0
      %3880 = vmatpush.msra.mxu0 0.0
      %3881 = vmatpush.msra.mxu0 0.0
      %3882 = vmatpush.msra.mxu0 0.0
      %3883 = vmatpush.msra.mxu0 0.0
      %v3884 = vand.u32 %v154, 4294901760
      %v3885 = vsub.f32 %v154, %v3884
      %v3886 = vand.u32 %v3885, 4294901760
      %v3887 = vsub.f32 %v3885, %v3886
      %v3888 = vand.u32 %v3887, 4294901760
      %3889 = vmatpush.msra.mxu0 %v3888
      %v3890 = vand.u32 %v2527, 4294901760
      %3891 = vmatmul.f32.gmra.mxu0 %v3890
      %v3892 = vpop.f32.mrf.mxu0
      %v3893 = vadd.f32 %v3867, %v3892
      %3894 = vdwg.mxu0
      %3895 = vmatpush.msra.mxu0 0.0
      %3896 = vmatpush.msra.mxu0 0.0
      %3897 = vmatpush.msra.mxu0 0.0
      %3898 = vmatpush.msra.mxu0 0.0
      %3899 = vmatpush.msra.mxu0 0.0
      %3900 = vmatpush.msra.mxu0 0.0
      %3901 = vmatpush.msra.mxu0 0.0
      %3902 = vmatpush.msra.mxu0 0.0
      %3903 = vmatpush.msra.mxu0 0.0
      %3904 = vmatpush.msra.mxu0 0.0
      %3905 = vmatpush.msra.mxu0 0.0
      %3906 = vmatpush.msra.mxu0 0.0
      %3907 = vmatpush.msra.mxu0 0.0
      %3908 = vmatpush.msra.mxu0 0.0
      %3909 = vmatpush.msra.mxu0 0.0
      %v3910 = vand.u32 %v154, 4294901760
      %v3911 = vsub.f32 %v154, %v3910
      %3912 = vmatpush.msra.mxu0 %v3911
      %v3913 = vand.u32 %v2527, 4294901760
      %v3914 = vsub.f32 %v2527, %v3913
      %3915 = vmatmul.f32.gmra.mxu0 %v3914
      %v3916 = vpop.f32.mrf.mxu0
      %v3917 = vadd.f32 %v3893, %v3916
      %3918 = vdwg.mxu0
      %3919 = vmatpush.msra.mxu0 0.0
      %3920 = vmatpush.msra.mxu0 0.0
      %3921 = vmatpush.msra.mxu0 0.0
      %3922 = vmatpush.msra.mxu0 0.0
      %3923 = vmatpush.msra.mxu0 0.0
      %3924 = vmatpush.msra.mxu0 0.0
      %3925 = vmatpush.msra.mxu0 0.0
      %3926 = vmatpush.msra.mxu0 0.0
      %3927 = vmatpush.msra.mxu0 0.0
      %3928 = vmatpush.msra.mxu0 0.0
      %3929 = vmatpush.msra.mxu0 0.0
      %3930 = vmatpush.msra.mxu0 0.0
      %3931 = vmatpush.msra.mxu0 0.0
      %3932 = vmatpush.msra.mxu0 0.0
      %3933 = vmatpush.msra.mxu0 0.0
      %v3934 = vand.u32 %v154, 4294901760
      %3935 = vmatpush.msra.mxu0 %v3934
      %v3936 = vand.u32 %v2527, 4294901760
      %v3937 = vsub.f32 %v2527, %v3936
      %v3938 = vand.u32 %v3937, 4294901760
      %3939 = vmatmul.f32.gmra.mxu0 %v3938
      %v3940 = vpop.f32.mrf.mxu0
      %v3941 = vadd.f32 %v3917, %v3940
      %3942 = vdwg.mxu0
      %3943 = vmatpush.msra.mxu0 0.0
      %3944 = vmatpush.msra.mxu0 0.0
      %3945 = vmatpush.msra.mxu0 0.0
      %3946 = vmatpush.msra.mxu0 0.0
      %3947 = vmatpush.msra.mxu0 0.0
      %3948 = vmatpush.msra.mxu0 0.0
      %3949 = vmatpush.msra.mxu0 0.0
      %3950 = vmatpush.msra.mxu0 0.0
      %3951 = vmatpush.msra.mxu0 0.0
      %3952 = vmatpush.msra.mxu0 0.0
      %3953 = vmatpush.msra.mxu0 0.0
      %3954 = vmatpush.msra.mxu0 0.0
      %3955 = vmatpush.msra.mxu0 0.0
      %3956 = vmatpush.msra.mxu0 0.0
      %3957 = vmatpush.msra.mxu0 0.0
      %v3958 = vand.u32 %v154, 4294901760
      %v3959 = vsub.f32 %v154, %v3958
      %v3960 = vand.u32 %v3959, 4294901760
      %3961 = vmatpush.msra.mxu0 %v3960
      %v3962 = vand.u32 %v2527, 4294901760
      %3963 = vmatmul.f32.gmra.mxu0 %v3962
      %v3964 = vpop.f32.mrf.mxu0
      %v3965 = vadd.f32 %v3941, %v3964
      %3966 = vdwg.mxu0
      %3967 = vmatpush.msra.mxu0 0.0
      %3968 = vmatpush.msra.mxu0 0.0
      %3969 = vmatpush.msra.mxu0 0.0
      %3970 = vmatpush.msra.mxu0 0.0
      %3971 = vmatpush.msra.mxu0 0.0
      %3972 = vmatpush.msra.mxu0 0.0
      %3973 = vmatpush.msra.mxu0 0.0
      %3974 = vmatpush.msra.mxu0 0.0
      %3975 = vmatpush.msra.mxu0 0.0
      %3976 = vmatpush.msra.mxu0 0.0
      %3977 = vmatpush.msra.mxu0 0.0
      %3978 = vmatpush.msra.mxu0 0.0
      %3979 = vmatpush.msra.mxu0 0.0
      %3980 = vmatpush.msra.mxu0 0.0
      %3981 = vmatpush.msra.mxu0 0.0
      %v3982 = vand.u32 %v154, 4294901760
      %3983 = vmatpush.msra.mxu0 %v3982
      %v3984 = vand.u32 %v2527, 4294901760
      %3985 = vmatmul.f32.gmra.mxu0 %v3984
      %v3986 = vpop.f32.mrf.mxu0
      %v3987 = vadd.f32 %v3965, %v3986
      %3988 = vdwg.mxu0
      %3989 = vmatpush.msra.mxu0 0.0
      %3990 = vmatpush.msra.mxu0 0.0
      %3991 = vmatpush.msra.mxu0 0.0
      %3992 = vmatpush.msra.mxu0 0.0
      %3993 = vmatpush.msra.mxu0 0.0
      %3994 = vmatpush.msra.mxu0 0.0
      %3995 = vmatpush.msra.mxu0 0.0
      %3996 = vmatpush.msra.mxu0 0.0
      %3997 = vmatpush.msra.mxu0 0.0
      %3998 = vmatpush.msra.mxu0 0.0
      %3999 = vmatpush.msra.mxu0 0.0
      %4000 = vmatpush.msra.mxu0 0.0
      %4001 = vmatpush.msra.mxu0 0.0
      %4002 = vmatpush.msra.mxu0 0.0
      %4003 = vmatpush.msra.mxu0 0.0
      %v4004 = vand.u32 %v155, 4294901760
      %4005 = vmatpush.msra.mxu0 %v4004
      %v4006 = vand.u32 %v2527, 4294901760
      %v4007 = vsub.f32 %v2527, %v4006
      %v4008 = vand.u32 %v4007, 4294901760
      %v4009 = vsub.f32 %v4007, %v4008
      %v4010 = vand.u32 %v4009, 4294901760
      %4011 = vmatmul.f32.gmra.mxu0 %v4010
      %v4012 = vpop.f32.mrf.mxu0
      %v4013 = vadd.f32 0.0, %v4012
      %4014 = vdwg.mxu0
      %4015 = vmatpush.msra.mxu0 0.0
      %4016 = vmatpush.msra.mxu0 0.0
      %4017 = vmatpush.msra.mxu0 0.0
      %4018 = vmatpush.msra.mxu0 0.0
      %4019 = vmatpush.msra.mxu0 0.0
      %4020 = vmatpush.msra.mxu0 0.0
      %4021 = vmatpush.msra.mxu0 0.0
      %4022 = vmatpush.msra.mxu0 0.0
      %4023 = vmatpush.msra.mxu0 0.0
      %4024 = vmatpush.msra.mxu0 0.0
      %4025 = vmatpush.msra.mxu0 0.0
      %4026 = vmatpush.msra.mxu0 0.0
      %4027 = vmatpush.msra.mxu0 0.0
      %4028 = vmatpush.msra.mxu0 0.0
      %4029 = vmatpush.msra.mxu0 0.0
      %v4030 = vand.u32 %v155, 4294901760
      %v4031 = vsub.f32 %v155, %v4030
      %v4032 = vand.u32 %v4031, 4294901760
      %v4033 = vsub.f32 %v4031, %v4032
      %v4034 = vand.u32 %v4033, 4294901760
      %4035 = vmatpush.msra.mxu0 %v4034
      %v4036 = vand.u32 %v2527, 4294901760
      %4037 = vmatmul.f32.gmra.mxu0 %v4036
      %v4038 = vpop.f32.mrf.mxu0
      %v4039 = vadd.f32 %v4013, %v4038
      %4040 = vdwg.mxu0
      %4041 = vmatpush.msra.mxu0 0.0
      %4042 = vmatpush.msra.mxu0 0.0
      %4043 = vmatpush.msra.mxu0 0.0
      %4044 = vmatpush.msra.mxu0 0.0
      %4045 = vmatpush.msra.mxu0 0.0
      %4046 = vmatpush.msra.mxu0 0.0
      %4047 = vmatpush.msra.mxu0 0.0
      %4048 = vmatpush.msra.mxu0 0.0
      %4049 = vmatpush.msra.mxu0 0.0
      %4050 = vmatpush.msra.mxu0 0.0
      %4051 = vmatpush.msra.mxu0 0.0
      %4052 = vmatpush.msra.mxu0 0.0
      %4053 = vmatpush.msra.mxu0 0.0
      %4054 = vmatpush.msra.mxu0 0.0
      %4055 = vmatpush.msra.mxu0 0.0
      %v4056 = vand.u32 %v155, 4294901760
      %v4057 = vsub.f32 %v155, %v4056
      %4058 = vmatpush.msra.mxu0 %v4057
      %v4059 = vand.u32 %v2527, 4294901760
      %v4060 = vsub.f32 %v2527, %v4059
      %4061 = vmatmul.f32.gmra.mxu0 %v4060
      %v4062 = vpop.f32.mrf.mxu0
      %v4063 = vadd.f32 %v4039, %v4062
      %4064 = vdwg.mxu0
      %4065 = vmatpush.msra.mxu0 0.0
      %4066 = vmatpush.msra.mxu0 0.0
      %4067 = vmatpush.msra.mxu0 0.0
      %4068 = vmatpush.msra.mxu0 0.0
      %4069 = vmatpush.msra.mxu0 0.0
      %4070 = vmatpush.msra.mxu0 0.0
      %4071 = vmatpush.msra.mxu0 0.0
      %4072 = vmatpush.msra.mxu0 0.0
      %4073 = vmatpush.msra.mxu0 0.0
      %4074 = vmatpush.msra.mxu0 0.0
      %4075 = vmatpush.msra.mxu0 0.0
      %4076 = vmatpush.msra.mxu0 0.0
      %4077 = vmatpush.msra.mxu0 0.0
      %4078 = vmatpush.msra.mxu0 0.0
      %4079 = vmatpush.msra.mxu0 0.0
      %v4080 = vand.u32 %v155, 4294901760
      %4081 = vmatpush.msra.mxu0 %v4080
      %v4082 = vand.u32 %v2527, 4294901760
      %v4083 = vsub.f32 %v2527, %v4082
      %v4084 = vand.u32 %v4083, 4294901760
      %4085 = vmatmul.f32.gmra.mxu0 %v4084
      %v4086 = vpop.f32.mrf.mxu0
      %v4087 = vadd.f32 %v4063, %v4086
      %4088 = vdwg.mxu0
      %4089 = vmatpush.msra.mxu0 0.0
      %4090 = vmatpush.msra.mxu0 0.0
      %4091 = vmatpush.msra.mxu0 0.0
      %4092 = vmatpush.msra.mxu0 0.0
      %4093 = vmatpush.msra.mxu0 0.0
      %4094 = vmatpush.msra.mxu0 0.0
      %4095 = vmatpush.msra.mxu0 0.0
      %4096 = vmatpush.msra.mxu0 0.0
      %4097 = vmatpush.msra.mxu0 0.0
      %4098 = vmatpush.msra.mxu0 0.0
      %4099 = vmatpush.msra.mxu0 0.0
      %4100 = vmatpush.msra.mxu0 0.0
      %4101 = vmatpush.msra.mxu0 0.0
      %4102 = vmatpush.msra.mxu0 0.0
      %4103 = vmatpush.msra.mxu0 0.0
      %v4104 = vand.u32 %v155, 4294901760
      %v4105 = vsub.f32 %v155, %v4104
      %v4106 = vand.u32 %v4105, 4294901760
      %4107 = vmatpush.msra.mxu0 %v4106
      %v4108 = vand.u32 %v2527, 4294901760
      %4109 = vmatmul.f32.gmra.mxu0 %v4108
      %v4110 = vpop.f32.mrf.mxu0
      %v4111 = vadd.f32 %v4087, %v4110
      %4112 = vdwg.mxu0
      %4113 = vmatpush.msra.mxu0 0.0
      %4114 = vmatpush.msra.mxu0 0.0
      %4115 = vmatpush.msra.mxu0 0.0
      %4116 = vmatpush.msra.mxu0 0.0
      %4117 = vmatpush.msra.mxu0 0.0
      %4118 = vmatpush.msra.mxu0 0.0
      %4119 = vmatpush.msra.mxu0 0.0
      %4120 = vmatpush.msra.mxu0 0.0
      %4121 = vmatpush.msra.mxu0 0.0
      %4122 = vmatpush.msra.mxu0 0.0
      %4123 = vmatpush.msra.mxu0 0.0
      %4124 = vmatpush.msra.mxu0 0.0
      %4125 = vmatpush.msra.mxu0 0.0
      %4126 = vmatpush.msra.mxu0 0.0
      %4127 = vmatpush.msra.mxu0 0.0
      %v4128 = vand.u32 %v155, 4294901760
      %4129 = vmatpush.msra.mxu0 %v4128
      %v4130 = vand.u32 %v2527, 4294901760
      %4131 = vmatmul.f32.gmra.mxu0 %v4130
      %v4132 = vpop.f32.mrf.mxu0
      %v4133 = vadd.f32 %v4111, %v4132
      %4134 = vdwg.mxu0
      %4135 = vmatpush.msra.mxu0 0.0
      %4136 = vmatpush.msra.mxu0 0.0
      %4137 = vmatpush.msra.mxu0 0.0
      %4138 = vmatpush.msra.mxu0 0.0
      %4139 = vmatpush.msra.mxu0 0.0
      %4140 = vmatpush.msra.mxu0 0.0
      %4141 = vmatpush.msra.mxu0 0.0
      %4142 = vmatpush.msra.mxu0 0.0
      %4143 = vmatpush.msra.mxu0 0.0
      %4144 = vmatpush.msra.mxu0 0.0
      %4145 = vmatpush.msra.mxu0 0.0
      %4146 = vmatpush.msra.mxu0 0.0
      %4147 = vmatpush.msra.mxu0 0.0
      %4148 = vmatpush.msra.mxu0 0.0
      %4149 = vmatpush.msra.mxu0 0.0
      %v4150 = vand.u32 %v156, 4294901760
      %4151 = vmatpush.msra.mxu0 %v4150
      %v4152 = vand.u32 %v2527, 4294901760
      %v4153 = vsub.f32 %v2527, %v4152
      %v4154 = vand.u32 %v4153, 4294901760
      %v4155 = vsub.f32 %v4153, %v4154
      %v4156 = vand.u32 %v4155, 4294901760
      %4157 = vmatmul.f32.gmra.mxu0 %v4156
      %v4158 = vpop.f32.mrf.mxu0
      %v4159 = vadd.f32 0.0, %v4158
      %4160 = vdwg.mxu0
      %4161 = vmatpush.msra.mxu0 0.0
      %4162 = vmatpush.msra.mxu0 0.0
      %4163 = vmatpush.msra.mxu0 0.0
      %4164 = vmatpush.msra.mxu0 0.0
      %4165 = vmatpush.msra.mxu0 0.0
      %4166 = vmatpush.msra.mxu0 0.0
      %4167 = vmatpush.msra.mxu0 0.0
      %4168 = vmatpush.msra.mxu0 0.0
      %4169 = vmatpush.msra.mxu0 0.0
      %4170 = vmatpush.msra.mxu0 0.0
      %4171 = vmatpush.msra.mxu0 0.0
      %4172 = vmatpush.msra.mxu0 0.0
      %4173 = vmatpush.msra.mxu0 0.0
      %4174 = vmatpush.msra.mxu0 0.0
      %4175 = vmatpush.msra.mxu0 0.0
      %v4176 = vand.u32 %v156, 4294901760
      %v4177 = vsub.f32 %v156, %v4176
      %v4178 = vand.u32 %v4177, 4294901760
      %v4179 = vsub.f32 %v4177, %v4178
      %v4180 = vand.u32 %v4179, 4294901760
      %4181 = vmatpush.msra.mxu0 %v4180
      %v4182 = vand.u32 %v2527, 4294901760
      %4183 = vmatmul.f32.gmra.mxu0 %v4182
      %v4184 = vpop.f32.mrf.mxu0
      %v4185 = vadd.f32 %v4159, %v4184
      %4186 = vdwg.mxu0
      %4187 = vmatpush.msra.mxu0 0.0
      %4188 = vmatpush.msra.mxu0 0.0
      %4189 = vmatpush.msra.mxu0 0.0
      %4190 = vmatpush.msra.mxu0 0.0
      %4191 = vmatpush.msra.mxu0 0.0
      %4192 = vmatpush.msra.mxu0 0.0
      %4193 = vmatpush.msra.mxu0 0.0
      %4194 = vmatpush.msra.mxu0 0.0
      %4195 = vmatpush.msra.mxu0 0.0
      %4196 = vmatpush.msra.mxu0 0.0
      %4197 = vmatpush.msra.mxu0 0.0
      %4198 = vmatpush.msra.mxu0 0.0
      %4199 = vmatpush.msra.mxu0 0.0
      %4200 = vmatpush.msra.mxu0 0.0
      %4201 = vmatpush.msra.mxu0 0.0
      %v4202 = vand.u32 %v156, 4294901760
      %v4203 = vsub.f32 %v156, %v4202
      %4204 = vmatpush.msra.mxu0 %v4203
      %v4205 = vand.u32 %v2527, 4294901760
      %v4206 = vsub.f32 %v2527, %v4205
      %4207 = vmatmul.f32.gmra.mxu0 %v4206
      %v4208 = vpop.f32.mrf.mxu0
      %v4209 = vadd.f32 %v4185, %v4208
      %4210 = vdwg.mxu0
      %4211 = vmatpush.msra.mxu0 0.0
      %4212 = vmatpush.msra.mxu0 0.0
      %4213 = vmatpush.msra.mxu0 0.0
      %4214 = vmatpush.msra.mxu0 0.0
      %4215 = vmatpush.msra.mxu0 0.0
      %4216 = vmatpush.msra.mxu0 0.0
      %4217 = vmatpush.msra.mxu0 0.0
      %4218 = vmatpush.msra.mxu0 0.0
      %4219 = vmatpush.msra.mxu0 0.0
      %4220 = vmatpush.msra.mxu0 0.0
      %4221 = vmatpush.msra.mxu0 0.0
      %4222 = vmatpush.msra.mxu0 0.0
      %4223 = vmatpush.msra.mxu0 0.0
      %4224 = vmatpush.msra.mxu0 0.0
      %4225 = vmatpush.msra.mxu0 0.0
      %v4226 = vand.u32 %v156, 4294901760
      %4227 = vmatpush.msra.mxu0 %v4226
      %v4228 = vand.u32 %v2527, 4294901760
      %v4229 = vsub.f32 %v2527, %v4228
      %v4230 = vand.u32 %v4229, 4294901760
      %4231 = vmatmul.f32.gmra.mxu0 %v4230
      %v4232 = vpop.f32.mrf.mxu0
      %v4233 = vadd.f32 %v4209, %v4232
      %4234 = vdwg.mxu0
      %4235 = vmatpush.msra.mxu0 0.0
      %4236 = vmatpush.msra.mxu0 0.0
      %4237 = vmatpush.msra.mxu0 0.0
      %4238 = vmatpush.msra.mxu0 0.0
      %4239 = vmatpush.msra.mxu0 0.0
      %4240 = vmatpush.msra.mxu0 0.0
      %4241 = vmatpush.msra.mxu0 0.0
      %4242 = vmatpush.msra.mxu0 0.0
      %4243 = vmatpush.msra.mxu0 0.0
      %4244 = vmatpush.msra.mxu0 0.0
      %4245 = vmatpush.msra.mxu0 0.0
      %4246 = vmatpush.msra.mxu0 0.0
      %4247 = vmatpush.msra.mxu0 0.0
      %4248 = vmatpush.msra.mxu0 0.0
      %4249 = vmatpush.msra.mxu0 0.0
      %v4250 = vand.u32 %v156, 4294901760
      %v4251 = vsub.f32 %v156, %v4250
      %v4252 = vand.u32 %v4251, 4294901760
      %4253 = vmatpush.msra.mxu0 %v4252
      %v4254 = vand.u32 %v2527, 4294901760
      %4255 = vmatmul.f32.gmra.mxu0 %v4254
      %v4256 = vpop.f32.mrf.mxu0
      %v4257 = vadd.f32 %v4233, %v4256
      %4258 = vdwg.mxu0
      %4259 = vmatpush.msra.mxu0 0.0
      %4260 = vmatpush.msra.mxu0 0.0
      %4261 = vmatpush.msra.mxu0 0.0
      %4262 = vmatpush.msra.mxu0 0.0
      %4263 = vmatpush.msra.mxu0 0.0
      %4264 = vmatpush.msra.mxu0 0.0
      %4265 = vmatpush.msra.mxu0 0.0
      %4266 = vmatpush.msra.mxu0 0.0
      %4267 = vmatpush.msra.mxu0 0.0
      %4268 = vmatpush.msra.mxu0 0.0
      %4269 = vmatpush.msra.mxu0 0.0
      %4270 = vmatpush.msra.mxu0 0.0
      %4271 = vmatpush.msra.mxu0 0.0
      %4272 = vmatpush.msra.mxu0 0.0
      %4273 = vmatpush.msra.mxu0 0.0
      %v4274 = vand.u32 %v156, 4294901760
      %4275 = vmatpush.msra.mxu0 %v4274
      %v4276 = vand.u32 %v2527, 4294901760
      %4277 = vmatmul.f32.gmra.mxu0 %v4276
      %v4278 = vpop.f32.mrf.mxu0
      %v4279 = vadd.f32 %v4257, %v4278
      %4280 = vdwg.mxu0
      %4281 = vmatpush.msra.mxu0 0.0
      %4282 = vmatpush.msra.mxu0 0.0
      %4283 = vmatpush.msra.mxu0 0.0
      %4284 = vmatpush.msra.mxu0 0.0
      %4285 = vmatpush.msra.mxu0 0.0
      %4286 = vmatpush.msra.mxu0 0.0
      %4287 = vmatpush.msra.mxu0 0.0
      %4288 = vmatpush.msra.mxu0 0.0
      %4289 = vmatpush.msra.mxu0 0.0
      %4290 = vmatpush.msra.mxu0 0.0
      %4291 = vmatpush.msra.mxu0 0.0
      %4292 = vmatpush.msra.mxu0 0.0
      %4293 = vmatpush.msra.mxu0 0.0
      %4294 = vmatpush.msra.mxu0 0.0
      %4295 = vmatpush.msra.mxu0 0.0
      %v4296 = vand.u32 %v157, 4294901760
      %4297 = vmatpush.msra.mxu0 %v4296
      %v4298 = vand.u32 %v2527, 4294901760
      %v4299 = vsub.f32 %v2527, %v4298
      %v4300 = vand.u32 %v4299, 4294901760
      %v4301 = vsub.f32 %v4299, %v4300
      %v4302 = vand.u32 %v4301, 4294901760
      %4303 = vmatmul.f32.gmra.mxu0 %v4302
      %v4304 = vpop.f32.mrf.mxu0
      %v4305 = vadd.f32 0.0, %v4304
      %4306 = vdwg.mxu0
      %4307 = vmatpush.msra.mxu0 0.0
      %4308 = vmatpush.msra.mxu0 0.0
      %4309 = vmatpush.msra.mxu0 0.0
      %4310 = vmatpush.msra.mxu0 0.0
      %4311 = vmatpush.msra.mxu0 0.0
      %4312 = vmatpush.msra.mxu0 0.0
      %4313 = vmatpush.msra.mxu0 0.0
      %4314 = vmatpush.msra.mxu0 0.0
      %4315 = vmatpush.msra.mxu0 0.0
      %4316 = vmatpush.msra.mxu0 0.0
      %4317 = vmatpush.msra.mxu0 0.0
      %4318 = vmatpush.msra.mxu0 0.0
      %4319 = vmatpush.msra.mxu0 0.0
      %4320 = vmatpush.msra.mxu0 0.0
      %4321 = vmatpush.msra.mxu0 0.0
      %v4322 = vand.u32 %v157, 4294901760
      %v4323 = vsub.f32 %v157, %v4322
      %v4324 = vand.u32 %v4323, 4294901760
      %v4325 = vsub.f32 %v4323, %v4324
      %v4326 = vand.u32 %v4325, 4294901760
      %4327 = vmatpush.msra.mxu0 %v4326
      %v4328 = vand.u32 %v2527, 4294901760
      %4329 = vmatmul.f32.gmra.mxu0 %v4328
      %v4330 = vpop.f32.mrf.mxu0
      %v4331 = vadd.f32 %v4305, %v4330
      %4332 = vdwg.mxu0
      %4333 = vmatpush.msra.mxu0 0.0
      %4334 = vmatpush.msra.mxu0 0.0
      %4335 = vmatpush.msra.mxu0 0.0
      %4336 = vmatpush.msra.mxu0 0.0
      %4337 = vmatpush.msra.mxu0 0.0
      %4338 = vmatpush.msra.mxu0 0.0
      %4339 = vmatpush.msra.mxu0 0.0
      %4340 = vmatpush.msra.mxu0 0.0
      %4341 = vmatpush.msra.mxu0 0.0
      %4342 = vmatpush.msra.mxu0 0.0
      %4343 = vmatpush.msra.mxu0 0.0
      %4344 = vmatpush.msra.mxu0 0.0
      %4345 = vmatpush.msra.mxu0 0.0
      %4346 = vmatpush.msra.mxu0 0.0
      %4347 = vmatpush.msra.mxu0 0.0
      %v4348 = vand.u32 %v157, 4294901760
      %v4349 = vsub.f32 %v157, %v4348
      %4350 = vmatpush.msra.mxu0 %v4349
      %v4351 = vand.u32 %v2527, 4294901760
      %v4352 = vsub.f32 %v2527, %v4351
      %4353 = vmatmul.f32.gmra.mxu0 %v4352
      %v4354 = vpop.f32.mrf.mxu0
      %v4355 = vadd.f32 %v4331, %v4354
      %4356 = vdwg.mxu0
      %4357 = vmatpush.msra.mxu0 0.0
      %4358 = vmatpush.msra.mxu0 0.0
      %4359 = vmatpush.msra.mxu0 0.0
      %4360 = vmatpush.msra.mxu0 0.0
      %4361 = vmatpush.msra.mxu0 0.0
      %4362 = vmatpush.msra.mxu0 0.0
      %4363 = vmatpush.msra.mxu0 0.0
      %4364 = vmatpush.msra.mxu0 0.0
      %4365 = vmatpush.msra.mxu0 0.0
      %4366 = vmatpush.msra.mxu0 0.0
      %4367 = vmatpush.msra.mxu0 0.0
      %4368 = vmatpush.msra.mxu0 0.0
      %4369 = vmatpush.msra.mxu0 0.0
      %4370 = vmatpush.msra.mxu0 0.0
      %4371 = vmatpush.msra.mxu0 0.0
      %v4372 = vand.u32 %v157, 4294901760
      %4373 = vmatpush.msra.mxu0 %v4372
      %v4374 = vand.u32 %v2527, 4294901760
      %v4375 = vsub.f32 %v2527, %v4374
      %v4376 = vand.u32 %v4375, 4294901760
      %4377 = vmatmul.f32.gmra.mxu0 %v4376
      %v4378 = vpop.f32.mrf.mxu0
      %v4379 = vadd.f32 %v4355, %v4378
      %4380 = vdwg.mxu0
      %4381 = vmatpush.msra.mxu0 0.0
      %4382 = vmatpush.msra.mxu0 0.0
      %4383 = vmatpush.msra.mxu0 0.0
      %4384 = vmatpush.msra.mxu0 0.0
      %4385 = vmatpush.msra.mxu0 0.0
      %4386 = vmatpush.msra.mxu0 0.0
      %4387 = vmatpush.msra.mxu0 0.0
      %4388 = vmatpush.msra.mxu0 0.0
      %4389 = vmatpush.msra.mxu0 0.0
      %4390 = vmatpush.msra.mxu0 0.0
      %4391 = vmatpush.msra.mxu0 0.0
      %4392 = vmatpush.msra.mxu0 0.0
      %4393 = vmatpush.msra.mxu0 0.0
      %4394 = vmatpush.msra.mxu0 0.0
      %4395 = vmatpush.msra.mxu0 0.0
      %v4396 = vand.u32 %v157, 4294901760
      %v4397 = vsub.f32 %v157, %v4396
      %v4398 = vand.u32 %v4397, 4294901760
      %4399 = vmatpush.msra.mxu0 %v4398
      %v4400 = vand.u32 %v2527, 4294901760
      %4401 = vmatmul.f32.gmra.mxu0 %v4400
      %v4402 = vpop.f32.mrf.mxu0
      %v4403 = vadd.f32 %v4379, %v4402
      %4404 = vdwg.mxu0
      %4405 = vmatpush.msra.mxu0 0.0
      %4406 = vmatpush.msra.mxu0 0.0
      %4407 = vmatpush.msra.mxu0 0.0
      %4408 = vmatpush.msra.mxu0 0.0
      %4409 = vmatpush.msra.mxu0 0.0
      %4410 = vmatpush.msra.mxu0 0.0
      %4411 = vmatpush.msra.mxu0 0.0
      %4412 = vmatpush.msra.mxu0 0.0
      %4413 = vmatpush.msra.mxu0 0.0
      %4414 = vmatpush.msra.mxu0 0.0
      %4415 = vmatpush.msra.mxu0 0.0
      %4416 = vmatpush.msra.mxu0 0.0
      %4417 = vmatpush.msra.mxu0 0.0
      %4418 = vmatpush.msra.mxu0 0.0
      %4419 = vmatpush.msra.mxu0 0.0
      %v4420 = vand.u32 %v157, 4294901760
      %4421 = vmatpush.msra.mxu0 %v4420
      %v4422 = vand.u32 %v2527, 4294901760
      %4423 = vmatmul.f32.gmra.mxu0 %v4422
      %v4424 = vpop.f32.mrf.mxu0
      %v4425 = vadd.f32 %v4403, %v4424
      %4426 = vdwg.mxu0
      %4427 = vmatpush.msra.mxu0 0.0
      %4428 = vmatpush.msra.mxu0 0.0
      %4429 = vmatpush.msra.mxu0 0.0
      %4430 = vmatpush.msra.mxu0 0.0
      %4431 = vmatpush.msra.mxu0 0.0
      %4432 = vmatpush.msra.mxu0 0.0
      %4433 = vmatpush.msra.mxu0 0.0
      %4434 = vmatpush.msra.mxu0 0.0
      %4435 = vmatpush.msra.mxu0 0.0
      %4436 = vmatpush.msra.mxu0 0.0
      %4437 = vmatpush.msra.mxu0 0.0
      %4438 = vmatpush.msra.mxu0 0.0
      %4439 = vmatpush.msra.mxu0 0.0
      %4440 = vmatpush.msra.mxu0 0.0
      %4441 = vmatpush.msra.mxu0 0.0
      %v4442 = vand.u32 %v158, 4294901760
      %4443 = vmatpush.msra.mxu0 %v4442
      %v4444 = vand.u32 %v2527, 4294901760
      %v4445 = vsub.f32 %v2527, %v4444
      %v4446 = vand.u32 %v4445, 4294901760
      %v4447 = vsub.f32 %v4445, %v4446
      %v4448 = vand.u32 %v4447, 4294901760
      %4449 = vmatmul.f32.gmra.mxu0 %v4448
      %v4450 = vpop.f32.mrf.mxu0
      %v4451 = vadd.f32 0.0, %v4450
      %4452 = vdwg.mxu0
      %4453 = vmatpush.msra.mxu0 0.0
      %4454 = vmatpush.msra.mxu0 0.0
      %4455 = vmatpush.msra.mxu0 0.0
      %4456 = vmatpush.msra.mxu0 0.0
      %4457 = vmatpush.msra.mxu0 0.0
      %4458 = vmatpush.msra.mxu0 0.0
      %4459 = vmatpush.msra.mxu0 0.0
      %4460 = vmatpush.msra.mxu0 0.0
      %4461 = vmatpush.msra.mxu0 0.0
      %4462 = vmatpush.msra.mxu0 0.0
      %4463 = vmatpush.msra.mxu0 0.0
      %4464 = vmatpush.msra.mxu0 0.0
      %4465 = vmatpush.msra.mxu0 0.0
      %4466 = vmatpush.msra.mxu0 0.0
      %4467 = vmatpush.msra.mxu0 0.0
      %v4468 = vand.u32 %v158, 4294901760
      %v4469 = vsub.f32 %v158, %v4468
      %v4470 = vand.u32 %v4469, 4294901760
      %v4471 = vsub.f32 %v4469, %v4470
      %v4472 = vand.u32 %v4471, 4294901760
      %4473 = vmatpush.msra.mxu0 %v4472
      %v4474 = vand.u32 %v2527, 4294901760
      %4475 = vmatmul.f32.gmra.mxu0 %v4474
      %v4476 = vpop.f32.mrf.mxu0
      %v4477 = vadd.f32 %v4451, %v4476
      %4478 = vdwg.mxu0
      %4479 = vmatpush.msra.mxu0 0.0
      %4480 = vmatpush.msra.mxu0 0.0
      %4481 = vmatpush.msra.mxu0 0.0
      %4482 = vmatpush.msra.mxu0 0.0
      %4483 = vmatpush.msra.mxu0 0.0
      %4484 = vmatpush.msra.mxu0 0.0
      %4485 = vmatpush.msra.mxu0 0.0
      %4486 = vmatpush.msra.mxu0 0.0
      %4487 = vmatpush.msra.mxu0 0.0
      %4488 = vmatpush.msra.mxu0 0.0
      %4489 = vmatpush.msra.mxu0 0.0
      %4490 = vmatpush.msra.mxu0 0.0
      %4491 = vmatpush.msra.mxu0 0.0
      %4492 = vmatpush.msra.mxu0 0.0
      %4493 = vmatpush.msra.mxu0 0.0
      %v4494 = vand.u32 %v158, 4294901760
      %v4495 = vsub.f32 %v158, %v4494
      %4496 = vmatpush.msra.mxu0 %v4495
      %v4497 = vand.u32 %v2527, 4294901760
      %v4498 = vsub.f32 %v2527, %v4497
      %4499 = vmatmul.f32.gmra.mxu0 %v4498
      %v4500 = vpop.f32.mrf.mxu0
      %v4501 = vadd.f32 %v4477, %v4500
      %4502 = vdwg.mxu0
      %4503 = vmatpush.msra.mxu0 0.0
      %4504 = vmatpush.msra.mxu0 0.0
      %4505 = vmatpush.msra.mxu0 0.0
      %4506 = vmatpush.msra.mxu0 0.0
      %4507 = vmatpush.msra.mxu0 0.0
      %4508 = vmatpush.msra.mxu0 0.0
      %4509 = vmatpush.msra.mxu0 0.0
      %4510 = vmatpush.msra.mxu0 0.0
      %4511 = vmatpush.msra.mxu0 0.0
      %4512 = vmatpush.msra.mxu0 0.0
      %4513 = vmatpush.msra.mxu0 0.0
      %4514 = vmatpush.msra.mxu0 0.0
      %4515 = vmatpush.msra.mxu0 0.0
      %4516 = vmatpush.msra.mxu0 0.0
      %4517 = vmatpush.msra.mxu0 0.0
      %v4518 = vand.u32 %v158, 4294901760
      %4519 = vmatpush.msra.mxu0 %v4518
      %v4520 = vand.u32 %v2527, 4294901760
      %v4521 = vsub.f32 %v2527, %v4520
      %v4522 = vand.u32 %v4521, 4294901760
      %4523 = vmatmul.f32.gmra.mxu0 %v4522
      %v4524 = vpop.f32.mrf.mxu0
      %v4525 = vadd.f32 %v4501, %v4524
      %4526 = vdwg.mxu0
      %4527 = vmatpush.msra.mxu0 0.0
      %4528 = vmatpush.msra.mxu0 0.0
      %4529 = vmatpush.msra.mxu0 0.0
      %4530 = vmatpush.msra.mxu0 0.0
      %4531 = vmatpush.msra.mxu0 0.0
      %4532 = vmatpush.msra.mxu0 0.0
      %4533 = vmatpush.msra.mxu0 0.0
      %4534 = vmatpush.msra.mxu0 0.0
      %4535 = vmatpush.msra.mxu0 0.0
      %4536 = vmatpush.msra.mxu0 0.0
      %4537 = vmatpush.msra.mxu0 0.0
      %4538 = vmatpush.msra.mxu0 0.0
      %4539 = vmatpush.msra.mxu0 0.0
      %4540 = vmatpush.msra.mxu0 0.0
      %4541 = vmatpush.msra.mxu0 0.0
      %v4542 = vand.u32 %v158, 4294901760
      %v4543 = vsub.f32 %v158, %v4542
      %v4544 = vand.u32 %v4543, 4294901760
      %4545 = vmatpush.msra.mxu0 %v4544
      %v4546 = vand.u32 %v2527, 4294901760
      %4547 = vmatmul.f32.gmra.mxu0 %v4546
      %v4548 = vpop.f32.mrf.mxu0
      %v4549 = vadd.f32 %v4525, %v4548
      %4550 = vdwg.mxu0
      %4551 = vmatpush.msra.mxu0 0.0
      %4552 = vmatpush.msra.mxu0 0.0
      %4553 = vmatpush.msra.mxu0 0.0
      %4554 = vmatpush.msra.mxu0 0.0
      %4555 = vmatpush.msra.mxu0 0.0
      %4556 = vmatpush.msra.mxu0 0.0
      %4557 = vmatpush.msra.mxu0 0.0
      %4558 = vmatpush.msra.mxu0 0.0
      %4559 = vmatpush.msra.mxu0 0.0
      %4560 = vmatpush.msra.mxu0 0.0
      %4561 = vmatpush.msra.mxu0 0.0
      %4562 = vmatpush.msra.mxu0 0.0
      %4563 = vmatpush.msra.mxu0 0.0
      %4564 = vmatpush.msra.mxu0 0.0
      %4565 = vmatpush.msra.mxu0 0.0
      %v4566 = vand.u32 %v158, 4294901760
      %4567 = vmatpush.msra.mxu0 %v4566
      %v4568 = vand.u32 %v2527, 4294901760
      %4569 = vmatmul.f32.gmra.mxu0 %v4568
      %v4570 = vpop.f32.mrf.mxu0
      %v4571 = vadd.f32 %v4549, %v4570
      %4572 = vdwg.mxu0
      %4573 = vmatpush.msra.mxu0 0.0
      %4574 = vmatpush.msra.mxu0 0.0
      %4575 = vmatpush.msra.mxu0 0.0
      %4576 = vmatpush.msra.mxu0 0.0
      %4577 = vmatpush.msra.mxu0 0.0
      %4578 = vmatpush.msra.mxu0 0.0
      %4579 = vmatpush.msra.mxu0 0.0
      %4580 = vmatpush.msra.mxu0 0.0
      %4581 = vmatpush.msra.mxu0 0.0
      %4582 = vmatpush.msra.mxu0 0.0
      %4583 = vmatpush.msra.mxu0 0.0
      %4584 = vmatpush.msra.mxu0 0.0
      %4585 = vmatpush.msra.mxu0 0.0
      %4586 = vmatpush.msra.mxu0 0.0
      %4587 = vmatpush.msra.mxu0 0.0
      %v4588 = vand.u32 %v159, 4294901760
      %4589 = vmatpush.msra.mxu0 %v4588
      %v4590 = vand.u32 %v2527, 4294901760
      %v4591 = vsub.f32 %v2527, %v4590
      %v4592 = vand.u32 %v4591, 4294901760
      %v4593 = vsub.f32 %v4591, %v4592
      %v4594 = vand.u32 %v4593, 4294901760
      %4595 = vmatmul.f32.gmra.mxu0 %v4594
      %v4596 = vpop.f32.mrf.mxu0
      %v4597 = vadd.f32 0.0, %v4596
      %4598 = vdwg.mxu0
      %4599 = vmatpush.msra.mxu0 0.0
      %4600 = vmatpush.msra.mxu0 0.0
      %4601 = vmatpush.msra.mxu0 0.0
      %4602 = vmatpush.msra.mxu0 0.0
      %4603 = vmatpush.msra.mxu0 0.0
      %4604 = vmatpush.msra.mxu0 0.0
      %4605 = vmatpush.msra.mxu0 0.0
      %4606 = vmatpush.msra.mxu0 0.0
      %4607 = vmatpush.msra.mxu0 0.0
      %4608 = vmatpush.msra.mxu0 0.0
      %4609 = vmatpush.msra.mxu0 0.0
      %4610 = vmatpush.msra.mxu0 0.0
      %4611 = vmatpush.msra.mxu0 0.0
      %4612 = vmatpush.msra.mxu0 0.0
      %4613 = vmatpush.msra.mxu0 0.0
      %v4614 = vand.u32 %v159, 4294901760
      %v4615 = vsub.f32 %v159, %v4614
      %v4616 = vand.u32 %v4615, 4294901760
      %v4617 = vsub.f32 %v4615, %v4616
      %v4618 = vand.u32 %v4617, 4294901760
      %4619 = vmatpush.msra.mxu0 %v4618
      %v4620 = vand.u32 %v2527, 4294901760
      %4621 = vmatmul.f32.gmra.mxu0 %v4620
      %v4622 = vpop.f32.mrf.mxu0
      %v4623 = vadd.f32 %v4597, %v4622
      %4624 = vdwg.mxu0
      %4625 = vmatpush.msra.mxu0 0.0
      %4626 = vmatpush.msra.mxu0 0.0
      %4627 = vmatpush.msra.mxu0 0.0
      %4628 = vmatpush.msra.mxu0 0.0
      %4629 = vmatpush.msra.mxu0 0.0
      %4630 = vmatpush.msra.mxu0 0.0
      %4631 = vmatpush.msra.mxu0 0.0
      %4632 = vmatpush.msra.mxu0 0.0
      %4633 = vmatpush.msra.mxu0 0.0
      %4634 = vmatpush.msra.mxu0 0.0
      %4635 = vmatpush.msra.mxu0 0.0
      %4636 = vmatpush.msra.mxu0 0.0
      %4637 = vmatpush.msra.mxu0 0.0
      %4638 = vmatpush.msra.mxu0 0.0
      %4639 = vmatpush.msra.mxu0 0.0
      %v4640 = vand.u32 %v159, 4294901760
      %v4641 = vsub.f32 %v159, %v4640
      %4642 = vmatpush.msra.mxu0 %v4641
      %v4643 = vand.u32 %v2527, 4294901760
      %v4644 = vsub.f32 %v2527, %v4643
      %4645 = vmatmul.f32.gmra.mxu0 %v4644
      %v4646 = vpop.f32.mrf.mxu0
      %v4647 = vadd.f32 %v4623, %v4646
      %4648 = vdwg.mxu0
      %4649 = vmatpush.msra.mxu0 0.0
      %4650 = vmatpush.msra.mxu0 0.0
      %4651 = vmatpush.msra.mxu0 0.0
      %4652 = vmatpush.msra.mxu0 0.0
      %4653 = vmatpush.msra.mxu0 0.0
      %4654 = vmatpush.msra.mxu0 0.0
      %4655 = vmatpush.msra.mxu0 0.0
      %4656 = vmatpush.msra.mxu0 0.0
      %4657 = vmatpush.msra.mxu0 0.0
      %4658 = vmatpush.msra.mxu0 0.0
      %4659 = vmatpush.msra.mxu0 0.0
      %4660 = vmatpush.msra.mxu0 0.0
      %4661 = vmatpush.msra.mxu0 0.0
      %4662 = vmatpush.msra.mxu0 0.0
      %4663 = vmatpush.msra.mxu0 0.0
      %v4664 = vand.u32 %v159, 4294901760
      %4665 = vmatpush.msra.mxu0 %v4664
      %v4666 = vand.u32 %v2527, 4294901760
      %v4667 = vsub.f32 %v2527, %v4666
      %v4668 = vand.u32 %v4667, 4294901760
      %4669 = vmatmul.f32.gmra.mxu0 %v4668
      %v4670 = vpop.f32.mrf.mxu0
      %v4671 = vadd.f32 %v4647, %v4670
      %4672 = vdwg.mxu0
      %4673 = vmatpush.msra.mxu0 0.0
      %4674 = vmatpush.msra.mxu0 0.0
      %4675 = vmatpush.msra.mxu0 0.0
      %4676 = vmatpush.msra.mxu0 0.0
      %4677 = vmatpush.msra.mxu0 0.0
      %4678 = vmatpush.msra.mxu0 0.0
      %4679 = vmatpush.msra.mxu0 0.0
      %4680 = vmatpush.msra.mxu0 0.0
      %4681 = vmatpush.msra.mxu0 0.0
      %4682 = vmatpush.msra.mxu0 0.0
      %4683 = vmatpush.msra.mxu0 0.0
      %4684 = vmatpush.msra.mxu0 0.0
      %4685 = vmatpush.msra.mxu0 0.0
      %4686 = vmatpush.msra.mxu0 0.0
      %4687 = vmatpush.msra.mxu0 0.0
      %v4688 = vand.u32 %v159, 4294901760
      %v4689 = vsub.f32 %v159, %v4688
      %v4690 = vand.u32 %v4689, 4294901760
      %4691 = vmatpush.msra.mxu0 %v4690
      %v4692 = vand.u32 %v2527, 4294901760
      %4693 = vmatmul.f32.gmra.mxu0 %v4692
      %v4694 = vpop.f32.mrf.mxu0
      %v4695 = vadd.f32 %v4671, %v4694
      %4696 = vdwg.mxu0
      %4697 = vmatpush.msra.mxu0 0.0
      %4698 = vmatpush.msra.mxu0 0.0
      %4699 = vmatpush.msra.mxu0 0.0
      %4700 = vmatpush.msra.mxu0 0.0
      %4701 = vmatpush.msra.mxu0 0.0
      %4702 = vmatpush.msra.mxu0 0.0
      %4703 = vmatpush.msra.mxu0 0.0
      %4704 = vmatpush.msra.mxu0 0.0
      %4705 = vmatpush.msra.mxu0 0.0
      %4706 = vmatpush.msra.mxu0 0.0
      %4707 = vmatpush.msra.mxu0 0.0
      %4708 = vmatpush.msra.mxu0 0.0
      %4709 = vmatpush.msra.mxu0 0.0
      %4710 = vmatpush.msra.mxu0 0.0
      %4711 = vmatpush.msra.mxu0 0.0
      %v4712 = vand.u32 %v159, 4294901760
      %4713 = vmatpush.msra.mxu0 %v4712
      %v4714 = vand.u32 %v2527, 4294901760
      %4715 = vmatmul.f32.gmra.mxu0 %v4714
      %v4716 = vpop.f32.mrf.mxu0
      %v4717 = vadd.f32 %v4695, %v4716
      %4718 = vdwg.mxu0
      %4719 = vmatpush.msra.mxu0 0.0
      %4720 = vmatpush.msra.mxu0 0.0
      %4721 = vmatpush.msra.mxu0 0.0
      %4722 = vmatpush.msra.mxu0 0.0
      %4723 = vmatpush.msra.mxu0 0.0
      %4724 = vmatpush.msra.mxu0 0.0
      %4725 = vmatpush.msra.mxu0 0.0
      %4726 = vmatpush.msra.mxu0 0.0
      %4727 = vmatpush.msra.mxu0 0.0
      %4728 = vmatpush.msra.mxu0 0.0
      %4729 = vmatpush.msra.mxu0 0.0
      %4730 = vmatpush.msra.mxu0 0.0
      %4731 = vmatpush.msra.mxu0 0.0
      %4732 = vmatpush.msra.mxu0 0.0
      %4733 = vmatpush.msra.mxu0 0.0
      %v4734 = vand.u32 %v160, 4294901760
      %4735 = vmatpush.msra.mxu0 %v4734
      %v4736 = vand.u32 %v2527, 4294901760
      %v4737 = vsub.f32 %v2527, %v4736
      %v4738 = vand.u32 %v4737, 4294901760
      %v4739 = vsub.f32 %v4737, %v4738
      %v4740 = vand.u32 %v4739, 4294901760
      %4741 = vmatmul.f32.gmra.mxu0 %v4740
      %v4742 = vpop.f32.mrf.mxu0
      %v4743 = vadd.f32 0.0, %v4742
      %4744 = vdwg.mxu0
      %4745 = vmatpush.msra.mxu0 0.0
      %4746 = vmatpush.msra.mxu0 0.0
      %4747 = vmatpush.msra.mxu0 0.0
      %4748 = vmatpush.msra.mxu0 0.0
      %4749 = vmatpush.msra.mxu0 0.0
      %4750 = vmatpush.msra.mxu0 0.0
      %4751 = vmatpush.msra.mxu0 0.0
      %4752 = vmatpush.msra.mxu0 0.0
      %4753 = vmatpush.msra.mxu0 0.0
      %4754 = vmatpush.msra.mxu0 0.0
      %4755 = vmatpush.msra.mxu0 0.0
      %4756 = vmatpush.msra.mxu0 0.0
      %4757 = vmatpush.msra.mxu0 0.0
      %4758 = vmatpush.msra.mxu0 0.0
      %4759 = vmatpush.msra.mxu0 0.0
      %v4760 = vand.u32 %v160, 4294901760
      %v4761 = vsub.f32 %v160, %v4760
      %v4762 = vand.u32 %v4761, 4294901760
      %v4763 = vsub.f32 %v4761, %v4762
      %v4764 = vand.u32 %v4763, 4294901760
      %4765 = vmatpush.msra.mxu0 %v4764
      %v4766 = vand.u32 %v2527, 4294901760
      %4767 = vmatmul.f32.gmra.mxu0 %v4766
      %v4768 = vpop.f32.mrf.mxu0
      %v4769 = vadd.f32 %v4743, %v4768
      %4770 = vdwg.mxu0
      %4771 = vmatpush.msra.mxu0 0.0
      %4772 = vmatpush.msra.mxu0 0.0
      %4773 = vmatpush.msra.mxu0 0.0
      %4774 = vmatpush.msra.mxu0 0.0
      %4775 = vmatpush.msra.mxu0 0.0
      %4776 = vmatpush.msra.mxu0 0.0
      %4777 = vmatpush.msra.mxu0 0.0
      %4778 = vmatpush.msra.mxu0 0.0
      %4779 = vmatpush.msra.mxu0 0.0
      %4780 = vmatpush.msra.mxu0 0.0
      %4781 = vmatpush.msra.mxu0 0.0
      %4782 = vmatpush.msra.mxu0 0.0
      %4783 = vmatpush.msra.mxu0 0.0
      %4784 = vmatpush.msra.mxu0 0.0
      %4785 = vmatpush.msra.mxu0 0.0
      %v4786 = vand.u32 %v160, 4294901760
      %v4787 = vsub.f32 %v160, %v4786
      %4788 = vmatpush.msra.mxu0 %v4787
      %v4789 = vand.u32 %v2527, 4294901760
      %v4790 = vsub.f32 %v2527, %v4789
      %4791 = vmatmul.f32.gmra.mxu0 %v4790
      %v4792 = vpop.f32.mrf.mxu0
      %v4793 = vadd.f32 %v4769, %v4792
      %4794 = vdwg.mxu0
      %4795 = vmatpush.msra.mxu0 0.0
      %4796 = vmatpush.msra.mxu0 0.0
      %4797 = vmatpush.msra.mxu0 0.0
      %4798 = vmatpush.msra.mxu0 0.0
      %4799 = vmatpush.msra.mxu0 0.0
      %4800 = vmatpush.msra.mxu0 0.0
      %4801 = vmatpush.msra.mxu0 0.0
      %4802 = vmatpush.msra.mxu0 0.0
      %4803 = vmatpush.msra.mxu0 0.0
      %4804 = vmatpush.msra.mxu0 0.0
      %4805 = vmatpush.msra.mxu0 0.0
      %4806 = vmatpush.msra.mxu0 0.0
      %4807 = vmatpush.msra.mxu0 0.0
      %4808 = vmatpush.msra.mxu0 0.0
      %4809 = vmatpush.msra.mxu0 0.0
      %v4810 = vand.u32 %v160, 4294901760
      %4811 = vmatpush.msra.mxu0 %v4810
      %v4812 = vand.u32 %v2527, 4294901760
      %v4813 = vsub.f32 %v2527, %v4812
      %v4814 = vand.u32 %v4813, 4294901760
      %4815 = vmatmul.f32.gmra.mxu0 %v4814
      %v4816 = vpop.f32.mrf.mxu0
      %v4817 = vadd.f32 %v4793, %v4816
      %4818 = vdwg.mxu0
      %4819 = vmatpush.msra.mxu0 0.0
      %4820 = vmatpush.msra.mxu0 0.0
      %4821 = vmatpush.msra.mxu0 0.0
      %4822 = vmatpush.msra.mxu0 0.0
      %4823 = vmatpush.msra.mxu0 0.0
      %4824 = vmatpush.msra.mxu0 0.0
      %4825 = vmatpush.msra.mxu0 0.0
      %4826 = vmatpush.msra.mxu0 0.0
      %4827 = vmatpush.msra.mxu0 0.0
      %4828 = vmatpush.msra.mxu0 0.0
      %4829 = vmatpush.msra.mxu0 0.0
      %4830 = vmatpush.msra.mxu0 0.0
      %4831 = vmatpush.msra.mxu0 0.0
      %4832 = vmatpush.msra.mxu0 0.0
      %4833 = vmatpush.msra.mxu0 0.0
      %v4834 = vand.u32 %v160, 4294901760
      %v4835 = vsub.f32 %v160, %v4834
      %v4836 = vand.u32 %v4835, 4294901760
      %4837 = vmatpush.msra.mxu0 %v4836
      %v4838 = vand.u32 %v2527, 4294901760
      %4839 = vmatmul.f32.gmra.mxu0 %v4838
      %v4840 = vpop.f32.mrf.mxu0
      %v4841 = vadd.f32 %v4817, %v4840
      %4842 = vdwg.mxu0
      %4843 = vmatpush.msra.mxu0 0.0
      %4844 = vmatpush.msra.mxu0 0.0
      %4845 = vmatpush.msra.mxu0 0.0
      %4846 = vmatpush.msra.mxu0 0.0
      %4847 = vmatpush.msra.mxu0 0.0
      %4848 = vmatpush.msra.mxu0 0.0
      %4849 = vmatpush.msra.mxu0 0.0
      %4850 = vmatpush.msra.mxu0 0.0
      %4851 = vmatpush.msra.mxu0 0.0
      %4852 = vmatpush.msra.mxu0 0.0
      %4853 = vmatpush.msra.mxu0 0.0
      %4854 = vmatpush.msra.mxu0 0.0
      %4855 = vmatpush.msra.mxu0 0.0
      %4856 = vmatpush.msra.mxu0 0.0
      %4857 = vmatpush.msra.mxu0 0.0
      %v4858 = vand.u32 %v160, 4294901760
      %4859 = vmatpush.msra.mxu0 %v4858
      %v4860 = vand.u32 %v2527, 4294901760
      %4861 = vmatmul.f32.gmra.mxu0 %v4860
      %v4862 = vpop.f32.mrf.mxu0
      %v4863 = vadd.f32 %v4841, %v4862
      %4864 = vdwg.mxu0
      %s4865 = sld [smem:[#allocation2]]
      %v4866 = vstv %s4865
      %v4867 = vmul.f32 %v4866, %v2673
      %v4868 = vmul.f32 %v4866, %v2819
      %v4869 = vmul.f32 %v4866, %v2965
      %v4870 = vmul.f32 %v4866, %v3111
      %v4871 = vmul.f32 %v4866, %v3257
      %v4872 = vmul.f32 %v4866, %v3403
      %v4873 = vmul.f32 %v4866, %v3549
      %v4874 = vmul.f32 %v4866, %v3695
      %v4875 = vmul.f32 %v4866, %v3841
      %v4876 = vmul.f32 %v4866, %v3987
      %v4877 = vmul.f32 %v4866, %v4133
      %v4878 = vmul.f32 %v4866, %v4279
      %v4879 = vmul.f32 %v4866, %v4425
      %v4880 = vmul.f32 %v4866, %v4571
      %v4881 = vmul.f32 %v4866, %v4717
      %v4882 = vmul.f32 %v4866, %v4863
      %v4883 = vadd.f32 %v4867, %v145
      %v4884 = vadd.f32 %v4868, %v146
      %v4885 = vadd.f32 %v4869, %v147
      %v4886 = vadd.f32 %v4870, %v148
      %v4887 = vadd.f32 %v4871, %v149
      %v4888 = vadd.f32 %v4872, %v150
      %v4889 = vadd.f32 %v4873, %v151
      %v4890 = vadd.f32 %v4874, %v152
      %v4891 = vadd.f32 %v4875, %v153
      %v4892 = vadd.f32 %v4876, %v154
      %v4893 = vadd.f32 %v4877, %v155
      %v4894 = vadd.f32 %v4878, %v156
      %v4895 = vadd.f32 %v4879, %v157
      %v4896 = vadd.f32 %v4880, %v158
      %v4897 = vadd.f32 %v4881, %v159
      %v4898 = vadd.f32 %v4882, %v160
      %4899 = vst [vmem:[%s144] sm:$0xff] %v4883
      %4900 = vst [vmem:[%s144 + $0x8] sm:$0xff] %v4884
      %4901 = vst [vmem:[%s144 + $0x10] sm:$0xff] %v4885
      %4902 = vst [vmem:[%s144 + $0x18] sm:$0xff] %v4886
      %4903 = vst [vmem:[%s144 + $0x20] sm:$0xff] %v4887
      %4904 = vst [vmem:[%s144 + $0x28] sm:$0xff] %v4888
      %4905 = vst [vmem:[%s144 + $0x30] sm:$0xff] %v4889
      %4906 = vst [vmem:[%s144 + $0x38] sm:$0xff] %v4890
      %4907 = vst [vmem:[%s144 + $0x40] sm:$0xff] %v4891
      %4908 = vst [vmem:[%s144 + $0x48] sm:$0xff] %v4892
      %4909 = vst [vmem:[%s144 + $0x50] sm:$0xff] %v4893
      %4910 = vst [vmem:[%s144 + $0x58] sm:$0xff] %v4894
      %4911 = vst [vmem:[%s144 + $0x60] sm:$0xff] %v4895
      %4912 = vst [vmem:[%s144 + $0x68] sm:$0xff] %v4896
      %4913 = vst [vmem:[%s144 + $0x70] sm:$0xff] %v4897
      %4914 = vst [vmem:[%s144 + $0x78] sm:$0xff] %v4898
      %p4915 = scmp.lt.s32.totalorder %s14, 1
      %s4916 = scalar_select %p4915, %s14, 1
      %s4917 = smul.addr %s4916, 16
      %s4918 = smul.addr %s4917, 8
      %s4919 = scalar_lea.vmem %s2, %s4918
      // Predicated region
      $region29: #{channel_attention_3d.1} parent=27 // pred_check
        %p4920 = pneg %p79
      $region30: #{channel_attention_3d.1} parent=27 // pred_check_branch
        %4922 = sbr.rel (%p4920) target = $region32
      $region31: #{channel_attention_3d.1} parent=27 // pred_region
        _
      $region32: #{channel_attention_3d.1} parent=27 // pred_fallthru
        _
    $region28: #{channel_attention_3d.1} parent=5 // pred_fallthru
      _
    %p4923 = scmp.le.s32.totalorder 2, %s9
    // Predicated region
    $region33: #{channel_attention_3d.1} parent=5 // pred_check
      %p4924 = pneg %p4923
    $region34: #{channel_attention_3d.1} parent=5 // pred_check_branch
      %4926 = sbr.rel (%p4924) target = $region36
    $region35: #{channel_attention_3d.1} parent=5 // pred_region
      %s4927 = ssub.s32 %s9, 2
      // Predicated region
      $region37: #{channel_attention_3d.1} parent=35 // pred_check
        %p4928 = pneg %p85
      $region38: #{channel_attention_3d.1} parent=35 // pred_check_branch
        %4930 = sbr.rel (%p4928) target = $region40
      $region39: #{channel_attention_3d.1} parent=35 // pred_region
        %p4931 = scmp.lt.s32.totalorder %s15, 1
        %s4932 = scalar_select %p4931, %s15, 1
        %s4933 = smul.addr %s4932, 16
        %s4934 = smul.addr %s4933, 8
        %s4935 = scalar_lea.vmem %s2, %s4934
      $region40: #{channel_attention_3d.1} parent=35 // pred_fallthru
        _
    $region36: #{channel_attention_3d.1} parent=5 // pred_fallthru
      _
  $region6: #{channel_attention_3d.1} parent=0 // loop_footer
    %s13 = sadd.s32 1, %s9
  $region7: #{channel_attention_3d.1} parent=0 // loop_footer_branch
    %8 = sbr.rel target = $region3
  $region8: #{channel_attention_3d.1} parent=0 // loop_exit
    _

</llo_original>
